<compile_context>
chip_gen: v7x
topology: tpu7x:2x2x1
jax: 0.10.0
libtpu: 0.0.40
codegen_flags: <defaults>
</compile_context>

<pallas_src>
import functools

import jax
import jax.numpy as jnp
import numpy as np
from jax import lax
from jax.experimental import pallas as pl
from jax.experimental.pallas import tpu as pltpu


def _round_up(x, m):
    return (x + m - 1) // m * m


def _lstm_recurrence_kernel(gx_ref, whh_ref, hout_ref, h_sc, c_sc, *,
                            t_chunk, seq_len, n_sub):
    """One grid step: advance h/c through `t_chunk` time steps.

    gx_ref : (t_chunk, tb, 4*H)  precomputed x @ W_ih + b (gate order i,f,g,o)
    whh_ref: (H, 4*H)            recurrent weight, resident across the grid
    hout_ref: (tb, H) f32        tanh(h_n), written on the last time chunk
    h_sc/c_sc: (tb, H) f32       recurrent state, persists across time chunks
    """
    t_idx = pl.program_id(1)
    n_t = pl.num_programs(1)
    H = whh_ref.shape[0]
    tb = h_sc.shape[0]
    hb = tb // n_sub

    @pl.when(t_idx == 0)
    def _():
        h_sc[...] = jnp.zeros_like(h_sc)
        c_sc[...] = jnp.zeros_like(c_sc)

    whh = whh_ref[...]           # hoisted: resident weight, loaded once/chunk

    def sigmoid(x):
        # Single EUP pass (tanh) + cheap VPU ops instead of exp + divide.
        return 0.5 * jnp.tanh(0.5 * x) + 0.5

    def cell(gates, c):
        i_g = sigmoid(gates[:, 0 * H:1 * H])
        f_g = sigmoid(gates[:, 1 * H:2 * H])
        g_g = jnp.tanh(gates[:, 2 * H:3 * H])
        o_g = sigmoid(gates[:, 3 * H:4 * H])
        c_new = f_g * c + i_g * g_g
        h_new = o_g * jnp.tanh(c_new)
        return h_new, c_new

    def make_step(masked):
        def step(i, carry):
            hs, cs = carry
            new_hs, new_cs = [], []
            # Sub-tiles are independent across batch: the h@W_hh matmul of one
            # sub-tile can overlap with the gate EUP/VPU math of the other.
            for s in range(n_sub):
                gx = gx_ref[i, pl.ds(s * hb, hb), :].astype(jnp.float32)
                gates = gx + jnp.dot(hs[s].astype(whh.dtype), whh,
                                     preferred_element_type=jnp.float32)
                h_new, c_new = cell(gates, cs[s])
                if masked:   # only emitted for the final (padded-tail) chunk
                    valid = t_idx * t_chunk + i < seq_len
                    h_new = jnp.where(valid, h_new, hs[s])
                    c_new = jnp.where(valid, c_new, cs[s])
                new_hs.append(h_new)
                new_cs.append(c_new)
            return tuple(new_hs), tuple(new_cs)
        return step

    def run_chunk(masked):
        init = (tuple(h_sc[pl.ds(s * hb, hb), :] for s in range(n_sub)),
                tuple(c_sc[pl.ds(s * hb, hb), :] for s in range(n_sub)))
        return lax.fori_loop(0, t_chunk, make_step(masked), init, unroll=True)

    def store_state(hs, cs):
        for s in range(n_sub):
            h_sc[pl.ds(s * hb, hb), :] = hs[s]
            c_sc[pl.ds(s * hb, hb), :] = cs[s]

    def store_out(hs):
        for s in range(n_sub):
            hout_ref[pl.ds(s * hb, hb), :] = jnp.tanh(hs[s]).astype(
                hout_ref.dtype)

    needs_mask = (seq_len % t_chunk) != 0        # static

    if needs_mask:
        # Tail masking only on the last time chunk; steady-state chunks run
        # the unmasked body (no per-step compare / select).
        @pl.when(t_idx < n_t - 1)
        def _():
            hs, cs = run_chunk(masked=False)
            store_state(hs, cs)

        @pl.when(t_idx == n_t - 1)
        def _():
            hs, cs = run_chunk(masked=True)
            store_out(hs)
    else:
        hs, cs = run_chunk(masked=False)

        @pl.when(t_idx < n_t - 1)       # skip the dead stores on the last chunk
        def _():
            store_state(hs, cs)

        @pl.when(t_idx == n_t - 1)
        def _():
            store_out(hs)


@functools.partial(
    jax.jit,
    static_argnames=("t_chunk", "batch_chunk", "compute_dtype",
                     "single_buffer_whh"))
def lstm_forward(x_ids, params, *, t_chunk=4, batch_chunk=128,
                 compute_dtype=jnp.bfloat16, single_buffer_whh=True):
    """x_ids: (batch, seq) int32 token ids -> (1, batch, vocab) logits.

    compute_dtype: streaming/matmul dtype for gates_x and W_hh (state and gate
    math stay f32).  bfloat16 (default) halves HBM traffic / VMEM residency.
    batch_chunk: upper bound on the batch tile (try 256 on v6e, 128 on v7x).
    """
    embed_tbl = params["embed"]          # (vocab, embed)
    w_ih_t = params["w_ih_t"]            # (embed, 4*rnn)
    w_hh_t = params["w_hh_t"]            # (rnn, 4*rnn)
    b = params["b"]                      # (1, 4*rnn)  (= b_ih + b_hh)
    w_out_t = params["w_out_t"]          # (rnn, vocab)
    b_out = params["b_out"]              # (1, vocab)

    batch, seq = x_ids.shape
    rnn = w_hh_t.shape[0]

    # ---- lane/sublane-aligned padded sizes --------------------------------
    sub = 16 if compute_dtype == jnp.bfloat16 else 8
    rnn_p = _round_up(rnn, 128)

    # Batch tiling: minimal over-padding, and >=2 chunks whenever batch allows
    # so the "parallel" batch axis can be split across v7x's two TensorCores.
    nb = -(-batch // batch_chunk)
    if nb == 1 and batch > sub:
        nb = 2
    tb = _round_up(-(-batch // nb), sub)
    batch_p = nb * tb

    # 2-way batch sub-tile split inside the step (MXU/EUP overlap) only when
    # each half stays sublane-aligned for both the f32 state (8) and a
    # possibly-bf16 gx stream (16).
    n_sub = 2 if (tb % 32 == 0) else 1

    t_chunk = max(1, min(t_chunk, seq))
    n_t = -(-seq // t_chunk)
    seq_p = n_t * t_chunk

    # Pad each of the 4 gates from rnn -> rnn_p so the per-gate slices land on
    # 128-lane boundaries.  Zero-padded gate columns are inert: their
    # pre-activation is 0, so g = tanh(0) = 0 and c, h stay exactly 0 there.
    def pad_gates(w):                    # (..., 4*rnn) -> (..., 4*rnn_p)
        w4 = w.reshape(w.shape[:-1] + (4, rnn))
        w4 = jnp.pad(w4, [(0, 0)] * (w4.ndim - 1) + [(0, rnn_p - rnn)])
        return w4.reshape(w.shape[:-1] + (4 * rnn_p,))

    w_ih_p = pad_gates(w_ih_t)                                   # (E, 4*Hp)
    b_p = pad_gates(b)                                           # (1, 4*Hp)
    # NOTE: padded *input rows* of W_hh must stay zero so padded h columns
    # contribute nothing to the recurrent matmul (inertness invariant).
    w_hh_p = jnp.pad(pad_gates(w_hh_t), ((0, rnn_p - rnn), (0, 0)))
    w_hh_p = w_hh_p.astype(compute_dtype)                        # (Hp, 4*Hp)

    # ---- hoisted input projection: one big MXU-efficient matmul -----------
    # Pad the *small* id tensor (not the big gate tensor) so the einsum emits
    # gates_x directly at its padded shape — no extra full-size pad/cast pass.
    ids_tm = x_ids.T                                             # (seq, batch)
    ids_p = jnp.pad(ids_tm, ((0, seq_p - seq), (0, batch_p - batch)))
    xe = jnp.take(embed_tbl, ids_p, axis=0)                      # (sp, bp, E)
    gates_x = (jnp.einsum("sbe,eg->sbg",
                          xe.astype(compute_dtype),
                          w_ih_p.astype(compute_dtype),
                          preferred_element_type=jnp.float32) + b_p
               ).astype(compute_dtype)                           # (sp, bp, 4Hp)

    # ---- explicit VMEM budget (sized per-generation via physical VMEM) ----
    itemsize = jnp.dtype(compute_dtype).itemsize
    gx_block = t_chunk * tb * 4 * rnn_p * itemsize               # streamed
    whh_bytes = rnn_p * 4 * rnn_p * itemsize                     # resident
    out_block = tb * rnn_p * 4
    state_bytes = 2 * tb * rnn_p * 4
    need = (2 * gx_block                                         # double buf
            + (1 if single_buffer_whh else 2) * whh_bytes
            + 2 * out_block
            + state_bytes)
    try:
        phys_vmem = int(pltpu.get_tpu_info().vmem_capacity_bytes)
    except Exception:
        phys_vmem = 64 << 20            # v7x per-TC size: safe lower bound
    vmem_limit = int(min(1.5 * need + (8 << 20), 0.85 * phys_vmem))
    vmem_limit = max(vmem_limit, 16 << 20)

    # Resident recurrent weight: constant index_map; optionally single-buffer.
    whh_spec = pl.BlockSpec(
        (rnn_p, 4 * rnn_p), lambda bi, ti: (0, 0),
        **({"pipeline_mode": pl.Buffered(1)} if single_buffer_whh else {}))

    kernel = functools.partial(_lstm_recurrence_kernel,
                               t_chunk=t_chunk, seq_len=seq, n_sub=n_sub)

    h_tanh = pl.pallas_call(
        kernel,
        out_shape=jax.ShapeDtypeStruct((batch_p, rnn_p), jnp.float32),
        grid_spec=pltpu.PrefetchScalarGridSpec(
            num_scalar_prefetch=0,
            grid=(nb, n_t),
            in_specs=[
                pl.BlockSpec((t_chunk, tb, 4 * rnn_p),
                             lambda bi, ti: (ti, bi, 0)),
                whh_spec,
            ],
            out_specs=pl.BlockSpec((tb, rnn_p), lambda bi, ti: (bi, 0)),
            scratch_shapes=[
                pltpu.VMEM((tb, rnn_p), jnp.float32),   # h state
                pltpu.VMEM((tb, rnn_p), jnp.float32),   # c state
            ],
        ),
        compiler_params=pltpu.CompilerParams(
            dimension_semantics=("parallel", "arbitrary"),
            vmem_limit_bytes=vmem_limit),
    )(gates_x, w_hh_p)

    # ---- hoisted output projection (W_out never enters the time loop) -----
    h_tanh = h_tanh[:batch, :rnn]                                # (b, rnn)
    logits = h_tanh @ w_out_t + b_out                            # (b, vocab)
    return logits[None, :, :]                                    # (1, b, vocab)


def lstm_reference(x_ids, params):
    """Pure-JAX reference for correctness checking."""
    xe = jnp.take(params["embed"], x_ids, axis=0).astype(jnp.float32)
    batch = x_ids.shape[0]
    rnn_sz = params["w_hh_t"].shape[0]
    H = rnn_sz

    def step(carry, x_t):
        h, c = carry
        gates = x_t @ params["w_ih_t"] + h @ params["w_hh_t"] + params["b"][0]
        i = jax.nn.sigmoid(gates[:, 0 * H:1 * H])
        f = jax.nn.sigmoid(gates[:, 1 * H:2 * H])
        g = jnp.tanh(gates[:, 2 * H:3 * H])
        o = jax.nn.sigmoid(gates[:, 3 * H:4 * H])
        c = f * c + i * g
        h = o * jnp.tanh(c)
        return (h, c), None

    h0 = jnp.zeros((batch, rnn_sz), jnp.float32)
    (h, _), _ = jax.lax.scan(step, (h0, h0), jnp.transpose(xe, (1, 0, 2)))
    out = jnp.tanh(h) @ params["w_out_t"] + params["b_out"][0]
    return out[None, :, :]


def init_params(key, vocab_sz, embed_sz, rnn_sz):
    ks = jax.random.split(key, 7)
    s = 1.0 / np.sqrt(rnn_sz)
    embed = jax.random.normal(ks[0], (vocab_sz, embed_sz), jnp.float32)
    w_ih = jax.random.uniform(ks[1], (4 * rnn_sz, embed_sz), jnp.float32, -s, s)
    w_hh = jax.random.uniform(ks[2], (4 * rnn_sz, rnn_sz), jnp.float32, -s, s)
    b_ih = jax.random.uniform(ks[3], (4 * rnn_sz,), jnp.float32, -s, s)
    b_hh = jax.random.uniform(ks[4], (4 * rnn_sz,), jnp.float32, -s, s)
    w_out = jax.random.uniform(ks[5], (vocab_sz, rnn_sz), jnp.float32, -s, s)
    b_out = jax.random.uniform(ks[6], (vocab_sz,), jnp.float32, -s, s)
    return {
        "embed": embed,
        "w_ih_t": w_ih.T,                       # (embed, 4*rnn)
        "w_hh_t": w_hh.T,                       # (rnn, 4*rnn)
        "b": (b_ih + b_hh)[None, :],            # (1, 4*rnn)
        "w_out_t": w_out.T,                     # (rnn, vocab)
        "b_out": b_out[None, :],                # (1, vocab)
    }


if __name__ == "__main__":
    vocab_sz, embed_sz, rnn_sz = 32, 16, 32

    key = jax.random.PRNGKey(0)
    k_param, k_d1, k_d2 = jax.random.split(key, 3)
    params = init_params(k_param, vocab_sz, embed_sz, rnn_sz)

    # Case 1: small batch, f32, t_chunk=3 does not divide seq=8 -> exercises
    # multi-chunk state carry and last-chunk-only tail masking.  Also
    # feature-detects pipeline_mode=pl.Buffered(1) (single-buffered W_hh);
    # the detected flag is reused so later VMEM budgets stay consistent.
    x1 = jax.random.randint(k_d1, (4, 8), 0, vocab_sz, jnp.int32)
    ref1 = lstm_reference(x1, params)

    single_buf = True
    try:
        out1 = jax.block_until_ready(
            lstm_forward(x1, params, t_chunk=3, compute_dtype=jnp.float32,
                         single_buffer_whh=True))
    except Exception:
        single_buf = False   # fallback: W_hh double-buffered (2x VMEM)
        out1 = jax.block_until_ready(
            lstm_forward(x1, params, t_chunk=3, compute_dtype=jnp.float32,
                         single_buffer_whh=False))
    np.testing.assert_allclose(np.asarray(out1), np.asarray(ref1),
                               rtol=1e-4, atol=1e-4)
    assert out1.shape == (1, 4, vocab_sz)

    # Case 2: batch=64 -> two batch chunks (megacore-splittable axis) and the
    # 2-way MXU/EUP batch sub-tile interleave (tb=32, n_sub=2); f32, tight tol.
    x2 = jax.random.randint(k_d2, (64, 8), 0, vocab_sz, jnp.int32)
    ref2 = lstm_reference(x2, params)
    out2 = jax.block_until_ready(
        lstm_forward(x2, params, t_chunk=3, compute_dtype=jnp.float32,
                     single_buffer_whh=single_buf))
    np.testing.assert_allclose(np.asarray(out2), np.asarray(ref2),
                               rtol=1e-4, atol=1e-4)

    # Case 3: default bf16 streaming/matmul path (f32 state + f32 gate math),
    # recommended for v5e/v6e/v7x; loose tolerance vs the f32 reference.
    out3 = jax.block_until_ready(
        lstm_forward(x1, params, single_buffer_whh=single_buf))
    np.testing.assert_allclose(np.asarray(out3), np.asarray(ref1),
                               rtol=1e-1, atol=2e-1)

    print("KERNEL_OK")
</pallas_src>

<mosaic_0001>
module attributes {stable_mosaic.version = 11 : i64} {
  func.func @_lstm_recurrence_kernel(%arg0: i32, %arg1: i32, %arg2: memref<3x8x512xf32, #tpu.memory_space<vmem>>, %arg3: memref<128x512xf32, #tpu.memory_space<vmem>>, %arg4: memref<8x128xf32, #tpu.memory_space<vmem>>, %arg5: memref<8x128xf32, #tpu.memory_space<vmem>>, %arg6: memref<8x128xf32, #tpu.memory_space<vmem>>) attributes {dimension_semantics = [#tpu.dimension_semantics<parallel>, #tpu.dimension_semantics<arbitrary>], iteration_bounds = array<i64: 1, 3>, scalar_prefetch = 0 : i64, scratch_operands = 2 : i64, tpu.core_type = #tpu.core_type<tc>, window_params = [{transform_indices = @transform_0, window_bounds = array<i64: 3, 8, 512>}, {pipeline_mode = #tpu.pipeline_mode<synchronous>, transform_indices = @transform_1, window_bounds = array<i64: 128, 512>}, {transform_indices = @transform_2, window_bounds = array<i64: 8, 128>}]} {
    %c0_i32 = arith.constant 0 : i32
    %0 = arith.cmpi eq, %arg1, %c0_i32 : i32
    %1 = arith.extui %0 : i1 to i32
    %c0_i32_0 = arith.constant 0 : i32
    %2 = arith.cmpi ne, %1, %c0_i32_0 : i32
    scf.if %2 {
      %cst = arith.constant 0.000000e+00 : f32
      %10 = vector.broadcast %cst : f32 to vector<8x128xf32>
      %c0_5 = arith.constant 0 : index
      %c0_6 = arith.constant 0 : index
      %11 = vector.load %arg5[%c0_5, %c0_6] : memref<8x128xf32, #tpu.memory_space<vmem>>, vector<8x128xf32>
      tpu.vector_store %arg5[%c0_5, %c0_6], %10 {strides = array<i32>} : memref<8x128xf32, #tpu.memory_space<vmem>>, vector<8x128xf32>,
      %cst_7 = arith.constant 0.000000e+00 : f32
      %12 = vector.broadcast %cst_7 : f32 to vector<8x128xf32>
      %c0_8 = arith.constant 0 : index
      %c0_9 = arith.constant 0 : index
      %13 = vector.load %arg6[%c0_8, %c0_9] : memref<8x128xf32, #tpu.memory_space<vmem>>, vector<8x128xf32>
      tpu.vector_store %arg6[%c0_8, %c0_9], %12 {strides = array<i32>} : memref<8x128xf32, #tpu.memory_space<vmem>>, vector<8x128xf32>,
    } else {
    }
    %c0 = arith.constant 0 : index
    %c0_1 = arith.constant 0 : index
    %3 = vector.load %arg3[%c0, %c0_1] : memref<128x512xf32, #tpu.memory_space<vmem>>, vector<128x512xf32>
    %c2_i32 = arith.constant 2 : i32
    %4 = arith.cmpi slt, %arg1, %c2_i32 : i32
    %5 = arith.extui %4 : i1 to i32
    %c0_i32_2 = arith.constant 0 : i32
    %6 = arith.cmpi ne, %5, %c0_i32_2 : i32
    scf.if %6 {
      %c0_5 = arith.constant 0 : index
      %c0_6 = arith.constant 0 : index
      %10 = vector.load %arg5[%c0_5, %c0_6] : memref<8x128xf32, #tpu.memory_space<vmem>>, vector<8x128xf32>
      %c0_7 = arith.constant 0 : index
      %c0_8 = arith.constant 0 : index
      %11 = vector.load %arg6[%c0_7, %c0_8] : memref<8x128xf32, #tpu.memory_space<vmem>>, vector<8x128xf32>
      %c0_i32_9 = arith.constant 0 : i32
      %12 = arith.index_cast %c0_i32_9 : i32 to index
      %c0_10 = arith.constant 0 : index
      %c0_11 = arith.constant 0 : index
      %13 = vector.load %arg2[%12, %c0_10, %c0_11] : memref<3x8x512xf32, #tpu.memory_space<vmem>>, vector<1x8x512xf32>
      %14 = vector.shape_cast %13 : vector<1x8x512xf32> to vector<8x512xf32>
      %cst = arith.constant dense<0.000000e+00> : vector<8x512xf32>
      %15 = tpu.matmul %10, %3, %cst {dimension_numbers = #tpu.dot_dimension_numbers<[1], [0], [0], [1], [0, 0, 1, 1], [], []>} : vector<8x128xf32>, vector<128x512xf32>, vector<8x512xf32> -> vector<8x512xf32>
      %16 = arith.addf %14, %15 : vector<8x512xf32>
      %17 = vector.extract_strided_slice %16 {offsets = [0, 0], sizes = [8, 128], strides = [1, 1]} : vector<8x512xf32> to vector<8x128xf32>
      %cst_12 = arith.constant 5.000000e-01 : f32
      %18 = vector.broadcast %cst_12 : f32 to vector<8x128xf32>
      %19 = arith.mulf %18, %17 : vector<8x128xf32>
      %20 = math.tanh %19 : vector<8x128xf32>
      %cst_13 = arith.constant 5.000000e-01 : f32
      %21 = vector.broadcast %cst_13 : f32 to vector<8x128xf32>
      %22 = arith.mulf %21, %20 : vector<8x128xf32>
      %cst_14 = arith.constant 5.000000e-01 : f32
      %23 = vector.broadcast %cst_14 : f32 to vector<8x128xf32>
      %24 = arith.addf %22, %23 : vector<8x128xf32>
      %25 = vector.extract_strided_slice %16 {offsets = [0, 128], sizes = [8, 128], strides = [1, 1]} : vector<8x512xf32> to vector<8x128xf32>
      %cst_15 = arith.constant 5.000000e-01 : f32
      %26 = vector.broadcast %cst_15 : f32 to vector<8x128xf32>
      %27 = arith.mulf %26, %25 : vector<8x128xf32>
      %28 = math.tanh %27 : vector<8x128xf32>
      %cst_16 = arith.constant 5.000000e-01 : f32
      %29 = vector.broadcast %cst_16 : f32 to vector<8x128xf32>
      %30 = arith.mulf %29, %28 : vector<8x128xf32>
      %cst_17 = arith.constant 5.000000e-01 : f32
      %31 = vector.broadcast %cst_17 : f32 to vector<8x128xf32>
      %32 = arith.addf %30, %31 : vector<8x128xf32>
      %33 = vector.extract_strided_slice %16 {offsets = [0, 256], sizes = [8, 128], strides = [1, 1]} : vector<8x512xf32> to vector<8x128xf32>
      %34 = math.tanh %33 : vector<8x128xf32>
      %35 = vector.extract_strided_slice %16 {offsets = [0, 384], sizes = [8, 128], strides = [1, 1]} : vector<8x512xf32> to vector<8x128xf32>
      %cst_18 = arith.constant 5.000000e-01 : f32
      %36 = vector.broadcast %cst_18 : f32 to vector<8x128xf32>
      %37 = arith.mulf %36, %35 : vector<8x128xf32>
      %38 = math.tanh %37 : vector<8x128xf32>
      %cst_19 = arith.constant 5.000000e-01 : f32
      %39 = vector.broadcast %cst_19 : f32 to vector<8x128xf32>
      %40 = arith.mulf %39, %38 : vector<8x128xf32>
      %cst_20 = arith.constant 5.000000e-01 : f32
      %41 = vector.broadcast %cst_20 : f32 to vector<8x128xf32>
      %42 = arith.addf %40, %41 : vector<8x128xf32>
      %43 = arith.mulf %32, %11 : vector<8x128xf32>
      %44 = arith.mulf %24, %34 : vector<8x128xf32>
      %45 = arith.addf %43, %44 : vector<8x128xf32>
      %46 = math.tanh %45 : vector<8x128xf32>
      %47 = arith.mulf %42, %46 : vector<8x128xf32>
      %c1_i32 = arith.constant 1 : i32
      %48 = arith.index_cast %c1_i32 : i32 to index
      %c0_21 = arith.constant 0 : index
      %c0_22 = arith.constant 0 : index
      %49 = vector.load %arg2[%48, %c0_21, %c0_22] : memref<3x8x512xf32, #tpu.memory_space<vmem>>, vector<1x8x512xf32>
      %50 = vector.shape_cast %49 : vector<1x8x512xf32> to vector<8x512xf32>
      %cst_23 = arith.constant dense<0.000000e+00> : vector<8x512xf32>
      %51 = tpu.matmul %47, %3, %cst_23 {dimension_numbers = #tpu.dot_dimension_numbers<[1], [0], [0], [1], [0, 0, 1, 1], [], []>} : vector<8x128xf32>, vector<128x512xf32>, vector<8x512xf32> -> vector<8x512xf32>
      %52 = arith.addf %50, %51 : vector<8x512xf32>
      %53 = vector.extract_strided_slice %52 {offsets = [0, 0], sizes = [8, 128], strides = [1, 1]} : vector<8x512xf32> to vector<8x128xf32>
      %cst_24 = arith.constant 5.000000e-01 : f32
      %54 = vector.broadcast %cst_24 : f32 to vector<8x128xf32>
      %55 = arith.mulf %54, %53 : vector<8x128xf32>
      %56 = math.tanh %55 : vector<8x128xf32>
      %cst_25 = arith.constant 5.000000e-01 : f32
      %57 = vector.broadcast %cst_25 : f32 to vector<8x128xf32>
      %58 = arith.mulf %57, %56 : vector<8x128xf32>
      %cst_26 = arith.constant 5.000000e-01 : f32
      %59 = vector.broadcast %cst_26 : f32 to vector<8x128xf32>
      %60 = arith.addf %58, %59 : vector<8x128xf32>
      %61 = vector.extract_strided_slice %52 {offsets = [0, 128], sizes = [8, 128], strides = [1, 1]} : vector<8x512xf32> to vector<8x128xf32>
      %cst_27 = arith.constant 5.000000e-01 : f32
      %62 = vector.broadcast %cst_27 : f32 to vector<8x128xf32>
      %63 = arith.mulf %62, %61 : vector<8x128xf32>
      %64 = math.tanh %63 : vector<8x128xf32>
      %cst_28 = arith.constant 5.000000e-01 : f32
      %65 = vector.broadcast %cst_28 : f32 to vector<8x128xf32>
      %66 = arith.mulf %65, %64 : vector<8x128xf32>
      %cst_29 = arith.constant 5.000000e-01 : f32
      %67 = vector.broadcast %cst_29 : f32 to vector<8x128xf32>
      %68 = arith.addf %66, %67 : vector<8x128xf32>
      %69 = vector.extract_strided_slice %52 {offsets = [0, 256], sizes = [8, 128], strides = [1, 1]} : vector<8x512xf32> to vector<8x128xf32>
      %70 = math.tanh %69 : vector<8x128xf32>
      %71 = vector.extract_strided_slice %52 {offsets = [0, 384], sizes = [8, 128], strides = [1, 1]} : vector<8x512xf32> to vector<8x128xf32>
      %cst_30 = arith.constant 5.000000e-01 : f32
      %72 = vector.broadcast %cst_30 : f32 to vector<8x128xf32>
      %73 = arith.mulf %72, %71 : vector<8x128xf32>
      %74 = math.tanh %73 : vector<8x128xf32>
      %cst_31 = arith.constant 5.000000e-01 : f32
      %75 = vector.broadcast %cst_31 : f32 to vector<8x128xf32>
      %76 = arith.mulf %75, %74 : vector<8x128xf32>
      %cst_32 = arith.constant 5.000000e-01 : f32
      %77 = vector.broadcast %cst_32 : f32 to vector<8x128xf32>
      %78 = arith.addf %76, %77 : vector<8x128xf32>
      %79 = arith.mulf %68, %45 : vector<8x128xf32>
      %80 = arith.mulf %60, %70 : vector<8x128xf32>
      %81 = arith.addf %79, %80 : vector<8x128xf32>
      %82 = math.tanh %81 : vector<8x128xf32>
      %83 = arith.mulf %78, %82 : vector<8x128xf32>
      %c2_i32_33 = arith.constant 2 : i32
      %84 = arith.index_cast %c2_i32_33 : i32 to index
      %c0_34 = arith.constant 0 : index
      %c0_35 = arith.constant 0 : index
      %85 = vector.load %arg2[%84, %c0_34, %c0_35] : memref<3x8x512xf32, #tpu.memory_space<vmem>>, vector<1x8x512xf32>
      %86 = vector.shape_cast %85 : vector<1x8x512xf32> to vector<8x512xf32>
      %cst_36 = arith.constant dense<0.000000e+00> : vector<8x512xf32>
      %87 = tpu.matmul %83, %3, %cst_36 {dimension_numbers = #tpu.dot_dimension_numbers<[1], [0], [0], [1], [0, 0, 1, 1], [], []>} : vector<8x128xf32>, vector<128x512xf32>, vector<8x512xf32> -> vector<8x512xf32>
      %88 = arith.addf %86, %87 : vector<8x512xf32>
      %89 = vector.extract_strided_slice %88 {offsets = [0, 0], sizes = [8, 128], strides = [1, 1]} : vector<8x512xf32> to vector<8x128xf32>
      %cst_37 = arith.constant 5.000000e-01 : f32
      %90 = vector.broadcast %cst_37 : f32 to vector<8x128xf32>
      %91 = arith.mulf %90, %89 : vector<8x128xf32>
      %92 = math.tanh %91 : vector<8x128xf32>
      %cst_38 = arith.constant 5.000000e-01 : f32
      %93 = vector.broadcast %cst_38 : f32 to vector<8x128xf32>
      %94 = arith.mulf %93, %92 : vector<8x128xf32>
      %cst_39 = arith.constant 5.000000e-01 : f32
      %95 = vector.broadcast %cst_39 : f32 to vector<8x128xf32>
      %96 = arith.addf %94, %95 : vector<8x128xf32>
      %97 = vector.extract_strided_slice %88 {offsets = [0, 128], sizes = [8, 128], strides = [1, 1]} : vector<8x512xf32> to vector<8x128xf32>
      %cst_40 = arith.constant 5.000000e-01 : f32
      %98 = vector.broadcast %cst_40 : f32 to vector<8x128xf32>
      %99 = arith.mulf %98, %97 : vector<8x128xf32>
      %100 = math.tanh %99 : vector<8x128xf32>
      %cst_41 = arith.constant 5.000000e-01 : f32
      %101 = vector.broadcast %cst_41 : f32 to vector<8x128xf32>
      %102 = arith.mulf %101, %100 : vector<8x128xf32>
      %cst_42 = arith.constant 5.000000e-01 : f32
      %103 = vector.broadcast %cst_42 : f32 to vector<8x128xf32>
      %104 = arith.addf %102, %103 : vector<8x128xf32>
      %105 = vector.extract_strided_slice %88 {offsets = [0, 256], sizes = [8, 128], strides = [1, 1]} : vector<8x512xf32> to vector<8x128xf32>
      %106 = math.tanh %105 : vector<8x128xf32>
      %107 = vector.extract_strided_slice %88 {offsets = [0, 384], sizes = [8, 128], strides = [1, 1]} : vector<8x512xf32> to vector<8x128xf32>
      %cst_43 = arith.constant 5.000000e-01 : f32
      %108 = vector.broadcast %cst_43 : f32 to vector<8x128xf32>
      %109 = arith.mulf %108, %107 : vector<8x128xf32>
      %110 = math.tanh %109 : vector<8x128xf32>
      %cst_44 = arith.constant 5.000000e-01 : f32
      %111 = vector.broadcast %cst_44 : f32 to vector<8x128xf32>
      %112 = arith.mulf %111, %110 : vector<8x128xf32>
      %cst_45 = arith.constant 5.000000e-01 : f32
      %113 = vector.broadcast %cst_45 : f32 to vector<8x128xf32>
      %114 = arith.addf %112, %113 : vector<8x128xf32>
      %115 = arith.mulf %104, %81 : vector<8x128xf32>
      %116 = arith.mulf %96, %106 : vector<8x128xf32>
      %117 = arith.addf %115, %116 : vector<8x128xf32>
      %118 = math.tanh %117 : vector<8x128xf32>
      %119 = arith.mulf %114, %118 : vector<8x128xf32>
      %c3_i32 = arith.constant 3 : i32
      %c0_46 = arith.constant 0 : index
      %c0_47 = arith.constant 0 : index
      %120 = vector.load %arg5[%c0_46, %c0_47] : memref<8x128xf32, #tpu.memory_space<vmem>>, vector<8x128xf32>
      tpu.vector_store %arg5[%c0_46, %c0_47], %119 {strides = array<i32>} : memref<8x128xf32, #tpu.memory_space<vmem>>, vector<8x128xf32>,
      %c0_48 = arith.constant 0 : index
      %c0_49 = arith.constant 0 : index
      %121 = vector.load %arg6[%c0_48, %c0_49] : memref<8x128xf32, #tpu.memory_space<vmem>>, vector<8x128xf32>
      tpu.vector_store %arg6[%c0_48, %c0_49], %117 {strides = array<i32>} : memref<8x128xf32, #tpu.memory_space<vmem>>, vector<8x128xf32>,
    } else {
    }
    %c2_i32_3 = arith.constant 2 : i32
    %7 = arith.cmpi eq, %arg1, %c2_i32_3 : i32
    %8 = arith.extui %7 : i1 to i32
    %c0_i32_4 = arith.constant 0 : i32
    %9 = arith.cmpi ne, %8, %c0_i32_4 : i32
    scf.if %9 {
      %c0_5 = arith.constant 0 : index
      %c0_6 = arith.constant 0 : index
      %10 = vector.load %arg5[%c0_5, %c0_6] : memref<8x128xf32, #tpu.memory_space<vmem>>, vector<8x128xf32>
      %c0_7 = arith.constant 0 : index
      %c0_8 = arith.constant 0 : index
      %11 = vector.load %arg6[%c0_7, %c0_8] : memref<8x128xf32, #tpu.memory_space<vmem>>, vector<8x128xf32>
      %c0_i32_9 = arith.constant 0 : i32
      %12 = arith.index_cast %c0_i32_9 : i32 to index
      %c0_10 = arith.constant 0 : index
      %c0_11 = arith.constant 0 : index
      %13 = vector.load %arg2[%12, %c0_10, %c0_11] : memref<3x8x512xf32, #tpu.memory_space<vmem>>, vector<1x8x512xf32>
      %14 = vector.shape_cast %13 : vector<1x8x512xf32> to vector<8x512xf32>
      %cst = arith.constant dense<0.000000e+00> : vector<8x512xf32>
      %15 = tpu.matmul %10, %3, %cst {dimension_numbers = #tpu.dot_dimension_numbers<[1], [0], [0], [1], [0, 0, 1, 1], [], []>} : vector<8x128xf32>, vector<128x512xf32>, vector<8x512xf32> -> vector<8x512xf32>
      %16 = arith.addf %14, %15 : vector<8x512xf32>
      %17 = vector.extract_strided_slice %16 {offsets = [0, 0], sizes = [8, 128], strides = [1, 1]} : vector<8x512xf32> to vector<8x128xf32>
      %cst_12 = arith.constant 5.000000e-01 : f32
      %18 = vector.broadcast %cst_12 : f32 to vector<8x128xf32>
      %19 = arith.mulf %18, %17 : vector<8x128xf32>
      %20 = math.tanh %19 : vector<8x128xf32>
      %cst_13 = arith.constant 5.000000e-01 : f32
      %21 = vector.broadcast %cst_13 : f32 to vector<8x128xf32>
      %22 = arith.mulf %21, %20 : vector<8x128xf32>
      %cst_14 = arith.constant 5.000000e-01 : f32
      %23 = vector.broadcast %cst_14 : f32 to vector<8x128xf32>
      %24 = arith.addf %22, %23 : vector<8x128xf32>
      %25 = vector.extract_strided_slice %16 {offsets = [0, 128], sizes = [8, 128], strides = [1, 1]} : vector<8x512xf32> to vector<8x128xf32>
      %cst_15 = arith.constant 5.000000e-01 : f32
      %26 = vector.broadcast %cst_15 : f32 to vector<8x128xf32>
      %27 = arith.mulf %26, %25 : vector<8x128xf32>
      %28 = math.tanh %27 : vector<8x128xf32>
      %cst_16 = arith.constant 5.000000e-01 : f32
      %29 = vector.broadcast %cst_16 : f32 to vector<8x128xf32>
      %30 = arith.mulf %29, %28 : vector<8x128xf32>
      %cst_17 = arith.constant 5.000000e-01 : f32
      %31 = vector.broadcast %cst_17 : f32 to vector<8x128xf32>
      %32 = arith.addf %30, %31 : vector<8x128xf32>
      %33 = vector.extract_strided_slice %16 {offsets = [0, 256], sizes = [8, 128], strides = [1, 1]} : vector<8x512xf32> to vector<8x128xf32>
      %34 = math.tanh %33 : vector<8x128xf32>
      %35 = vector.extract_strided_slice %16 {offsets = [0, 384], sizes = [8, 128], strides = [1, 1]} : vector<8x512xf32> to vector<8x128xf32>
      %cst_18 = arith.constant 5.000000e-01 : f32
      %36 = vector.broadcast %cst_18 : f32 to vector<8x128xf32>
      %37 = arith.mulf %36, %35 : vector<8x128xf32>
      %38 = math.tanh %37 : vector<8x128xf32>
      %cst_19 = arith.constant 5.000000e-01 : f32
      %39 = vector.broadcast %cst_19 : f32 to vector<8x128xf32>
      %40 = arith.mulf %39, %38 : vector<8x128xf32>
      %cst_20 = arith.constant 5.000000e-01 : f32
      %41 = vector.broadcast %cst_20 : f32 to vector<8x128xf32>
      %42 = arith.addf %40, %41 : vector<8x128xf32>
      %43 = arith.mulf %32, %11 : vector<8x128xf32>
      %44 = arith.mulf %24, %34 : vector<8x128xf32>
      %45 = arith.addf %43, %44 : vector<8x128xf32>
      %46 = math.tanh %45 : vector<8x128xf32>
      %47 = arith.mulf %42, %46 : vector<8x128xf32>
      %c3_i32 = arith.constant 3 : i32
      %48 = arith.muli %arg1, %c3_i32 : i32
      %49 = arith.addi %48, %c0_i32_9 : i32
      %c8_i32 = arith.constant 8 : i32
      %50 = arith.cmpi slt, %49, %c8_i32 : i32
      %51 = arith.select %50, %47, %10 : vector<8x128xf32>
      %52 = arith.select %50, %45, %11 : vector<8x128xf32>
      %c1_i32 = arith.constant 1 : i32
      %53 = arith.index_cast %c1_i32 : i32 to index
      %c0_21 = arith.constant 0 : index
      %c0_22 = arith.constant 0 : index
      %54 = vector.load %arg2[%53, %c0_21, %c0_22] : memref<3x8x512xf32, #tpu.memory_space<vmem>>, vector<1x8x512xf32>
      %55 = vector.shape_cast %54 : vector<1x8x512xf32> to vector<8x512xf32>
      %cst_23 = arith.constant dense<0.000000e+00> : vector<8x512xf32>
      %56 = tpu.matmul %51, %3, %cst_23 {dimension_numbers = #tpu.dot_dimension_numbers<[1], [0], [0], [1], [0, 0, 1, 1], [], []>} : vector<8x128xf32>, vector<128x512xf32>, vector<8x512xf32> -> vector<8x512xf32>
      %57 = arith.addf %55, %56 : vector<8x512xf32>
      %58 = vector.extract_strided_slice %57 {offsets = [0, 0], sizes = [8, 128], strides = [1, 1]} : vector<8x512xf32> to vector<8x128xf32>
      %cst_24 = arith.constant 5.000000e-01 : f32
      %59 = vector.broadcast %cst_24 : f32 to vector<8x128xf32>
      %60 = arith.mulf %59, %58 : vector<8x128xf32>
      %61 = math.tanh %60 : vector<8x128xf32>
      %cst_25 = arith.constant 5.000000e-01 : f32
      %62 = vector.broadcast %cst_25 : f32 to vector<8x128xf32>
      %63 = arith.mulf %62, %61 : vector<8x128xf32>
      %cst_26 = arith.constant 5.000000e-01 : f32
      %64 = vector.broadcast %cst_26 : f32 to vector<8x128xf32>
      %65 = arith.addf %63, %64 : vector<8x128xf32>
      %66 = vector.extract_strided_slice %57 {offsets = [0, 128], sizes = [8, 128], strides = [1, 1]} : vector<8x512xf32> to vector<8x128xf32>
      %cst_27 = arith.constant 5.000000e-01 : f32
      %67 = vector.broadcast %cst_27 : f32 to vector<8x128xf32>
      %68 = arith.mulf %67, %66 : vector<8x128xf32>
      %69 = math.tanh %68 : vector<8x128xf32>
      %cst_28 = arith.constant 5.000000e-01 : f32
      %70 = vector.broadcast %cst_28 : f32 to vector<8x128xf32>
      %71 = arith.mulf %70, %69 : vector<8x128xf32>
      %cst_29 = arith.constant 5.000000e-01 : f32
      %72 = vector.broadcast %cst_29 : f32 to vector<8x128xf32>
      %73 = arith.addf %71, %72 : vector<8x128xf32>
      %74 = vector.extract_strided_slice %57 {offsets = [0, 256], sizes = [8, 128], strides = [1, 1]} : vector<8x512xf32> to vector<8x128xf32>
      %75 = math.tanh %74 : vector<8x128xf32>
      %76 = vector.extract_strided_slice %57 {offsets = [0, 384], sizes = [8, 128], strides = [1, 1]} : vector<8x512xf32> to vector<8x128xf32>
      %cst_30 = arith.constant 5.000000e-01 : f32
      %77 = vector.broadcast %cst_30 : f32 to vector<8x128xf32>
      %78 = arith.mulf %77, %76 : vector<8x128xf32>
      %79 = math.tanh %78 : vector<8x128xf32>
      %cst_31 = arith.constant 5.000000e-01 : f32
      %80 = vector.broadcast %cst_31 : f32 to vector<8x128xf32>
      %81 = arith.mulf %80, %79 : vector<8x128xf32>
      %cst_32 = arith.constant 5.000000e-01 : f32
      %82 = vector.broadcast %cst_32 : f32 to vector<8x128xf32>
      %83 = arith.addf %81, %82 : vector<8x128xf32>
      %84 = arith.mulf %73, %52 : vector<8x128xf32>
      %85 = arith.mulf %65, %75 : vector<8x128xf32>
      %86 = arith.addf %84, %85 : vector<8x128xf32>
      %87 = math.tanh %86 : vector<8x128xf32>
      %88 = arith.mulf %83, %87 : vector<8x128xf32>
      %c3_i32_33 = arith.constant 3 : i32
      %89 = arith.muli %arg1, %c3_i32_33 : i32
      %90 = arith.addi %89, %c1_i32 : i32
      %c8_i32_34 = arith.constant 8 : i32
      %91 = arith.cmpi slt, %90, %c8_i32_34 : i32
      %92 = arith.select %91, %88, %51 : vector<8x128xf32>
      %93 = arith.select %91, %86, %52 : vector<8x128xf32>
      %c2_i32_35 = arith.constant 2 : i32
      %94 = arith.index_cast %c2_i32_35 : i32 to index
      %c0_36 = arith.constant 0 : index
      %c0_37 = arith.constant 0 : index
      %95 = vector.load %arg2[%94, %c0_36, %c0_37] : memref<3x8x512xf32, #tpu.memory_space<vmem>>, vector<1x8x512xf32>
      %96 = vector.shape_cast %95 : vector<1x8x512xf32> to vector<8x512xf32>
      %cst_38 = arith.constant dense<0.000000e+00> : vector<8x512xf32>
      %97 = tpu.matmul %92, %3, %cst_38 {dimension_numbers = #tpu.dot_dimension_numbers<[1], [0], [0], [1], [0, 0, 1, 1], [], []>} : vector<8x128xf32>, vector<128x512xf32>, vector<8x512xf32> -> vector<8x512xf32>
      %98 = arith.addf %96, %97 : vector<8x512xf32>
      %99 = vector.extract_strided_slice %98 {offsets = [0, 0], sizes = [8, 128], strides = [1, 1]} : vector<8x512xf32> to vector<8x128xf32>
      %cst_39 = arith.constant 5.000000e-01 : f32
      %100 = vector.broadcast %cst_39 : f32 to vector<8x128xf32>
      %101 = arith.mulf %100, %99 : vector<8x128xf32>
      %102 = math.tanh %101 : vector<8x128xf32>
      %cst_40 = arith.constant 5.000000e-01 : f32
      %103 = vector.broadcast %cst_40 : f32 to vector<8x128xf32>
      %104 = arith.mulf %103, %102 : vector<8x128xf32>
      %cst_41 = arith.constant 5.000000e-01 : f32
      %105 = vector.broadcast %cst_41 : f32 to vector<8x128xf32>
      %106 = arith.addf %104, %105 : vector<8x128xf32>
      %107 = vector.extract_strided_slice %98 {offsets = [0, 128], sizes = [8, 128], strides = [1, 1]} : vector<8x512xf32> to vector<8x128xf32>
      %cst_42 = arith.constant 5.000000e-01 : f32
      %108 = vector.broadcast %cst_42 : f32 to vector<8x128xf32>
      %109 = arith.mulf %108, %107 : vector<8x128xf32>
      %110 = math.tanh %109 : vector<8x128xf32>
      %cst_43 = arith.constant 5.000000e-01 : f32
      %111 = vector.broadcast %cst_43 : f32 to vector<8x128xf32>
      %112 = arith.mulf %111, %110 : vector<8x128xf32>
      %cst_44 = arith.constant 5.000000e-01 : f32
      %113 = vector.broadcast %cst_44 : f32 to vector<8x128xf32>
      %114 = arith.addf %112, %113 : vector<8x128xf32>
      %115 = vector.extract_strided_slice %98 {offsets = [0, 256], sizes = [8, 128], strides = [1, 1]} : vector<8x512xf32> to vector<8x128xf32>
      %116 = math.tanh %115 : vector<8x128xf32>
      %117 = vector.extract_strided_slice %98 {offsets = [0, 384], sizes = [8, 128], strides = [1, 1]} : vector<8x512xf32> to vector<8x128xf32>
      %cst_45 = arith.constant 5.000000e-01 : f32
      %118 = vector.broadcast %cst_45 : f32 to vector<8x128xf32>
      %119 = arith.mulf %118, %117 : vector<8x128xf32>
      %120 = math.tanh %119 : vector<8x128xf32>
      %cst_46 = arith.constant 5.000000e-01 : f32
      %121 = vector.broadcast %cst_46 : f32 to vector<8x128xf32>
      %122 = arith.mulf %121, %120 : vector<8x128xf32>
      %cst_47 = arith.constant 5.000000e-01 : f32
      %123 = vector.broadcast %cst_47 : f32 to vector<8x128xf32>
      %124 = arith.addf %122, %123 : vector<8x128xf32>
      %125 = arith.mulf %114, %93 : vector<8x128xf32>
      %126 = arith.mulf %106, %116 : vector<8x128xf32>
      %127 = arith.addf %125, %126 : vector<8x128xf32>
      %128 = math.tanh %127 : vector<8x128xf32>
      %129 = arith.mulf %124, %128 : vector<8x128xf32>
      %c3_i32_48 = arith.constant 3 : i32
      %130 = arith.muli %arg1, %c3_i32_48 : i32
      %131 = arith.addi %130, %c2_i32_35 : i32
      %c8_i32_49 = arith.constant 8 : i32
      %132 = arith.cmpi slt, %131, %c8_i32_49 : i32
      %133 = arith.select %132, %129, %92 : vector<8x128xf32>
      %134 = arith.select %132, %127, %93 : vector<8x128xf32>
      %c3_i32_50 = arith.constant 3 : i32
      %135 = math.tanh %133 : vector<8x128xf32>
      %c0_51 = arith.constant 0 : index
      %c0_52 = arith.constant 0 : index
      %136 = vector.load %arg4[%c0_51, %c0_52] : memref<8x128xf32, #tpu.memory_space<vmem>>, vector<8x128xf32>
      tpu.vector_store %arg4[%c0_51, %c0_52], %135 {strides = array<i32>} : memref<8x128xf32, #tpu.memory_space<vmem>>, vector<8x128xf32>,
    } else {
    }
    return
  }
  func.func @transform_0(%arg0: i32, %arg1: i32) -> (i32, i32, i32) {
    %c0_i32 = arith.constant 0 : i32
    %c0_i32_0 = arith.constant 0 : i32
    return %arg1, %arg0, %c0_i32 : i32, i32, i32
  }
  func.func @transform_1(%arg0: i32, %arg1: i32) -> (i32, i32) {
    %c0_i32 = arith.constant 0 : i32
    %c0_i32_0 = arith.constant 0 : i32
    %c0_i32_1 = arith.constant 0 : i32
    return %c0_i32, %c0_i32_0 : i32, i32
  }
  func.func @transform_2(%arg0: i32, %arg1: i32) -> (i32, i32) {
    %c0_i32 = arith.constant 0 : i32
    %c0_i32_0 = arith.constant 0 : i32
    return %arg0, %c0_i32 : i32, i32
  }
}

module attributes {stable_mosaic.version = 11 : i64} {
  func.func @_lstm_recurrence_kernel(%arg0: i32, %arg1: i32, %arg2: memref<3x8x512xf32, #tpu.memory_space<vmem>>, %arg3: memref<128x512xf32, #tpu.memory_space<vmem>>, %arg4: memref<8x128xf32, #tpu.memory_space<vmem>>, %arg5: memref<8x128xf32, #tpu.memory_space<vmem>>, %arg6: memref<8x128xf32, #tpu.memory_space<vmem>>) attributes {dimension_semantics = [#tpu.dimension_semantics<parallel>, #tpu.dimension_semantics<arbitrary>], iteration_bounds = array<i64: 1, 3>, scalar_prefetch = 0 : i64, scratch_operands = 2 : i64, tpu.core_type = #tpu.core_type<tc>, window_params = [{transform_indices = @transform_0, window_bounds = array<i64: 3, 8, 512>}, {pipeline_mode = #tpu.pipeline_mode<synchronous>, transform_indices = @transform_1, window_bounds = array<i64: 128, 512>}, {transform_indices = @transform_2, window_bounds = array<i64: 8, 128>}]} {
    %c0_i32 = arith.constant 0 : i32
    %0 = arith.cmpi eq, %arg1, %c0_i32 : i32
    %1 = arith.extui %0 : i1 to i32
    %c0_i32_0 = arith.constant 0 : i32
    %2 = arith.cmpi ne, %1, %c0_i32_0 : i32
    scf.if %2 {
      %cst = arith.constant 0.000000e+00 : f32
      %10 = vector.broadcast %cst : f32 to vector<8x128xf32>
      %c0_5 = arith.constant 0 : index
      %c0_6 = arith.constant 0 : index
      %11 = vector.load %arg5[%c0_5, %c0_6] : memref<8x128xf32, #tpu.memory_space<vmem>>, vector<8x128xf32>
      tpu.vector_store %arg5[%c0_5, %c0_6], %10 {strides = array<i32>} : memref<8x128xf32, #tpu.memory_space<vmem>>, vector<8x128xf32>,
      %cst_7 = arith.constant 0.000000e+00 : f32
      %12 = vector.broadcast %cst_7 : f32 to vector<8x128xf32>
      %c0_8 = arith.constant 0 : index
      %c0_9 = arith.constant 0 : index
      %13 = vector.load %arg6[%c0_8, %c0_9] : memref<8x128xf32, #tpu.memory_space<vmem>>, vector<8x128xf32>
      tpu.vector_store %arg6[%c0_8, %c0_9], %12 {strides = array<i32>} : memref<8x128xf32, #tpu.memory_space<vmem>>, vector<8x128xf32>,
    } else {
    }
    %c0 = arith.constant 0 : index
    %c0_1 = arith.constant 0 : index
    %3 = vector.load %arg3[%c0, %c0_1] : memref<128x512xf32, #tpu.memory_space<vmem>>, vector<128x512xf32>
    %c2_i32 = arith.constant 2 : i32
    %4 = arith.cmpi slt, %arg1, %c2_i32 : i32
    %5 = arith.extui %4 : i1 to i32
    %c0_i32_2 = arith.constant 0 : i32
    %6 = arith.cmpi ne, %5, %c0_i32_2 : i32
    scf.if %6 {
      %c0_5 = arith.constant 0 : index
      %c0_6 = arith.constant 0 : index
      %10 = vector.load %arg5[%c0_5, %c0_6] : memref<8x128xf32, #tpu.memory_space<vmem>>, vector<8x128xf32>
      %c0_7 = arith.constant 0 : index
      %c0_8 = arith.constant 0 : index
      %11 = vector.load %arg6[%c0_7, %c0_8] : memref<8x128xf32, #tpu.memory_space<vmem>>, vector<8x128xf32>
      %c0_i32_9 = arith.constant 0 : i32
      %12 = arith.index_cast %c0_i32_9 : i32 to index
      %c0_10 = arith.constant 0 : index
      %c0_11 = arith.constant 0 : index
      %13 = vector.load %arg2[%12, %c0_10, %c0_11] : memref<3x8x512xf32, #tpu.memory_space<vmem>>, vector<1x8x512xf32>
      %14 = vector.shape_cast %13 : vector<1x8x512xf32> to vector<8x512xf32>
      %cst = arith.constant dense<0.000000e+00> : vector<8x512xf32>
      %15 = tpu.matmul %10, %3, %cst {dimension_numbers = #tpu.dot_dimension_numbers<[1], [0], [0], [1], [0, 0, 1, 1], [], []>} : vector<8x128xf32>, vector<128x512xf32>, vector<8x512xf32> -> vector<8x512xf32>
      %16 = arith.addf %14, %15 : vector<8x512xf32>
      %17 = vector.extract_strided_slice %16 {offsets = [0, 0], sizes = [8, 128], strides = [1, 1]} : vector<8x512xf32> to vector<8x128xf32>
      %cst_12 = arith.constant 5.000000e-01 : f32
      %18 = vector.broadcast %cst_12 : f32 to vector<8x128xf32>
      %19 = arith.mulf %18, %17 : vector<8x128xf32>
      %20 = math.tanh %19 : vector<8x128xf32>
      %cst_13 = arith.constant 5.000000e-01 : f32
      %21 = vector.broadcast %cst_13 : f32 to vector<8x128xf32>
      %22 = arith.mulf %21, %20 : vector<8x128xf32>
      %cst_14 = arith.constant 5.000000e-01 : f32
      %23 = vector.broadcast %cst_14 : f32 to vector<8x128xf32>
      %24 = arith.addf %22, %23 : vector<8x128xf32>
      %25 = vector.extract_strided_slice %16 {offsets = [0, 128], sizes = [8, 128], strides = [1, 1]} : vector<8x512xf32> to vector<8x128xf32>
      %cst_15 = arith.constant 5.000000e-01 : f32
      %26 = vector.broadcast %cst_15 : f32 to vector<8x128xf32>
      %27 = arith.mulf %26, %25 : vector<8x128xf32>
      %28 = math.tanh %27 : vector<8x128xf32>
      %cst_16 = arith.constant 5.000000e-01 : f32
      %29 = vector.broadcast %cst_16 : f32 to vector<8x128xf32>
      %30 = arith.mulf %29, %28 : vector<8x128xf32>
      %cst_17 = arith.constant 5.000000e-01 : f32
      %31 = vector.broadcast %cst_17 : f32 to vector<8x128xf32>
      %32 = arith.addf %30, %31 : vector<8x128xf32>
      %33 = vector.extract_strided_slice %16 {offsets = [0, 256], sizes = [8, 128], strides = [1, 1]} : vector<8x512xf32> to vector<8x128xf32>
      %34 = math.tanh %33 : vector<8x128xf32>
      %35 = vector.extract_strided_slice %16 {offsets = [0, 384], sizes = [8, 128], strides = [1, 1]} : vector<8x512xf32> to vector<8x128xf32>
      %cst_18 = arith.constant 5.000000e-01 : f32
      %36 = vector.broadcast %cst_18 : f32 to vector<8x128xf32>
      %37 = arith.mulf %36, %35 : vector<8x128xf32>
      %38 = math.tanh %37 : vector<8x128xf32>
      %cst_19 = arith.constant 5.000000e-01 : f32
      %39 = vector.broadcast %cst_19 : f32 to vector<8x128xf32>
      %40 = arith.mulf %39, %38 : vector<8x128xf32>
      %cst_20 = arith.constant 5.000000e-01 : f32
      %41 = vector.broadcast %cst_20 : f32 to vector<8x128xf32>
      %42 = arith.addf %40, %41 : vector<8x128xf32>
      %43 = arith.mulf %32, %11 : vector<8x128xf32>
      %44 = arith.mulf %24, %34 : vector<8x128xf32>
      %45 = arith.addf %43, %44 : vector<8x128xf32>
      %46 = math.tanh %45 : vector<8x128xf32>
      %47 = arith.mulf %42, %46 : vector<8x128xf32>
      %c1_i32 = arith.constant 1 : i32
      %48 = arith.index_cast %c1_i32 : i32 to index
      %c0_21 = arith.constant 0 : index
      %c0_22 = arith.constant 0 : index
      %49 = vector.load %arg2[%48, %c0_21, %c0_22] : memref<3x8x512xf32, #tpu.memory_space<vmem>>, vector<1x8x512xf32>
      %50 = vector.shape_cast %49 : vector<1x8x512xf32> to vector<8x512xf32>
      %cst_23 = arith.constant dense<0.000000e+00> : vector<8x512xf32>
      %51 = tpu.matmul %47, %3, %cst_23 {dimension_numbers = #tpu.dot_dimension_numbers<[1], [0], [0], [1], [0, 0, 1, 1], [], []>} : vector<8x128xf32>, vector<128x512xf32>, vector<8x512xf32> -> vector<8x512xf32>
      %52 = arith.addf %50, %51 : vector<8x512xf32>
      %53 = vector.extract_strided_slice %52 {offsets = [0, 0], sizes = [8, 128], strides = [1, 1]} : vector<8x512xf32> to vector<8x128xf32>
      %cst_24 = arith.constant 5.000000e-01 : f32
      %54 = vector.broadcast %cst_24 : f32 to vector<8x128xf32>
      %55 = arith.mulf %54, %53 : vector<8x128xf32>
      %56 = math.tanh %55 : vector<8x128xf32>
      %cst_25 = arith.constant 5.000000e-01 : f32
      %57 = vector.broadcast %cst_25 : f32 to vector<8x128xf32>
      %58 = arith.mulf %57, %56 : vector<8x128xf32>
      %cst_26 = arith.constant 5.000000e-01 : f32
      %59 = vector.broadcast %cst_26 : f32 to vector<8x128xf32>
      %60 = arith.addf %58, %59 : vector<8x128xf32>
      %61 = vector.extract_strided_slice %52 {offsets = [0, 128], sizes = [8, 128], strides = [1, 1]} : vector<8x512xf32> to vector<8x128xf32>
      %cst_27 = arith.constant 5.000000e-01 : f32
      %62 = vector.broadcast %cst_27 : f32 to vector<8x128xf32>
      %63 = arith.mulf %62, %61 : vector<8x128xf32>
      %64 = math.tanh %63 : vector<8x128xf32>
      %cst_28 = arith.constant 5.000000e-01 : f32
      %65 = vector.broadcast %cst_28 : f32 to vector<8x128xf32>
      %66 = arith.mulf %65, %64 : vector<8x128xf32>
      %cst_29 = arith.constant 5.000000e-01 : f32
      %67 = vector.broadcast %cst_29 : f32 to vector<8x128xf32>
      %68 = arith.addf %66, %67 : vector<8x128xf32>
      %69 = vector.extract_strided_slice %52 {offsets = [0, 256], sizes = [8, 128], strides = [1, 1]} : vector<8x512xf32> to vector<8x128xf32>
      %70 = math.tanh %69 : vector<8x128xf32>
      %71 = vector.extract_strided_slice %52 {offsets = [0, 384], sizes = [8, 128], strides = [1, 1]} : vector<8x512xf32> to vector<8x128xf32>
      %cst_30 = arith.constant 5.000000e-01 : f32
      %72 = vector.broadcast %cst_30 : f32 to vector<8x128xf32>
      %73 = arith.mulf %72, %71 : vector<8x128xf32>
      %74 = math.tanh %73 : vector<8x128xf32>
      %cst_31 = arith.constant 5.000000e-01 : f32
      %75 = vector.broadcast %cst_31 : f32 to vector<8x128xf32>
      %76 = arith.mulf %75, %74 : vector<8x128xf32>
      %cst_32 = arith.constant 5.000000e-01 : f32
      %77 = vector.broadcast %cst_32 : f32 to vector<8x128xf32>
      %78 = arith.addf %76, %77 : vector<8x128xf32>
      %79 = arith.mulf %68, %45 : vector<8x128xf32>
      %80 = arith.mulf %60, %70 : vector<8x128xf32>
      %81 = arith.addf %79, %80 : vector<8x128xf32>
      %82 = math.tanh %81 : vector<8x128xf32>
      %83 = arith.mulf %78, %82 : vector<8x128xf32>
      %c2_i32_33 = arith.constant 2 : i32
      %84 = arith.index_cast %c2_i32_33 : i32 to index
      %c0_34 = arith.constant 0 : index
      %c0_35 = arith.constant 0 : index
      %85 = vector.load %arg2[%84, %c0_34, %c0_35] : memref<3x8x512xf32, #tpu.memory_space<vmem>>, vector<1x8x512xf32>
      %86 = vector.shape_cast %85 : vector<1x8x512xf32> to vector<8x512xf32>
      %cst_36 = arith.constant dense<0.000000e+00> : vector<8x512xf32>
      %87 = tpu.matmul %83, %3, %cst_36 {dimension_numbers = #tpu.dot_dimension_numbers<[1], [0], [0], [1], [0, 0, 1, 1], [], []>} : vector<8x128xf32>, vector<128x512xf32>, vector<8x512xf32> -> vector<8x512xf32>
      %88 = arith.addf %86, %87 : vector<8x512xf32>
      %89 = vector.extract_strided_slice %88 {offsets = [0, 0], sizes = [8, 128], strides = [1, 1]} : vector<8x512xf32> to vector<8x128xf32>
      %cst_37 = arith.constant 5.000000e-01 : f32
      %90 = vector.broadcast %cst_37 : f32 to vector<8x128xf32>
      %91 = arith.mulf %90, %89 : vector<8x128xf32>
      %92 = math.tanh %91 : vector<8x128xf32>
      %cst_38 = arith.constant 5.000000e-01 : f32
      %93 = vector.broadcast %cst_38 : f32 to vector<8x128xf32>
      %94 = arith.mulf %93, %92 : vector<8x128xf32>
      %cst_39 = arith.constant 5.000000e-01 : f32
      %95 = vector.broadcast %cst_39 : f32 to vector<8x128xf32>
      %96 = arith.addf %94, %95 : vector<8x128xf32>
      %97 = vector.extract_strided_slice %88 {offsets = [0, 128], sizes = [8, 128], strides = [1, 1]} : vector<8x512xf32> to vector<8x128xf32>
      %cst_40 = arith.constant 5.000000e-01 : f32
      %98 = vector.broadcast %cst_40 : f32 to vector<8x128xf32>
      %99 = arith.mulf %98, %97 : vector<8x128xf32>
      %100 = math.tanh %99 : vector<8x128xf32>
      %cst_41 = arith.constant 5.000000e-01 : f32
      %101 = vector.broadcast %cst_41 : f32 to vector<8x128xf32>
      %102 = arith.mulf %101, %100 : vector<8x128xf32>
      %cst_42 = arith.constant 5.000000e-01 : f32
      %103 = vector.broadcast %cst_42 : f32 to vector<8x128xf32>
      %104 = arith.addf %102, %103 : vector<8x128xf32>
      %105 = vector.extract_strided_slice %88 {offsets = [0, 256], sizes = [8, 128], strides = [1, 1]} : vector<8x512xf32> to vector<8x128xf32>
      %106 = math.tanh %105 : vector<8x128xf32>
      %107 = vector.extract_strided_slice %88 {offsets = [0, 384], sizes = [8, 128], strides = [1, 1]} : vector<8x512xf32> to vector<8x128xf32>
      %cst_43 = arith.constant 5.000000e-01 : f32
      %108 = vector.broadcast %cst_43 : f32 to vector<8x128xf32>
      %109 = arith.mulf %108, %107 : vector<8x128xf32>
      %110 = math.tanh %109 : vector<8x128xf32>
      %cst_44 = arith.constant 5.000000e-01 : f32
      %111 = vector.broadcast %cst_44 : f32 to vector<8x128xf32>
      %112 = arith.mulf %111, %110 : vector<8x128xf32>
      %cst_45 = arith.constant 5.000000e-01 : f32
      %113 = vector.broadcast %cst_45 : f32 to vector<8x128xf32>
      %114 = arith.addf %112, %113 : vector<8x128xf32>
      %115 = arith.mulf %104, %81 : vector<8x128xf32>
      %116 = arith.mulf %96, %106 : vector<8x128xf32>
      %117 = arith.addf %115, %116 : vector<8x128xf32>
      %118 = math.tanh %117 : vector<8x128xf32>
      %119 = arith.mulf %114, %118 : vector<8x128xf32>
      %c3_i32 = arith.constant 3 : i32
      %c0_46 = arith.constant 0 : index
      %c0_47 = arith.constant 0 : index
      %120 = vector.load %arg5[%c0_46, %c0_47] : memref<8x128xf32, #tpu.memory_space<vmem>>, vector<8x128xf32>
      tpu.vector_store %arg5[%c0_46, %c0_47], %119 {strides = array<i32>} : memref<8x128xf32, #tpu.memory_space<vmem>>, vector<8x128xf32>,
      %c0_48 = arith.constant 0 : index
      %c0_49 = arith.constant 0 : index
      %121 = vector.load %arg6[%c0_48, %c0_49] : memref<8x128xf32, #tpu.memory_space<vmem>>, vector<8x128xf32>
      tpu.vector_store %arg6[%c0_48, %c0_49], %117 {strides = array<i32>} : memref<8x128xf32, #tpu.memory_space<vmem>>, vector<8x128xf32>,
    } else {
    }
    %c2_i32_3 = arith.constant 2 : i32
    %7 = arith.cmpi eq, %arg1, %c2_i32_3 : i32
    %8 = arith.extui %7 : i1 to i32
    %c0_i32_4 = arith.constant 0 : i32
    %9 = arith.cmpi ne, %8, %c0_i32_4 : i32
    scf.if %9 {
      %c0_5 = arith.constant 0 : index
      %c0_6 = arith.constant 0 : index
      %10 = vector.load %arg5[%c0_5, %c0_6] : memref<8x128xf32, #tpu.memory_space<vmem>>, vector<8x128xf32>
      %c0_7 = arith.constant 0 : index
      %c0_8 = arith.constant 0 : index
      %11 = vector.load %arg6[%c0_7, %c0_8] : memref<8x128xf32, #tpu.memory_space<vmem>>, vector<8x128xf32>
      %c0_i32_9 = arith.constant 0 : i32
      %12 = arith.index_cast %c0_i32_9 : i32 to index
      %c0_10 = arith.constant 0 : index
      %c0_11 = arith.constant 0 : index
      %13 = vector.load %arg2[%12, %c0_10, %c0_11] : memref<3x8x512xf32, #tpu.memory_space<vmem>>, vector<1x8x512xf32>
      %14 = vector.shape_cast %13 : vector<1x8x512xf32> to vector<8x512xf32>
      %cst = arith.constant dense<0.000000e+00> : vector<8x512xf32>
      %15 = tpu.matmul %10, %3, %cst {dimension_numbers = #tpu.dot_dimension_numbers<[1], [0], [0], [1], [0, 0, 1, 1], [], []>} : vector<8x128xf32>, vector<128x512xf32>, vector<8x512xf32> -> vector<8x512xf32>
      %16 = arith.addf %14, %15 : vector<8x512xf32>
      %17 = vector.extract_strided_slice %16 {offsets = [0, 0], sizes = [8, 128], strides = [1, 1]} : vector<8x512xf32> to vector<8x128xf32>
      %cst_12 = arith.constant 5.000000e-01 : f32
      %18 = vector.broadcast %cst_12 : f32 to vector<8x128xf32>
      %19 = arith.mulf %18, %17 : vector<8x128xf32>
      %20 = math.tanh %19 : vector<8x128xf32>
      %cst_13 = arith.constant 5.000000e-01 : f32
      %21 = vector.broadcast %cst_13 : f32 to vector<8x128xf32>
      %22 = arith.mulf %21, %20 : vector<8x128xf32>
      %cst_14 = arith.constant 5.000000e-01 : f32
      %23 = vector.broadcast %cst_14 : f32 to vector<8x128xf32>
      %24 = arith.addf %22, %23 : vector<8x128xf32>
      %25 = vector.extract_strided_slice %16 {offsets = [0, 128], sizes = [8, 128], strides = [1, 1]} : vector<8x512xf32> to vector<8x128xf32>
      %cst_15 = arith.constant 5.000000e-01 : f32
      %26 = vector.broadcast %cst_15 : f32 to vector<8x128xf32>
      %27 = arith.mulf %26, %25 : vector<8x128xf32>
      %28 = math.tanh %27 : vector<8x128xf32>
      %cst_16 = arith.constant 5.000000e-01 : f32
      %29 = vector.broadcast %cst_16 : f32 to vector<8x128xf32>
      %30 = arith.mulf %29, %28 : vector<8x128xf32>
      %cst_17 = arith.constant 5.000000e-01 : f32
      %31 = vector.broadcast %cst_17 : f32 to vector<8x128xf32>
      %32 = arith.addf %30, %31 : vector<8x128xf32>
      %33 = vector.extract_strided_slice %16 {offsets = [0, 256], sizes = [8, 128], strides = [1, 1]} : vector<8x512xf32> to vector<8x128xf32>
      %34 = math.tanh %33 : vector<8x128xf32>
      %35 = vector.extract_strided_slice %16 {offsets = [0, 384], sizes = [8, 128], strides = [1, 1]} : vector<8x512xf32> to vector<8x128xf32>
      %cst_18 = arith.constant 5.000000e-01 : f32
      %36 = vector.broadcast %cst_18 : f32 to vector<8x128xf32>
      %37 = arith.mulf %36, %35 : vector<8x128xf32>
      %38 = math.tanh %37 : vector<8x128xf32>
      %cst_19 = arith.constant 5.000000e-01 : f32
      %39 = vector.broadcast %cst_19 : f32 to vector<8x128xf32>
      %40 = arith.mulf %39, %38 : vector<8x128xf32>
      %cst_20 = arith.constant 5.000000e-01 : f32
      %41 = vector.broadcast %cst_20 : f32 to vector<8x128xf32>
      %42 = arith.addf %40, %41 : vector<8x128xf32>
      %43 = arith.mulf %32, %11 : vector<8x128xf32>
      %44 = arith.mulf %24, %34 : vector<8x128xf32>
      %45 = arith.addf %43, %44 : vector<8x128xf32>
      %46 = math.tanh %45 : vector<8x128xf32>
      %47 = arith.mulf %42, %46 : vector<8x128xf32>
      %c3_i32 = arith.constant 3 : i32
      %48 = arith.muli %arg1, %c3_i32 : i32
      %49 = arith.addi %48, %c0_i32_9 : i32
      %c8_i32 = arith.constant 8 : i32
      %50 = arith.cmpi slt, %49, %c8_i32 : i32
      %51 = arith.select %50, %47, %10 : vector<8x128xf32>
      %52 = arith.select %50, %45, %11 : vector<8x128xf32>
      %c1_i32 = arith.constant 1 : i32
      %53 = arith.index_cast %c1_i32 : i32 to index
      %c0_21 = arith.constant 0 : index
      %c0_22 = arith.constant 0 : index
      %54 = vector.load %arg2[%53, %c0_21, %c0_22] : memref<3x8x512xf32, #tpu.memory_space<vmem>>, vector<1x8x512xf32>
      %55 = vector.shape_cast %54 : vector<1x8x512xf32> to vector<8x512xf32>
      %cst_23 = arith.constant dense<0.000000e+00> : vector<8x512xf32>
      %56 = tpu.matmul %51, %3, %cst_23 {dimension_numbers = #tpu.dot_dimension_numbers<[1], [0], [0], [1], [0, 0, 1, 1], [], []>} : vector<8x128xf32>, vector<128x512xf32>, vector<8x512xf32> -> vector<8x512xf32>
      %57 = arith.addf %55, %56 : vector<8x512xf32>
      %58 = vector.extract_strided_slice %57 {offsets = [0, 0], sizes = [8, 128], strides = [1, 1]} : vector<8x512xf32> to vector<8x128xf32>
      %cst_24 = arith.constant 5.000000e-01 : f32
      %59 = vector.broadcast %cst_24 : f32 to vector<8x128xf32>
      %60 = arith.mulf %59, %58 : vector<8x128xf32>
      %61 = math.tanh %60 : vector<8x128xf32>
      %cst_25 = arith.constant 5.000000e-01 : f32
      %62 = vector.broadcast %cst_25 : f32 to vector<8x128xf32>
      %63 = arith.mulf %62, %61 : vector<8x128xf32>
      %cst_26 = arith.constant 5.000000e-01 : f32
      %64 = vector.broadcast %cst_26 : f32 to vector<8x128xf32>
      %65 = arith.addf %63, %64 : vector<8x128xf32>
      %66 = vector.extract_strided_slice %57 {offsets = [0, 128], sizes = [8, 128], strides = [1, 1]} : vector<8x512xf32> to vector<8x128xf32>
      %cst_27 = arith.constant 5.000000e-01 : f32
      %67 = vector.broadcast %cst_27 : f32 to vector<8x128xf32>
      %68 = arith.mulf %67, %66 : vector<8x128xf32>
      %69 = math.tanh %68 : vector<8x128xf32>
      %cst_28 = arith.constant 5.000000e-01 : f32
      %70 = vector.broadcast %cst_28 : f32 to vector<8x128xf32>
      %71 = arith.mulf %70, %69 : vector<8x128xf32>
      %cst_29 = arith.constant 5.000000e-01 : f32
      %72 = vector.broadcast %cst_29 : f32 to vector<8x128xf32>
      %73 = arith.addf %71, %72 : vector<8x128xf32>
      %74 = vector.extract_strided_slice %57 {offsets = [0, 256], sizes = [8, 128], strides = [1, 1]} : vector<8x512xf32> to vector<8x128xf32>
      %75 = math.tanh %74 : vector<8x128xf32>
      %76 = vector.extract_strided_slice %57 {offsets = [0, 384], sizes = [8, 128], strides = [1, 1]} : vector<8x512xf32> to vector<8x128xf32>
      %cst_30 = arith.constant 5.000000e-01 : f32
      %77 = vector.broadcast %cst_30 : f32 to vector<8x128xf32>
      %78 = arith.mulf %77, %76 : vector<8x128xf32>
      %79 = math.tanh %78 : vector<8x128xf32>
      %cst_31 = arith.constant 5.000000e-01 : f32
      %80 = vector.broadcast %cst_31 : f32 to vector<8x128xf32>
      %81 = arith.mulf %80, %79 : vector<8x128xf32>
      %cst_32 = arith.constant 5.000000e-01 : f32
      %82 = vector.broadcast %cst_32 : f32 to vector<8x128xf32>
      %83 = arith.addf %81, %82 : vector<8x128xf32>
      %84 = arith.mulf %73, %52 : vector<8x128xf32>
      %85 = arith.mulf %65, %75 : vector<8x128xf32>
      %86 = arith.addf %84, %85 : vector<8x128xf32>
      %87 = math.tanh %86 : vector<8x128xf32>
      %88 = arith.mulf %83, %87 : vector<8x128xf32>
      %c3_i32_33 = arith.constant 3 : i32
      %89 = arith.muli %arg1, %c3_i32_33 : i32
      %90 = arith.addi %89, %c1_i32 : i32
      %c8_i32_34 = arith.constant 8 : i32
      %91 = arith.cmpi slt, %90, %c8_i32_34 : i32
      %92 = arith.select %91, %88, %51 : vector<8x128xf32>
      %93 = arith.select %91, %86, %52 : vector<8x128xf32>
      %c2_i32_35 = arith.constant 2 : i32
      %94 = arith.index_cast %c2_i32_35 : i32 to index
      %c0_36 = arith.constant 0 : index
      %c0_37 = arith.constant 0 : index
      %95 = vector.load %arg2[%94, %c0_36, %c0_37] : memref<3x8x512xf32, #tpu.memory_space<vmem>>, vector<1x8x512xf32>
      %96 = vector.shape_cast %95 : vector<1x8x512xf32> to vector<8x512xf32>
      %cst_38 = arith.constant dense<0.000000e+00> : vector<8x512xf32>
      %97 = tpu.matmul %92, %3, %cst_38 {dimension_numbers = #tpu.dot_dimension_numbers<[1], [0], [0], [1], [0, 0, 1, 1], [], []>} : vector<8x128xf32>, vector<128x512xf32>, vector<8x512xf32> -> vector<8x512xf32>
      %98 = arith.addf %96, %97 : vector<8x512xf32>
      %99 = vector.extract_strided_slice %98 {offsets = [0, 0], sizes = [8, 128], strides = [1, 1]} : vector<8x512xf32> to vector<8x128xf32>
      %cst_39 = arith.constant 5.000000e-01 : f32
      %100 = vector.broadcast %cst_39 : f32 to vector<8x128xf32>
      %101 = arith.mulf %100, %99 : vector<8x128xf32>
      %102 = math.tanh %101 : vector<8x128xf32>
      %cst_40 = arith.constant 5.000000e-01 : f32
      %103 = vector.broadcast %cst_40 : f32 to vector<8x128xf32>
      %104 = arith.mulf %103, %102 : vector<8x128xf32>
      %cst_41 = arith.constant 5.000000e-01 : f32
      %105 = vector.broadcast %cst_41 : f32 to vector<8x128xf32>
      %106 = arith.addf %104, %105 : vector<8x128xf32>
      %107 = vector.extract_strided_slice %98 {offsets = [0, 128], sizes = [8, 128], strides = [1, 1]} : vector<8x512xf32> to vector<8x128xf32>
      %cst_42 = arith.constant 5.000000e-01 : f32
      %108 = vector.broadcast %cst_42 : f32 to vector<8x128xf32>
      %109 = arith.mulf %108, %107 : vector<8x128xf32>
      %110 = math.tanh %109 : vector<8x128xf32>
      %cst_43 = arith.constant 5.000000e-01 : f32
      %111 = vector.broadcast %cst_43 : f32 to vector<8x128xf32>
      %112 = arith.mulf %111, %110 : vector<8x128xf32>
      %cst_44 = arith.constant 5.000000e-01 : f32
      %113 = vector.broadcast %cst_44 : f32 to vector<8x128xf32>
      %114 = arith.addf %112, %113 : vector<8x128xf32>
      %115 = vector.extract_strided_slice %98 {offsets = [0, 256], sizes = [8, 128], strides = [1, 1]} : vector<8x512xf32> to vector<8x128xf32>
      %116 = math.tanh %115 : vector<8x128xf32>
      %117 = vector.extract_strided_slice %98 {offsets = [0, 384], sizes = [8, 128], strides = [1, 1]} : vector<8x512xf32> to vector<8x128xf32>
      %cst_45 = arith.constant 5.000000e-01 : f32
      %118 = vector.broadcast %cst_45 : f32 to vector<8x128xf32>
      %119 = arith.mulf %118, %117 : vector<8x128xf32>
      %120 = math.tanh %119 : vector<8x128xf32>
      %cst_46 = arith.constant 5.000000e-01 : f32
      %121 = vector.broadcast %cst_46 : f32 to vector<8x128xf32>
      %122 = arith.mulf %121, %120 : vector<8x128xf32>
      %cst_47 = arith.constant 5.000000e-01 : f32
      %123 = vector.broadcast %cst_47 : f32 to vector<8x128xf32>
      %124 = arith.addf %122, %123 : vector<8x128xf32>
      %125 = arith.mulf %114, %93 : vector<8x128xf32>
      %126 = arith.mulf %106, %116 : vector<8x128xf32>
      %127 = arith.addf %125, %126 : vector<8x128xf32>
      %128 = math.tanh %127 : vector<8x128xf32>
      %129 = arith.mulf %124, %128 : vector<8x128xf32>
      %c3_i32_48 = arith.constant 3 : i32
      %130 = arith.muli %arg1, %c3_i32_48 : i32
      %131 = arith.addi %130, %c2_i32_35 : i32
      %c8_i32_49 = arith.constant 8 : i32
      %132 = arith.cmpi slt, %131, %c8_i32_49 : i32
      %133 = arith.select %132, %129, %92 : vector<8x128xf32>
      %134 = arith.select %132, %127, %93 : vector<8x128xf32>
      %c3_i32_50 = arith.constant 3 : i32
      %135 = math.tanh %133 : vector<8x128xf32>
      %c0_51 = arith.constant 0 : index
      %c0_52 = arith.constant 0 : index
      %136 = vector.load %arg4[%c0_51, %c0_52] : memref<8x128xf32, #tpu.memory_space<vmem>>, vector<8x128xf32>
      tpu.vector_store %arg4[%c0_51, %c0_52], %135 {strides = array<i32>} : memref<8x128xf32, #tpu.memory_space<vmem>>, vector<8x128xf32>,
    } else {
    }
    return
  }
  func.func @transform_0(%arg0: i32, %arg1: i32) -> (i32, i32, i32) {
    %c0_i32 = arith.constant 0 : i32
    %c0_i32_0 = arith.constant 0 : i32
    return %arg1, %arg0, %c0_i32 : i32, i32, i32
  }
  func.func @transform_1(%arg0: i32, %arg1: i32) -> (i32, i32) {
    %c0_i32 = arith.constant 0 : i32
    %c0_i32_0 = arith.constant 0 : i32
    %c0_i32_1 = arith.constant 0 : i32
    return %c0_i32, %c0_i32_0 : i32, i32
  }
  func.func @transform_2(%arg0: i32, %arg1: i32) -> (i32, i32) {
    %c0_i32 = arith.constant 0 : i32
    %c0_i32_0 = arith.constant 0 : i32
    return %arg0, %c0_i32 : i32, i32
  }
}

</mosaic_0001>

<llo_original>
// kernel: lstm_forward.1
$region0: #{lstm_forward.1}
  #allocation0 [shape = 'u32[]', space=smem, size = 0x4, offset = 0x4, fixed_abs, tag = 'smem constant byte address 0x4 - core index']
  #allocation1 [shape = 'u32[144,128]{1,0:T(1,128)}', space=vmem, size = 0x12000, scoped, tag = 'internal scratch']
  #allocation2 [shape = 'f32[8,128]{1,0:T(8,128)}', space=vmem, size = 0x1000, scoped, tag = 'scratch operand']
  #allocation3 [shape = 'f32[8,128]{1,0:T(8,128)}', space=vmem, size = 0x1000, scoped, tag = 'scratch operand']
  %s0 = inlined_call_operand.vmem [shape: f32[9,8,512], index: 0, kind: input, shape index: {}]
  %s1 = inlined_call_operand.vmem [shape: f32[128,512], index: 1, kind: input, shape index: {}]
  %s2 = inlined_call_operand.vmem [shape: f32[8,128], index: 2, kind: output, shape index: {}]
  %s3 = sld [smem:[#allocation0]]
  $region53: #{lstm_forward.1} parent=0
    _
  %s5 = ssub.s32 1, %s3
  %s6 = scalar_select 0, %s5, %s3
  loop: start=0, step=1, limit=5
  $region2: #{lstm_forward.1} parent=0 // loop_pre_header
    _
  $region3: #{lstm_forward.1} parent=0 // loop_header
    %s8 = sphi 0, %s12
    %p9 = scmp.ge.s32.totalorder %s8, 5
    %s15 = sphi 0, %s27
    %s16 = sphi 0, %s23
    %s17 = sphi 0, %s15
    %s18 = sphi 0, %s16
    %s19 = sphi 0, %s17
    %s20 = sphi 0, %s18
    %s32 = sphi 0, %s34
    %s35 = sphi 0, %s32
    %s36 = sphi 0, %s35
    %s52 = sphi 0, %s36
    %s56 = sphi 0, %s56
    %s58 = sphi 0, %s56
    %s59 = sphi 0, %s58
    %s73 = sphi 0, %s59
    %s79 = sphi 0, %s81
    %s82 = sphi 0, %s79
    %s83 = sphi 0, %s82
    %s99 = sphi 0, %s83
  $region4: #{lstm_forward.1} parent=0 // loop_header_branch
    %11 = sbr.rel (%p9) target = $region8
  $region5: #{lstm_forward.1} parent=0 // loop_body
    %s13 = ssub.s32 %s8, 1
    %s14 = ssub.s32 %s8, 2
    %s21 = sadd.s32 1, %s16
    %p22 = scmp.ge.s32.totalorder %s21, 3
    %s23 = scalar_select %p22, 0, %s21
    %s24 = sadd.s32 1, %s15
    %s25 = scalar_select %p22, %s24, %s15
    %p26 = scmp.ge.s32.totalorder %s25, 1
    %s27 = scalar_select %p26, 0, %s25
    %s28 = ssub.s32 %s16, %s23
    %s29 = ssub.s32 %s15, %s27
    %s30 = sor.u32 %s28, %s29
    %p31 = scmp.eq.s32.totalorder %s30, 0
    %s33 = sadd.s32 %s32, 1
    %s34 = scalar_select %p31, %s32, %s33
    %p37 = pneg %p31
    %p38 = scmp.eq.s32.totalorder %s8, 2
    %p39 = por %p37, %p38
    %p40 = scmp.ne.s32.totalorder %s32, %s35
    %p41 = scmp.eq.s32.totalorder %s8, 0
    %p42 = por %p40, %p41
    %p43 = scmp.ne.s32.totalorder %s32, %s35
    %p44 = scmp.eq.s32.totalorder %s13, 2
    %p45 = por %p43, %p44
    %p46 = scmp.ne.s32.totalorder %s35, %s36
    %p47 = scmp.eq.s32.totalorder %s13, 0
    %p48 = por %p46, %p47
    %p49 = scmp.ne.s32.totalorder %s35, %s36
    %p50 = scmp.eq.s32.totalorder %s14, 2
    %p51 = por %p49, %p50
    %p53 = scmp.ne.s32.totalorder %s36, %s52
    %p54 = scmp.eq.s32.totalorder %s14, 0
    %p55 = por %p53, %p54
    %s57 = sadd.s32 %s56, 1
    %p60 = scmp.eq.s32.totalorder %s8, 2
    %p61 = scmp.ne.s32.totalorder %s56, %s58
    %p62 = scmp.eq.s32.totalorder %s8, 0
    %p63 = por %p61, %p62
    %p64 = scmp.ne.s32.totalorder %s56, %s58
    %p65 = scmp.eq.s32.totalorder %s13, 2
    %p66 = por %p64, %p65
    %p67 = scmp.ne.s32.totalorder %s58, %s59
    %p68 = scmp.eq.s32.totalorder %s13, 0
    %p69 = por %p67, %p68
    %p70 = scmp.ne.s32.totalorder %s58, %s59
    %p71 = scmp.eq.s32.totalorder %s14, 2
    %p72 = por %p70, %p71
    %p74 = scmp.ne.s32.totalorder %s59, %s73
    %p75 = scmp.eq.s32.totalorder %s14, 0
    %p76 = por %p74, %p75
    %s77 = ssub.s32 %s15, %s27
    %p78 = scmp.eq.s32.totalorder %s77, 0
    %s80 = sadd.s32 %s79, 1
    %s81 = scalar_select %p78, %s79, %s80
    %p84 = pneg %p78
    %p85 = scmp.eq.s32.totalorder %s8, 2
    %p86 = por %p84, %p85
    %p87 = scmp.ne.s32.totalorder %s79, %s82
    %p88 = scmp.eq.s32.totalorder %s8, 0
    %p89 = por %p87, %p88
    %p90 = scmp.ne.s32.totalorder %s79, %s82
    %p91 = scmp.eq.s32.totalorder %s13, 2
    %p92 = por %p90, %p91
    %p93 = scmp.ne.s32.totalorder %s82, %s83
    %p94 = scmp.eq.s32.totalorder %s13, 0
    %p95 = por %p93, %p94
    %p96 = scmp.ne.s32.totalorder %s82, %s83
    %p97 = scmp.eq.s32.totalorder %s14, 2
    %p98 = por %p96, %p97
    %p100 = scmp.ne.s32.totalorder %s83, %s99
    %p101 = scmp.eq.s32.totalorder %s14, 0
    %p102 = por %p100, %p101
    %p103 = scmp.le.s32.totalorder 1, %s8
    %p104 = scmp.lt.s32.totalorder %s8, 4
    %p105 = pnand %p103, %p104
    %p106 = pneg %p105
    // Predicated region
    $region9: #{lstm_forward.1} parent=5 // pred_check
      _
    $region10: #{lstm_forward.1} parent=5 // pred_check_branch
      %108 = sbr.rel (%p105) target = $region12
    $region11: #{lstm_forward.1} parent=5 // pred_region
      %s109 = ssub.s32 %s8, 1
      // Predicated region
      $region13: #{lstm_forward.1} parent=11 // pred_check
        %p110 = pneg %p69
      $region14: #{lstm_forward.1} parent=11 // pred_check_branch
        %112 = sbr.rel (%p110) target = $region16
      $region15: #{lstm_forward.1} parent=11 // pred_region
        _
      $region16: #{lstm_forward.1} parent=11 // pred_fallthru
        _
    $region12: #{lstm_forward.1} parent=5 // pred_fallthru
      _
    %p113 = scmp.lt.s32.totalorder %s8, 3
    // Predicated region
    $region17: #{lstm_forward.1} parent=5 // pred_check
      %p114 = pneg %p113
    $region18: #{lstm_forward.1} parent=5 // pred_check_branch
      %116 = sbr.rel (%p114) target = $region20
    $region19: #{lstm_forward.1} parent=5 // pred_region
      // Predicated region
      $region21: #{lstm_forward.1} parent=19 // pred_check
        %p117 = pneg %p42
      $region22: #{lstm_forward.1} parent=19 // pred_check_branch
        %119 = sbr.rel (%p117) target = $region24
      $region23: #{lstm_forward.1} parent=19 // pred_region
        %s120 = smul.u32 3, %s16
        %p121 = scmp.lt.s32.totalorder %s120, 8
        %s122 = scalar_select %p121, %s120, 8
        %p123 = scmp.lt.s32.totalorder %s15, 0
        %s124 = scalar_select %p123, %s15, 0
        %s125 = smul.addr %s124, 4
        %s126 = smul.addr %s122, 4
        %s127 = sadd.s32 %s125, %s126
        %s128 = smul.addr %s127, 8
        %s129 = scalar_lea.vmem %s0, %s128
        %s130 = smul.u32 3, %s16
      $region24: #{lstm_forward.1} parent=19 // pred_fallthru
        _
    $region20: #{lstm_forward.1} parent=5 // pred_fallthru
      _
    %p131 = scmp.le.s32.totalorder 1, %s8
    %p132 = scmp.lt.s32.totalorder %s8, 4
    %p133 = pnand %p131, %p132
    %p134 = pneg %p133
    // Predicated region
    $region25: #{lstm_forward.1} parent=5 // pred_check
      _
    $region26: #{lstm_forward.1} parent=5 // pred_check_branch
      %136 = sbr.rel (%p133) target = $region28
    $region27: #{lstm_forward.1} parent=5 // pred_region
      %s137 = ssub.s32 %s8, 1
      %s138 = smul.u32 3, %s18
      %p139 = scmp.lt.s32.totalorder %s138, 8
      %s140 = scalar_select %p139, %s138, 8
      %p141 = scmp.lt.s32.totalorder %s17, 0
      %s142 = scalar_select %p141, %s17, 0
      %s143 = smul.addr %s142, 4
      %s144 = smul.addr %s140, 4
      %s145 = sadd.s32 %s143, %s144
      %s146 = smul.addr %s145, 8
      %s147 = scalar_lea.vmem %s0, %s146
      %p148 = pneg %p48
      %p149 = pneg %p45
      %p150 = pneg %p69
      %p151 = pneg %p66
      %p152 = pneg %p95
      %p153 = pneg %p92
      %p154 = scmp.lt.s32.totalorder %s17, 0
      %s155 = scalar_select %p154, %s17, 0
      %s156 = smul.addr %s155, 8
      %s157 = scalar_lea.vmem %s2, %s156
      %s158 = smul.u32 3, %s18
      %p159 = scmp.lt.s32.totalorder %s158, 8
      %s160 = scalar_select %p159, %s158, 8
      %p161 = scmp.lt.s32.totalorder %s17, 0
      %s162 = scalar_select %p161, %s17, 0
      %s163 = smul.addr %s162, 4
      %s164 = smul.addr %s160, 4
      %s165 = sadd.s32 %s163, %s164
      %s166 = smul.addr %s165, 8
      %s167 = scalar_lea.vmem %s0, %s166
      %s168 = smul.u32 3, %s18
      %p169 = scmp.lt.s32.totalorder %s17, 0
      %s170 = scalar_select %p169, %s17, 0
      %s171 = smul.addr %s170, 8
      %s172 = scalar_lea.vmem %s2, %s171
      %p173 = scmp.eq.s32.totalorder %s18, 0
      // Predicated region
      $region29: #{lstm_forward.1} parent=27 // pred_check
        %p174 = pneg %p173
      $region30: #{lstm_forward.1} parent=27 // pred_check_branch
        %176 = sbr.rel (%p174) target = $region32
      $region31: #{lstm_forward.1} parent=27 // pred_region
        %177 = vst [vmem:[#allocation2] sm:$0xff] 0.0
        %178 = vst [vmem:[#allocation3] sm:$0xff] 0.0
      $region32: #{lstm_forward.1} parent=27 // pred_fallthru
        _
      %v179 = vld [vmem:[%s1] sm:$0xff]
      %v180 = vld [vmem:[%s1 + $0x8] sm:$0xff]
      %v181 = vld [vmem:[%s1 + $0x10] sm:$0xff]
      %v182 = vld [vmem:[%s1 + $0x18] sm:$0xff]
      %v183 = vld [vmem:[%s1 + $0x20] sm:$0xff]
      %v184 = vld [vmem:[%s1 + $0x28] sm:$0xff]
      %v185 = vld [vmem:[%s1 + $0x30] sm:$0xff]
      %v186 = vld [vmem:[%s1 + $0x38] sm:$0xff]
      %v187 = vld [vmem:[%s1 + $0x40] sm:$0xff]
      %v188 = vld [vmem:[%s1 + $0x48] sm:$0xff]
      %v189 = vld [vmem:[%s1 + $0x50] sm:$0xff]
      %v190 = vld [vmem:[%s1 + $0x58] sm:$0xff]
      %v191 = vld [vmem:[%s1 + $0x60] sm:$0xff]
      %v192 = vld [vmem:[%s1 + $0x68] sm:$0xff]
      %v193 = vld [vmem:[%s1 + $0x70] sm:$0xff]
      %v194 = vld [vmem:[%s1 + $0x78] sm:$0xff]
      %v195 = vld [vmem:[%s1 + $0x80] sm:$0xff]
      %v196 = vld [vmem:[%s1 + $0x88] sm:$0xff]
      %v197 = vld [vmem:[%s1 + $0x90] sm:$0xff]
      %v198 = vld [vmem:[%s1 + $0x98] sm:$0xff]
      %v199 = vld [vmem:[%s1 + $0xa0] sm:$0xff]
      %v200 = vld [vmem:[%s1 + $0xa8] sm:$0xff]
      %v201 = vld [vmem:[%s1 + $0xb0] sm:$0xff]
      %v202 = vld [vmem:[%s1 + $0xb8] sm:$0xff]
      %v203 = vld [vmem:[%s1 + $0xc0] sm:$0xff]
      %v204 = vld [vmem:[%s1 + $0xc8] sm:$0xff]
      %v205 = vld [vmem:[%s1 + $0xd0] sm:$0xff]
      %v206 = vld [vmem:[%s1 + $0xd8] sm:$0xff]
      %v207 = vld [vmem:[%s1 + $0xe0] sm:$0xff]
      %v208 = vld [vmem:[%s1 + $0xe8] sm:$0xff]
      %v209 = vld [vmem:[%s1 + $0xf0] sm:$0xff]
      %v210 = vld [vmem:[%s1 + $0xf8] sm:$0xff]
      %v211 = vld [vmem:[%s1 + $0x100] sm:$0xff]
      %v212 = vld [vmem:[%s1 + $0x108] sm:$0xff]
      %v213 = vld [vmem:[%s1 + $0x110] sm:$0xff]
      %v214 = vld [vmem:[%s1 + $0x118] sm:$0xff]
      %v215 = vld [vmem:[%s1 + $0x120] sm:$0xff]
      %v216 = vld [vmem:[%s1 + $0x128] sm:$0xff]
      %v217 = vld [vmem:[%s1 + $0x130] sm:$0xff]
      %v218 = vld [vmem:[%s1 + $0x138] sm:$0xff]
      %v219 = vld [vmem:[%s1 + $0x140] sm:$0xff]
      %v220 = vld [vmem:[%s1 + $0x148] sm:$0xff]
      %v221 = vld [vmem:[%s1 + $0x150] sm:$0xff]
      %v222 = vld [vmem:[%s1 + $0x158] sm:$0xff]
      %v223 = vld [vmem:[%s1 + $0x160] sm:$0xff]
      %v224 = vld [vmem:[%s1 + $0x168] sm:$0xff]
      %v225 = vld [vmem:[%s1 + $0x170] sm:$0xff]
      %v226 = vld [vmem:[%s1 + $0x178] sm:$0xff]
      %v227 = vld [vmem:[%s1 + $0x180] sm:$0xff]
      %v228 = vld [vmem:[%s1 + $0x188] sm:$0xff]
      %v229 = vld [vmem:[%s1 + $0x190] sm:$0xff]
      %v230 = vld [vmem:[%s1 + $0x198] sm:$0xff]
      %v231 = vld [vmem:[%s1 + $0x1a0] sm:$0xff]
      %v232 = vld [vmem:[%s1 + $0x1a8] sm:$0xff]
      %v233 = vld [vmem:[%s1 + $0x1b0] sm:$0xff]
      %v234 = vld [vmem:[%s1 + $0x1b8] sm:$0xff]
      %v235 = vld [vmem:[%s1 + $0x1c0] sm:$0xff]
      %v236 = vld [vmem:[%s1 + $0x1c8] sm:$0xff]
      %v237 = vld [vmem:[%s1 + $0x1d0] sm:$0xff]
      %v238 = vld [vmem:[%s1 + $0x1d8] sm:$0xff]
      %v239 = vld [vmem:[%s1 + $0x1e0] sm:$0xff]
      %v240 = vld [vmem:[%s1 + $0x1e8] sm:$0xff]
      %v241 = vld [vmem:[%s1 + $0x1f0] sm:$0xff]
      %v242 = vld [vmem:[%s1 + $0x1f8] sm:$0xff]
      %p243 = scmp.lt.s32.totalorder %s18, 2
      // Predicated region
      $region33: #{lstm_forward.1} parent=27 // pred_check
        %p244 = pneg %p243
      $region34: #{lstm_forward.1} parent=27 // pred_check_branch
        %246 = sbr.rel (%p244) target = $region36
      $region35: #{lstm_forward.1} parent=27 // pred_region
        %v247 = vld [vmem:[#allocation2] sm:$0xff]
        %v248 = vld [vmem:[#allocation3] sm:$0xff]
        %v249 = vld [vmem:[%s167] sm:$0xff]
        %v250 = vld [vmem:[%s167 + $0x8] sm:$0xff]
        %v251 = vld [vmem:[%s167 + $0x10] sm:$0xff]
        %v252 = vld [vmem:[%s167 + $0x18] sm:$0xff]
        %253 = vmatprep.subr.mxu0 %v180
        %254 = vmatpush1.msra.mxu0 %v179
        %255 = vmatprep.subr.mxu0 %v184
        %256 = vmatpush1.msra.mxu0 %v183
        %257 = vmatprep.subr.mxu0 %v188
        %258 = vmatpush1.msra.mxu0 %v187
        %259 = vmatprep.subr.mxu0 %v192
        %260 = vmatpush1.msra.mxu0 %v191
        %261 = vmatprep.subr.mxu0 %v196
        %262 = vmatpush1.msra.mxu0 %v195
        %263 = vmatprep.subr.mxu0 %v200
        %264 = vmatpush1.msra.mxu0 %v199
        %265 = vmatprep.subr.mxu0 %v204
        %266 = vmatpush1.msra.mxu0 %v203
        %267 = vmatprep.subr.mxu0 %v208
        %268 = vmatpush1.msra.mxu0 %v207
        %269 = vmatprep.subr.mxu0 %v212
        %270 = vmatpush1.msra.mxu0 %v211
        %271 = vmatprep.subr.mxu0 %v216
        %272 = vmatpush1.msra.mxu0 %v215
        %273 = vmatprep.subr.mxu0 %v220
        %274 = vmatpush1.msra.mxu0 %v219
        %275 = vmatprep.subr.mxu0 %v224
        %276 = vmatpush1.msra.mxu0 %v223
        %277 = vmatprep.subr.mxu0 %v228
        %278 = vmatpush1.msra.mxu0 %v227
        %279 = vmatprep.subr.mxu0 %v232
        %280 = vmatpush1.msra.mxu0 %v231
        %281 = vmatprep.subr.mxu0 %v236
        %282 = vmatpush1.msra.mxu0 %v235
        %283 = vmatprep.subr.mxu0 %v240
        %284 = vmatpush1.msra.mxu0 %v239
        %285 = vmatprep.subr.mxu0 0.0
        %286 = vmatpush1.msra.mxu0 0.0
        %287 = vmatprep.subr.mxu0 0.0
        %288 = vmatpush1.msra.mxu0 0.0
        %289 = vmatprep.subr.mxu0 0.0
        %290 = vmatpush1.msra.mxu0 0.0
        %291 = vmatprep.subr.mxu0 0.0
        %292 = vmatpush1.msra.mxu0 0.0
        %293 = vmatprep.subr.mxu0 0.0
        %294 = vmatpush1.msra.mxu0 0.0
        %295 = vmatprep.subr.mxu0 0.0
        %296 = vmatpush1.msra.mxu0 0.0
        %297 = vmatprep.subr.mxu0 0.0
        %298 = vmatpush1.msra.mxu0 0.0
        %299 = vmatprep.subr.mxu0 0.0
        %300 = vmatpush1.msra.mxu0 0.0
        %301 = vmatprep.subr.mxu0 0.0
        %302 = vmatpush1.msra.mxu0 0.0
        %303 = vmatprep.subr.mxu0 0.0
        %304 = vmatpush1.msra.mxu0 0.0
        %305 = vmatprep.subr.mxu0 0.0
        %306 = vmatpush1.msra.mxu0 0.0
        %307 = vmatprep.subr.mxu0 0.0
        %308 = vmatpush1.msra.mxu0 0.0
        %309 = vmatprep.subr.mxu0 0.0
        %310 = vmatpush1.msra.mxu0 0.0
        %311 = vmatprep.subr.mxu0 0.0
        %312 = vmatpush1.msra.mxu0 0.0
        %313 = vmatprep.subr.mxu0 0.0
        %314 = vmatpush1.msra.mxu0 0.0
        %315 = vmatprep.subr.mxu0 0.0
        %316 = vmatpush1.msra.mxu0 0.0
        %317 = vmatprep.mubr.f32.mxu0 0.0
        %318 = vmatmul.mubr.f32.gmra.mrb[0].mxu0 %v247
        %v319 = vpop.f32.mrb[0].mxu0
        %v320 = vadd.f32 0.0, %v319
        %v321 = vpop.f32.mrb[0].mxu0
        %v322 = vadd.f32 0.0, %v321
        %323 = vdwg.mxu0
        %324 = vmatprep.subr.mxu0 %v182
        %325 = vmatpush1.msra.mxu0 %v181
        %326 = vmatprep.subr.mxu0 %v186
        %327 = vmatpush1.msra.mxu0 %v185
        %328 = vmatprep.subr.mxu0 %v190
        %329 = vmatpush1.msra.mxu0 %v189
        %330 = vmatprep.subr.mxu0 %v194
        %331 = vmatpush1.msra.mxu0 %v193
        %332 = vmatprep.subr.mxu0 %v198
        %333 = vmatpush1.msra.mxu0 %v197
        %334 = vmatprep.subr.mxu0 %v202
        %335 = vmatpush1.msra.mxu0 %v201
        %336 = vmatprep.subr.mxu0 %v206
        %337 = vmatpush1.msra.mxu0 %v205
        %338 = vmatprep.subr.mxu0 %v210
        %339 = vmatpush1.msra.mxu0 %v209
        %340 = vmatprep.subr.mxu0 %v214
        %341 = vmatpush1.msra.mxu0 %v213
        %342 = vmatprep.subr.mxu0 %v218
        %343 = vmatpush1.msra.mxu0 %v217
        %344 = vmatprep.subr.mxu0 %v222
        %345 = vmatpush1.msra.mxu0 %v221
        %346 = vmatprep.subr.mxu0 %v226
        %347 = vmatpush1.msra.mxu0 %v225
        %348 = vmatprep.subr.mxu0 %v230
        %349 = vmatpush1.msra.mxu0 %v229
        %350 = vmatprep.subr.mxu0 %v234
        %351 = vmatpush1.msra.mxu0 %v233
        %352 = vmatprep.subr.mxu0 %v238
        %353 = vmatpush1.msra.mxu0 %v237
        %354 = vmatprep.subr.mxu0 %v242
        %355 = vmatpush1.msra.mxu0 %v241
        %356 = vmatprep.subr.mxu0 0.0
        %357 = vmatpush1.msra.mxu0 0.0
        %358 = vmatprep.subr.mxu0 0.0
        %359 = vmatpush1.msra.mxu0 0.0
        %360 = vmatprep.subr.mxu0 0.0
        %361 = vmatpush1.msra.mxu0 0.0
        %362 = vmatprep.subr.mxu0 0.0
        %363 = vmatpush1.msra.mxu0 0.0
        %364 = vmatprep.subr.mxu0 0.0
        %365 = vmatpush1.msra.mxu0 0.0
        %366 = vmatprep.subr.mxu0 0.0
        %367 = vmatpush1.msra.mxu0 0.0
        %368 = vmatprep.subr.mxu0 0.0
        %369 = vmatpush1.msra.mxu0 0.0
        %370 = vmatprep.subr.mxu0 0.0
        %371 = vmatpush1.msra.mxu0 0.0
        %372 = vmatprep.subr.mxu0 0.0
        %373 = vmatpush1.msra.mxu0 0.0
        %374 = vmatprep.subr.mxu0 0.0
        %375 = vmatpush1.msra.mxu0 0.0
        %376 = vmatprep.subr.mxu0 0.0
        %377 = vmatpush1.msra.mxu0 0.0
        %378 = vmatprep.subr.mxu0 0.0
        %379 = vmatpush1.msra.mxu0 0.0
        %380 = vmatprep.subr.mxu0 0.0
        %381 = vmatpush1.msra.mxu0 0.0
        %382 = vmatprep.subr.mxu0 0.0
        %383 = vmatpush1.msra.mxu0 0.0
        %384 = vmatprep.subr.mxu0 0.0
        %385 = vmatpush1.msra.mxu0 0.0
        %386 = vmatprep.subr.mxu0 0.0
        %387 = vmatpush1.msra.mxu0 0.0
        %388 = vmatprep.mubr.f32.mxu0 0.0
        %389 = vmatmul.mubr.f32.gmra.mrb[0].mxu0 %v247
        %v390 = vpop.f32.mrb[0].mxu0
        %v391 = vadd.f32 0.0, %v390
        %v392 = vpop.f32.mrb[0].mxu0
        %v393 = vadd.f32 0.0, %v392
        %394 = vdwg.mxu0
        %v395 = vadd.f32 %v249, %v320
        %v396 = vadd.f32 %v250, %v322
        %v397 = vadd.f32 %v251, %v391
        %v398 = vadd.f32 %v252, %v393
        %v399 = vmul.f32 %v395, 0.5
        %v400 = vtanh.pop %v399
        %v401 = vmul.f32 %v400, 0.5
        %v402 = vadd.f32 %v401, 0.5
        %v403 = vmul.f32 %v396, 0.5
        %v404 = vtanh.pop %v403
        %v405 = vmul.f32 %v404, 0.5
        %v406 = vadd.f32 %v405, 0.5
        %v407 = vtanh.pop %v397
        %v408 = vmul.f32 %v398, 0.5
        %v409 = vtanh.pop %v408
        %v410 = vmul.f32 %v409, 0.5
        %v411 = vadd.f32 %v410, 0.5
        %v412 = vmul.f32 %v406, %v248
        %v413 = vmul.f32 %v402, %v407
        %v414 = vadd.f32 %v412, %v413
        %v415 = vtanh.pop %v414
        %v416 = vmul.f32 %v411, %v415
        %s417 = scalar_lea.vmem %s167, 32
        %v418 = vld [vmem:[%s417] sm:$0xff]
        %v419 = vld [vmem:[%s417 + $0x8] sm:$0xff]
        %v420 = vld [vmem:[%s417 + $0x10] sm:$0xff]
        %v421 = vld [vmem:[%s417 + $0x18] sm:$0xff]
        %422 = vmatprep.subr.mxu0 %v180
        %423 = vmatpush1.msra.mxu0 %v179
        %424 = vmatprep.subr.mxu0 %v184
        %425 = vmatpush1.msra.mxu0 %v183
        %426 = vmatprep.subr.mxu0 %v188
        %427 = vmatpush1.msra.mxu0 %v187
        %428 = vmatprep.subr.mxu0 %v192
        %429 = vmatpush1.msra.mxu0 %v191
        %430 = vmatprep.subr.mxu0 %v196
        %431 = vmatpush1.msra.mxu0 %v195
        %432 = vmatprep.subr.mxu0 %v200
        %433 = vmatpush1.msra.mxu0 %v199
        %434 = vmatprep.subr.mxu0 %v204
        %435 = vmatpush1.msra.mxu0 %v203
        %436 = vmatprep.subr.mxu0 %v208
        %437 = vmatpush1.msra.mxu0 %v207
        %438 = vmatprep.subr.mxu0 %v212
        %439 = vmatpush1.msra.mxu0 %v211
        %440 = vmatprep.subr.mxu0 %v216
        %441 = vmatpush1.msra.mxu0 %v215
        %442 = vmatprep.subr.mxu0 %v220
        %443 = vmatpush1.msra.mxu0 %v219
        %444 = vmatprep.subr.mxu0 %v224
        %445 = vmatpush1.msra.mxu0 %v223
        %446 = vmatprep.subr.mxu0 %v228
        %447 = vmatpush1.msra.mxu0 %v227
        %448 = vmatprep.subr.mxu0 %v232
        %449 = vmatpush1.msra.mxu0 %v231
        %450 = vmatprep.subr.mxu0 %v236
        %451 = vmatpush1.msra.mxu0 %v235
        %452 = vmatprep.subr.mxu0 %v240
        %453 = vmatpush1.msra.mxu0 %v239
        %454 = vmatprep.subr.mxu0 0.0
        %455 = vmatpush1.msra.mxu0 0.0
        %456 = vmatprep.subr.mxu0 0.0
        %457 = vmatpush1.msra.mxu0 0.0
        %458 = vmatprep.subr.mxu0 0.0
        %459 = vmatpush1.msra.mxu0 0.0
        %460 = vmatprep.subr.mxu0 0.0
        %461 = vmatpush1.msra.mxu0 0.0
        %462 = vmatprep.subr.mxu0 0.0
        %463 = vmatpush1.msra.mxu0 0.0
        %464 = vmatprep.subr.mxu0 0.0
        %465 = vmatpush1.msra.mxu0 0.0
        %466 = vmatprep.subr.mxu0 0.0
        %467 = vmatpush1.msra.mxu0 0.0
        %468 = vmatprep.subr.mxu0 0.0
        %469 = vmatpush1.msra.mxu0 0.0
        %470 = vmatprep.subr.mxu0 0.0
        %471 = vmatpush1.msra.mxu0 0.0
        %472 = vmatprep.subr.mxu0 0.0
        %473 = vmatpush1.msra.mxu0 0.0
        %474 = vmatprep.subr.mxu0 0.0
        %475 = vmatpush1.msra.mxu0 0.0
        %476 = vmatprep.subr.mxu0 0.0
        %477 = vmatpush1.msra.mxu0 0.0
        %478 = vmatprep.subr.mxu0 0.0
        %479 = vmatpush1.msra.mxu0 0.0
        %480 = vmatprep.subr.mxu0 0.0
        %481 = vmatpush1.msra.mxu0 0.0
        %482 = vmatprep.subr.mxu0 0.0
        %483 = vmatpush1.msra.mxu0 0.0
        %484 = vmatprep.subr.mxu0 0.0
        %485 = vmatpush1.msra.mxu0 0.0
        %486 = vmatprep.mubr.f32.mxu0 0.0
        %487 = vmatmul.mubr.f32.gmra.mrb[0].mxu0 %v416
        %v488 = vpop.f32.mrb[0].mxu0
        %v489 = vadd.f32 0.0, %v488
        %v490 = vpop.f32.mrb[0].mxu0
        %v491 = vadd.f32 0.0, %v490
        %492 = vdwg.mxu0
        %493 = vmatprep.subr.mxu0 %v182
        %494 = vmatpush1.msra.mxu0 %v181
        %495 = vmatprep.subr.mxu0 %v186
        %496 = vmatpush1.msra.mxu0 %v185
        %497 = vmatprep.subr.mxu0 %v190
        %498 = vmatpush1.msra.mxu0 %v189
        %499 = vmatprep.subr.mxu0 %v194
        %500 = vmatpush1.msra.mxu0 %v193
        %501 = vmatprep.subr.mxu0 %v198
        %502 = vmatpush1.msra.mxu0 %v197
        %503 = vmatprep.subr.mxu0 %v202
        %504 = vmatpush1.msra.mxu0 %v201
        %505 = vmatprep.subr.mxu0 %v206
        %506 = vmatpush1.msra.mxu0 %v205
        %507 = vmatprep.subr.mxu0 %v210
        %508 = vmatpush1.msra.mxu0 %v209
        %509 = vmatprep.subr.mxu0 %v214
        %510 = vmatpush1.msra.mxu0 %v213
        %511 = vmatprep.subr.mxu0 %v218
        %512 = vmatpush1.msra.mxu0 %v217
        %513 = vmatprep.subr.mxu0 %v222
        %514 = vmatpush1.msra.mxu0 %v221
        %515 = vmatprep.subr.mxu0 %v226
        %516 = vmatpush1.msra.mxu0 %v225
        %517 = vmatprep.subr.mxu0 %v230
        %518 = vmatpush1.msra.mxu0 %v229
        %519 = vmatprep.subr.mxu0 %v234
        %520 = vmatpush1.msra.mxu0 %v233
        %521 = vmatprep.subr.mxu0 %v238
        %522 = vmatpush1.msra.mxu0 %v237
        %523 = vmatprep.subr.mxu0 %v242
        %524 = vmatpush1.msra.mxu0 %v241
        %525 = vmatprep.subr.mxu0 0.0
        %526 = vmatpush1.msra.mxu0 0.0
        %527 = vmatprep.subr.mxu0 0.0
        %528 = vmatpush1.msra.mxu0 0.0
        %529 = vmatprep.subr.mxu0 0.0
        %530 = vmatpush1.msra.mxu0 0.0
        %531 = vmatprep.subr.mxu0 0.0
        %532 = vmatpush1.msra.mxu0 0.0
        %533 = vmatprep.subr.mxu0 0.0
        %534 = vmatpush1.msra.mxu0 0.0
        %535 = vmatprep.subr.mxu0 0.0
        %536 = vmatpush1.msra.mxu0 0.0
        %537 = vmatprep.subr.mxu0 0.0
        %538 = vmatpush1.msra.mxu0 0.0
        %539 = vmatprep.subr.mxu0 0.0
        %540 = vmatpush1.msra.mxu0 0.0
        %541 = vmatprep.subr.mxu0 0.0
        %542 = vmatpush1.msra.mxu0 0.0
        %543 = vmatprep.subr.mxu0 0.0
        %544 = vmatpush1.msra.mxu0 0.0
        %545 = vmatprep.subr.mxu0 0.0
        %546 = vmatpush1.msra.mxu0 0.0
        %547 = vmatprep.subr.mxu0 0.0
        %548 = vmatpush1.msra.mxu0 0.0
        %549 = vmatprep.subr.mxu0 0.0
        %550 = vmatpush1.msra.mxu0 0.0
        %551 = vmatprep.subr.mxu0 0.0
        %552 = vmatpush1.msra.mxu0 0.0
        %553 = vmatprep.subr.mxu0 0.0
        %554 = vmatpush1.msra.mxu0 0.0
        %555 = vmatprep.subr.mxu0 0.0
        %556 = vmatpush1.msra.mxu0 0.0
        %557 = vmatprep.mubr.f32.mxu0 0.0
        %558 = vmatmul.mubr.f32.gmra.mrb[0].mxu0 %v416
        %v559 = vpop.f32.mrb[0].mxu0
        %v560 = vadd.f32 0.0, %v559
        %v561 = vpop.f32.mrb[0].mxu0
        %v562 = vadd.f32 0.0, %v561
        %563 = vdwg.mxu0
        %v564 = vadd.f32 %v418, %v489
        %v565 = vadd.f32 %v419, %v491
        %v566 = vadd.f32 %v420, %v560
        %v567 = vadd.f32 %v421, %v562
        %v568 = vmul.f32 %v564, 0.5
        %v569 = vtanh.pop %v568
        %v570 = vmul.f32 %v569, 0.5
        %v571 = vadd.f32 %v570, 0.5
        %v572 = vmul.f32 %v565, 0.5
        %v573 = vtanh.pop %v572
        %v574 = vmul.f32 %v573, 0.5
        %v575 = vadd.f32 %v574, 0.5
        %v576 = vtanh.pop %v566
        %v577 = vmul.f32 %v567, 0.5
        %v578 = vtanh.pop %v577
        %v579 = vmul.f32 %v578, 0.5
        %v580 = vadd.f32 %v579, 0.5
        %v581 = vmul.f32 %v575, %v414
        %v582 = vmul.f32 %v571, %v576
        %v583 = vadd.f32 %v581, %v582
        %v584 = vtanh.pop %v583
        %v585 = vmul.f32 %v580, %v584
        %s586 = scalar_lea.vmem %s167, 64
        %v587 = vld [vmem:[%s586] sm:$0xff]
        %v588 = vld [vmem:[%s586 + $0x8] sm:$0xff]
        %v589 = vld [vmem:[%s586 + $0x10] sm:$0xff]
        %v590 = vld [vmem:[%s586 + $0x18] sm:$0xff]
        %591 = vmatprep.subr.mxu0 %v180
        %592 = vmatpush1.msra.mxu0 %v179
        %593 = vmatprep.subr.mxu0 %v184
        %594 = vmatpush1.msra.mxu0 %v183
        %595 = vmatprep.subr.mxu0 %v188
        %596 = vmatpush1.msra.mxu0 %v187
        %597 = vmatprep.subr.mxu0 %v192
        %598 = vmatpush1.msra.mxu0 %v191
        %599 = vmatprep.subr.mxu0 %v196
        %600 = vmatpush1.msra.mxu0 %v195
        %601 = vmatprep.subr.mxu0 %v200
        %602 = vmatpush1.msra.mxu0 %v199
        %603 = vmatprep.subr.mxu0 %v204
        %604 = vmatpush1.msra.mxu0 %v203
        %605 = vmatprep.subr.mxu0 %v208
        %606 = vmatpush1.msra.mxu0 %v207
        %607 = vmatprep.subr.mxu0 %v212
        %608 = vmatpush1.msra.mxu0 %v211
        %609 = vmatprep.subr.mxu0 %v216
        %610 = vmatpush1.msra.mxu0 %v215
        %611 = vmatprep.subr.mxu0 %v220
        %612 = vmatpush1.msra.mxu0 %v219
        %613 = vmatprep.subr.mxu0 %v224
        %614 = vmatpush1.msra.mxu0 %v223
        %615 = vmatprep.subr.mxu0 %v228
        %616 = vmatpush1.msra.mxu0 %v227
        %617 = vmatprep.subr.mxu0 %v232
        %618 = vmatpush1.msra.mxu0 %v231
        %619 = vmatprep.subr.mxu0 %v236
        %620 = vmatpush1.msra.mxu0 %v235
        %621 = vmatprep.subr.mxu0 %v240
        %622 = vmatpush1.msra.mxu0 %v239
        %623 = vmatprep.subr.mxu0 0.0
        %624 = vmatpush1.msra.mxu0 0.0
        %625 = vmatprep.subr.mxu0 0.0
        %626 = vmatpush1.msra.mxu0 0.0
        %627 = vmatprep.subr.mxu0 0.0
        %628 = vmatpush1.msra.mxu0 0.0
        %629 = vmatprep.subr.mxu0 0.0
        %630 = vmatpush1.msra.mxu0 0.0
        %631 = vmatprep.subr.mxu0 0.0
        %632 = vmatpush1.msra.mxu0 0.0
        %633 = vmatprep.subr.mxu0 0.0
        %634 = vmatpush1.msra.mxu0 0.0
        %635 = vmatprep.subr.mxu0 0.0
        %636 = vmatpush1.msra.mxu0 0.0
        %637 = vmatprep.subr.mxu0 0.0
        %638 = vmatpush1.msra.mxu0 0.0
        %639 = vmatprep.subr.mxu0 0.0
        %640 = vmatpush1.msra.mxu0 0.0
        %641 = vmatprep.subr.mxu0 0.0
        %642 = vmatpush1.msra.mxu0 0.0
        %643 = vmatprep.subr.mxu0 0.0
        %644 = vmatpush1.msra.mxu0 0.0
        %645 = vmatprep.subr.mxu0 0.0
        %646 = vmatpush1.msra.mxu0 0.0
        %647 = vmatprep.subr.mxu0 0.0
        %648 = vmatpush1.msra.mxu0 0.0
        %649 = vmatprep.subr.mxu0 0.0
        %650 = vmatpush1.msra.mxu0 0.0
        %651 = vmatprep.subr.mxu0 0.0
        %652 = vmatpush1.msra.mxu0 0.0
        %653 = vmatprep.subr.mxu0 0.0
        %654 = vmatpush1.msra.mxu0 0.0
        %655 = vmatprep.mubr.f32.mxu0 0.0
        %656 = vmatmul.mubr.f32.gmra.mrb[0].mxu0 %v585
        %v657 = vpop.f32.mrb[0].mxu0
        %v658 = vadd.f32 0.0, %v657
        %v659 = vpop.f32.mrb[0].mxu0
        %v660 = vadd.f32 0.0, %v659
        %661 = vdwg.mxu0
        %662 = vmatprep.subr.mxu0 %v182
        %663 = vmatpush1.msra.mxu0 %v181
        %664 = vmatprep.subr.mxu0 %v186
        %665 = vmatpush1.msra.mxu0 %v185
        %666 = vmatprep.subr.mxu0 %v190
        %667 = vmatpush1.msra.mxu0 %v189
        %668 = vmatprep.subr.mxu0 %v194
        %669 = vmatpush1.msra.mxu0 %v193
        %670 = vmatprep.subr.mxu0 %v198
        %671 = vmatpush1.msra.mxu0 %v197
        %672 = vmatprep.subr.mxu0 %v202
        %673 = vmatpush1.msra.mxu0 %v201
        %674 = vmatprep.subr.mxu0 %v206
        %675 = vmatpush1.msra.mxu0 %v205
        %676 = vmatprep.subr.mxu0 %v210
        %677 = vmatpush1.msra.mxu0 %v209
        %678 = vmatprep.subr.mxu0 %v214
        %679 = vmatpush1.msra.mxu0 %v213
        %680 = vmatprep.subr.mxu0 %v218
        %681 = vmatpush1.msra.mxu0 %v217
        %682 = vmatprep.subr.mxu0 %v222
        %683 = vmatpush1.msra.mxu0 %v221
        %684 = vmatprep.subr.mxu0 %v226
        %685 = vmatpush1.msra.mxu0 %v225
        %686 = vmatprep.subr.mxu0 %v230
        %687 = vmatpush1.msra.mxu0 %v229
        %688 = vmatprep.subr.mxu0 %v234
        %689 = vmatpush1.msra.mxu0 %v233
        %690 = vmatprep.subr.mxu0 %v238
        %691 = vmatpush1.msra.mxu0 %v237
        %692 = vmatprep.subr.mxu0 %v242
        %693 = vmatpush1.msra.mxu0 %v241
        %694 = vmatprep.subr.mxu0 0.0
        %695 = vmatpush1.msra.mxu0 0.0
        %696 = vmatprep.subr.mxu0 0.0
        %697 = vmatpush1.msra.mxu0 0.0
        %698 = vmatprep.subr.mxu0 0.0
        %699 = vmatpush1.msra.mxu0 0.0
        %700 = vmatprep.subr.mxu0 0.0
        %701 = vmatpush1.msra.mxu0 0.0
        %702 = vmatprep.subr.mxu0 0.0
        %703 = vmatpush1.msra.mxu0 0.0
        %704 = vmatprep.subr.mxu0 0.0
        %705 = vmatpush1.msra.mxu0 0.0
        %706 = vmatprep.subr.mxu0 0.0
        %707 = vmatpush1.msra.mxu0 0.0
        %708 = vmatprep.subr.mxu0 0.0
        %709 = vmatpush1.msra.mxu0 0.0
        %710 = vmatprep.subr.mxu0 0.0
        %711 = vmatpush1.msra.mxu0 0.0
        %712 = vmatprep.subr.mxu0 0.0
        %713 = vmatpush1.msra.mxu0 0.0
        %714 = vmatprep.subr.mxu0 0.0
        %715 = vmatpush1.msra.mxu0 0.0
        %716 = vmatprep.subr.mxu0 0.0
        %717 = vmatpush1.msra.mxu0 0.0
        %718 = vmatprep.subr.mxu0 0.0
        %719 = vmatpush1.msra.mxu0 0.0
        %720 = vmatprep.subr.mxu0 0.0
        %721 = vmatpush1.msra.mxu0 0.0
        %722 = vmatprep.subr.mxu0 0.0
        %723 = vmatpush1.msra.mxu0 0.0
        %724 = vmatprep.subr.mxu0 0.0
        %725 = vmatpush1.msra.mxu0 0.0
        %726 = vmatprep.mubr.f32.mxu0 0.0
        %727 = vmatmul.mubr.f32.gmra.mrb[0].mxu0 %v585
        %v728 = vpop.f32.mrb[0].mxu0
        %v729 = vadd.f32 0.0, %v728
        %v730 = vpop.f32.mrb[0].mxu0
        %v731 = vadd.f32 0.0, %v730
        %732 = vdwg.mxu0
        %v733 = vadd.f32 %v587, %v658
        %v734 = vadd.f32 %v588, %v660
        %v735 = vadd.f32 %v589, %v729
        %v736 = vadd.f32 %v590, %v731
        %v737 = vmul.f32 %v733, 0.5
        %v738 = vtanh.pop %v737
        %v739 = vmul.f32 %v738, 0.5
        %v740 = vadd.f32 %v739, 0.5
        %v741 = vmul.f32 %v734, 0.5
        %v742 = vtanh.pop %v741
        %v743 = vmul.f32 %v742, 0.5
        %v744 = vadd.f32 %v743, 0.5
        %v745 = vtanh.pop %v735
        %v746 = vmul.f32 %v736, 0.5
        %v747 = vtanh.pop %v746
        %v748 = vmul.f32 %v747, 0.5
        %v749 = vadd.f32 %v748, 0.5
        %v750 = vmul.f32 %v744, %v583
        %v751 = vmul.f32 %v740, %v745
        %v752 = vadd.f32 %v750, %v751
        %v753 = vtanh.pop %v752
        %v754 = vmul.f32 %v749, %v753
        %755 = vst [vmem:[#allocation2] sm:$0xff] %v754
        %756 = vst [vmem:[#allocation3] sm:$0xff] %v752
      $region36: #{lstm_forward.1} parent=27 // pred_fallthru
        _
      %p757 = scmp.eq.s32.totalorder %s18, 2
      // Predicated region
      $region37: #{lstm_forward.1} parent=27 // pred_check
        %p758 = pneg %p757
      $region38: #{lstm_forward.1} parent=27 // pred_check_branch
        %760 = sbr.rel (%p758) target = $region40
      $region39: #{lstm_forward.1} parent=27 // pred_region
        %v761 = vld [vmem:[#allocation2] sm:$0xff]
        %v762 = vld [vmem:[#allocation3] sm:$0xff]
        %v763 = vld [vmem:[%s167] sm:$0xff]
        %v764 = vld [vmem:[%s167 + $0x8] sm:$0xff]
        %v765 = vld [vmem:[%s167 + $0x10] sm:$0xff]
        %v766 = vld [vmem:[%s167 + $0x18] sm:$0xff]
        %767 = vmatprep.subr.mxu0 %v180
        %768 = vmatpush1.msra.mxu0 %v179
        %769 = vmatprep.subr.mxu0 %v184
        %770 = vmatpush1.msra.mxu0 %v183
        %771 = vmatprep.subr.mxu0 %v188
        %772 = vmatpush1.msra.mxu0 %v187
        %773 = vmatprep.subr.mxu0 %v192
        %774 = vmatpush1.msra.mxu0 %v191
        %775 = vmatprep.subr.mxu0 %v196
        %776 = vmatpush1.msra.mxu0 %v195
        %777 = vmatprep.subr.mxu0 %v200
        %778 = vmatpush1.msra.mxu0 %v199
        %779 = vmatprep.subr.mxu0 %v204
        %780 = vmatpush1.msra.mxu0 %v203
        %781 = vmatprep.subr.mxu0 %v208
        %782 = vmatpush1.msra.mxu0 %v207
        %783 = vmatprep.subr.mxu0 %v212
        %784 = vmatpush1.msra.mxu0 %v211
        %785 = vmatprep.subr.mxu0 %v216
        %786 = vmatpush1.msra.mxu0 %v215
        %787 = vmatprep.subr.mxu0 %v220
        %788 = vmatpush1.msra.mxu0 %v219
        %789 = vmatprep.subr.mxu0 %v224
        %790 = vmatpush1.msra.mxu0 %v223
        %791 = vmatprep.subr.mxu0 %v228
        %792 = vmatpush1.msra.mxu0 %v227
        %793 = vmatprep.subr.mxu0 %v232
        %794 = vmatpush1.msra.mxu0 %v231
        %795 = vmatprep.subr.mxu0 %v236
        %796 = vmatpush1.msra.mxu0 %v235
        %797 = vmatprep.subr.mxu0 %v240
        %798 = vmatpush1.msra.mxu0 %v239
        %799 = vmatprep.subr.mxu0 0.0
        %800 = vmatpush1.msra.mxu0 0.0
        %801 = vmatprep.subr.mxu0 0.0
        %802 = vmatpush1.msra.mxu0 0.0
        %803 = vmatprep.subr.mxu0 0.0
        %804 = vmatpush1.msra.mxu0 0.0
        %805 = vmatprep.subr.mxu0 0.0
        %806 = vmatpush1.msra.mxu0 0.0
        %807 = vmatprep.subr.mxu0 0.0
        %808 = vmatpush1.msra.mxu0 0.0
        %809 = vmatprep.subr.mxu0 0.0
        %810 = vmatpush1.msra.mxu0 0.0
        %811 = vmatprep.subr.mxu0 0.0
        %812 = vmatpush1.msra.mxu0 0.0
        %813 = vmatprep.subr.mxu0 0.0
        %814 = vmatpush1.msra.mxu0 0.0
        %815 = vmatprep.subr.mxu0 0.0
        %816 = vmatpush1.msra.mxu0 0.0
        %817 = vmatprep.subr.mxu0 0.0
        %818 = vmatpush1.msra.mxu0 0.0
        %819 = vmatprep.subr.mxu0 0.0
        %820 = vmatpush1.msra.mxu0 0.0
        %821 = vmatprep.subr.mxu0 0.0
        %822 = vmatpush1.msra.mxu0 0.0
        %823 = vmatprep.subr.mxu0 0.0
        %824 = vmatpush1.msra.mxu0 0.0
        %825 = vmatprep.subr.mxu0 0.0
        %826 = vmatpush1.msra.mxu0 0.0
        %827 = vmatprep.subr.mxu0 0.0
        %828 = vmatpush1.msra.mxu0 0.0
        %829 = vmatprep.subr.mxu0 0.0
        %830 = vmatpush1.msra.mxu0 0.0
        %831 = vmatprep.mubr.f32.mxu0 0.0
        %832 = vmatmul.mubr.f32.gmra.mrb[0].mxu0 %v761
        %v833 = vpop.f32.mrb[0].mxu0
        %v834 = vadd.f32 0.0, %v833
        %v835 = vpop.f32.mrb[0].mxu0
        %v836 = vadd.f32 0.0, %v835
        %837 = vdwg.mxu0
        %838 = vmatprep.subr.mxu0 %v182
        %839 = vmatpush1.msra.mxu0 %v181
        %840 = vmatprep.subr.mxu0 %v186
        %841 = vmatpush1.msra.mxu0 %v185
        %842 = vmatprep.subr.mxu0 %v190
        %843 = vmatpush1.msra.mxu0 %v189
        %844 = vmatprep.subr.mxu0 %v194
        %845 = vmatpush1.msra.mxu0 %v193
        %846 = vmatprep.subr.mxu0 %v198
        %847 = vmatpush1.msra.mxu0 %v197
        %848 = vmatprep.subr.mxu0 %v202
        %849 = vmatpush1.msra.mxu0 %v201
        %850 = vmatprep.subr.mxu0 %v206
        %851 = vmatpush1.msra.mxu0 %v205
        %852 = vmatprep.subr.mxu0 %v210
        %853 = vmatpush1.msra.mxu0 %v209
        %854 = vmatprep.subr.mxu0 %v214
        %855 = vmatpush1.msra.mxu0 %v213
        %856 = vmatprep.subr.mxu0 %v218
        %857 = vmatpush1.msra.mxu0 %v217
        %858 = vmatprep.subr.mxu0 %v222
        %859 = vmatpush1.msra.mxu0 %v221
        %860 = vmatprep.subr.mxu0 %v226
        %861 = vmatpush1.msra.mxu0 %v225
        %862 = vmatprep.subr.mxu0 %v230
        %863 = vmatpush1.msra.mxu0 %v229
        %864 = vmatprep.subr.mxu0 %v234
        %865 = vmatpush1.msra.mxu0 %v233
        %866 = vmatprep.subr.mxu0 %v238
        %867 = vmatpush1.msra.mxu0 %v237
        %868 = vmatprep.subr.mxu0 %v242
        %869 = vmatpush1.msra.mxu0 %v241
        %870 = vmatprep.subr.mxu0 0.0
        %871 = vmatpush1.msra.mxu0 0.0
        %872 = vmatprep.subr.mxu0 0.0
        %873 = vmatpush1.msra.mxu0 0.0
        %874 = vmatprep.subr.mxu0 0.0
        %875 = vmatpush1.msra.mxu0 0.0
        %876 = vmatprep.subr.mxu0 0.0
        %877 = vmatpush1.msra.mxu0 0.0
        %878 = vmatprep.subr.mxu0 0.0
        %879 = vmatpush1.msra.mxu0 0.0
        %880 = vmatprep.subr.mxu0 0.0
        %881 = vmatpush1.msra.mxu0 0.0
        %882 = vmatprep.subr.mxu0 0.0
        %883 = vmatpush1.msra.mxu0 0.0
        %884 = vmatprep.subr.mxu0 0.0
        %885 = vmatpush1.msra.mxu0 0.0
        %886 = vmatprep.subr.mxu0 0.0
        %887 = vmatpush1.msra.mxu0 0.0
        %888 = vmatprep.subr.mxu0 0.0
        %889 = vmatpush1.msra.mxu0 0.0
        %890 = vmatprep.subr.mxu0 0.0
        %891 = vmatpush1.msra.mxu0 0.0
        %892 = vmatprep.subr.mxu0 0.0
        %893 = vmatpush1.msra.mxu0 0.0
        %894 = vmatprep.subr.mxu0 0.0
        %895 = vmatpush1.msra.mxu0 0.0
        %896 = vmatprep.subr.mxu0 0.0
        %897 = vmatpush1.msra.mxu0 0.0
        %898 = vmatprep.subr.mxu0 0.0
        %899 = vmatpush1.msra.mxu0 0.0
        %900 = vmatprep.subr.mxu0 0.0
        %901 = vmatpush1.msra.mxu0 0.0
        %902 = vmatprep.mubr.f32.mxu0 0.0
        %903 = vmatmul.mubr.f32.gmra.mrb[0].mxu0 %v761
        %v904 = vpop.f32.mrb[0].mxu0
        %v905 = vadd.f32 0.0, %v904
        %v906 = vpop.f32.mrb[0].mxu0
        %v907 = vadd.f32 0.0, %v906
        %908 = vdwg.mxu0
        %v909 = vadd.f32 %v763, %v834
        %v910 = vadd.f32 %v764, %v836
        %v911 = vadd.f32 %v765, %v905
        %v912 = vadd.f32 %v766, %v907
        %v913 = vmul.f32 %v909, 0.5
        %v914 = vtanh.pop %v913
        %v915 = vmul.f32 %v914, 0.5
        %v916 = vadd.f32 %v915, 0.5
        %v917 = vmul.f32 %v910, 0.5
        %v918 = vtanh.pop %v917
        %v919 = vmul.f32 %v918, 0.5
        %v920 = vadd.f32 %v919, 0.5
        %v921 = vtanh.pop %v911
        %v922 = vmul.f32 %v912, 0.5
        %v923 = vtanh.pop %v922
        %v924 = vmul.f32 %v923, 0.5
        %v925 = vadd.f32 %v924, 0.5
        %v926 = vmul.f32 %v920, %v762
        %v927 = vmul.f32 %v916, %v921
        %v928 = vadd.f32 %v926, %v927
        %v929 = vtanh.pop %v928
        %v930 = vmul.f32 %v925, %v929
        %s931 = smul.u32 %s18, 3
        %p932 = scmp.lt.s32.totalorder %s931, 8
        %s933 = scalar_select %p932, 1, 0
        %v934 = vstv %s933
        %vm935 = vcmp.eq.s32.totalorder %v934, 1
        %v936 = vsel %vm935, %v930, %v761
        %v937 = vsel %vm935, %v928, %v762
        %s938 = scalar_lea.vmem %s167, 32
        %v939 = vld [vmem:[%s938] sm:$0xff]
        %v940 = vld [vmem:[%s938 + $0x8] sm:$0xff]
        %v941 = vld [vmem:[%s938 + $0x10] sm:$0xff]
        %v942 = vld [vmem:[%s938 + $0x18] sm:$0xff]
        %943 = vmatprep.subr.mxu0 %v180
        %944 = vmatpush1.msra.mxu0 %v179
        %945 = vmatprep.subr.mxu0 %v184
        %946 = vmatpush1.msra.mxu0 %v183
        %947 = vmatprep.subr.mxu0 %v188
        %948 = vmatpush1.msra.mxu0 %v187
        %949 = vmatprep.subr.mxu0 %v192
        %950 = vmatpush1.msra.mxu0 %v191
        %951 = vmatprep.subr.mxu0 %v196
        %952 = vmatpush1.msra.mxu0 %v195
        %953 = vmatprep.subr.mxu0 %v200
        %954 = vmatpush1.msra.mxu0 %v199
        %955 = vmatprep.subr.mxu0 %v204
        %956 = vmatpush1.msra.mxu0 %v203
        %957 = vmatprep.subr.mxu0 %v208
        %958 = vmatpush1.msra.mxu0 %v207
        %959 = vmatprep.subr.mxu0 %v212
        %960 = vmatpush1.msra.mxu0 %v211
        %961 = vmatprep.subr.mxu0 %v216
        %962 = vmatpush1.msra.mxu0 %v215
        %963 = vmatprep.subr.mxu0 %v220
        %964 = vmatpush1.msra.mxu0 %v219
        %965 = vmatprep.subr.mxu0 %v224
        %966 = vmatpush1.msra.mxu0 %v223
        %967 = vmatprep.subr.mxu0 %v228
        %968 = vmatpush1.msra.mxu0 %v227
        %969 = vmatprep.subr.mxu0 %v232
        %970 = vmatpush1.msra.mxu0 %v231
        %971 = vmatprep.subr.mxu0 %v236
        %972 = vmatpush1.msra.mxu0 %v235
        %973 = vmatprep.subr.mxu0 %v240
        %974 = vmatpush1.msra.mxu0 %v239
        %975 = vmatprep.subr.mxu0 0.0
        %976 = vmatpush1.msra.mxu0 0.0
        %977 = vmatprep.subr.mxu0 0.0
        %978 = vmatpush1.msra.mxu0 0.0
        %979 = vmatprep.subr.mxu0 0.0
        %980 = vmatpush1.msra.mxu0 0.0
        %981 = vmatprep.subr.mxu0 0.0
        %982 = vmatpush1.msra.mxu0 0.0
        %983 = vmatprep.subr.mxu0 0.0
        %984 = vmatpush1.msra.mxu0 0.0
        %985 = vmatprep.subr.mxu0 0.0
        %986 = vmatpush1.msra.mxu0 0.0
        %987 = vmatprep.subr.mxu0 0.0
        %988 = vmatpush1.msra.mxu0 0.0
        %989 = vmatprep.subr.mxu0 0.0
        %990 = vmatpush1.msra.mxu0 0.0
        %991 = vmatprep.subr.mxu0 0.0
        %992 = vmatpush1.msra.mxu0 0.0
        %993 = vmatprep.subr.mxu0 0.0
        %994 = vmatpush1.msra.mxu0 0.0
        %995 = vmatprep.subr.mxu0 0.0
        %996 = vmatpush1.msra.mxu0 0.0
        %997 = vmatprep.subr.mxu0 0.0
        %998 = vmatpush1.msra.mxu0 0.0
        %999 = vmatprep.subr.mxu0 0.0
        %1000 = vmatpush1.msra.mxu0 0.0
        %1001 = vmatprep.subr.mxu0 0.0
        %1002 = vmatpush1.msra.mxu0 0.0
        %1003 = vmatprep.subr.mxu0 0.0
        %1004 = vmatpush1.msra.mxu0 0.0
        %1005 = vmatprep.subr.mxu0 0.0
        %1006 = vmatpush1.msra.mxu0 0.0
        %1007 = vmatprep.mubr.f32.mxu0 0.0
        %1008 = vmatmul.mubr.f32.gmra.mrb[0].mxu0 %v936
        %v1009 = vpop.f32.mrb[0].mxu0
        %v1010 = vadd.f32 0.0, %v1009
        %v1011 = vpop.f32.mrb[0].mxu0
        %v1012 = vadd.f32 0.0, %v1011
        %1013 = vdwg.mxu0
        %1014 = vmatprep.subr.mxu0 %v182
        %1015 = vmatpush1.msra.mxu0 %v181
        %1016 = vmatprep.subr.mxu0 %v186
        %1017 = vmatpush1.msra.mxu0 %v185
        %1018 = vmatprep.subr.mxu0 %v190
        %1019 = vmatpush1.msra.mxu0 %v189
        %1020 = vmatprep.subr.mxu0 %v194
        %1021 = vmatpush1.msra.mxu0 %v193
        %1022 = vmatprep.subr.mxu0 %v198
        %1023 = vmatpush1.msra.mxu0 %v197
        %1024 = vmatprep.subr.mxu0 %v202
        %1025 = vmatpush1.msra.mxu0 %v201
        %1026 = vmatprep.subr.mxu0 %v206
        %1027 = vmatpush1.msra.mxu0 %v205
        %1028 = vmatprep.subr.mxu0 %v210
        %1029 = vmatpush1.msra.mxu0 %v209
        %1030 = vmatprep.subr.mxu0 %v214
        %1031 = vmatpush1.msra.mxu0 %v213
        %1032 = vmatprep.subr.mxu0 %v218
        %1033 = vmatpush1.msra.mxu0 %v217
        %1034 = vmatprep.subr.mxu0 %v222
        %1035 = vmatpush1.msra.mxu0 %v221
        %1036 = vmatprep.subr.mxu0 %v226
        %1037 = vmatpush1.msra.mxu0 %v225
        %1038 = vmatprep.subr.mxu0 %v230
        %1039 = vmatpush1.msra.mxu0 %v229
        %1040 = vmatprep.subr.mxu0 %v234
        %1041 = vmatpush1.msra.mxu0 %v233
        %1042 = vmatprep.subr.mxu0 %v238
        %1043 = vmatpush1.msra.mxu0 %v237
        %1044 = vmatprep.subr.mxu0 %v242
        %1045 = vmatpush1.msra.mxu0 %v241
        %1046 = vmatprep.subr.mxu0 0.0
        %1047 = vmatpush1.msra.mxu0 0.0
        %1048 = vmatprep.subr.mxu0 0.0
        %1049 = vmatpush1.msra.mxu0 0.0
        %1050 = vmatprep.subr.mxu0 0.0
        %1051 = vmatpush1.msra.mxu0 0.0
        %1052 = vmatprep.subr.mxu0 0.0
        %1053 = vmatpush1.msra.mxu0 0.0
        %1054 = vmatprep.subr.mxu0 0.0
        %1055 = vmatpush1.msra.mxu0 0.0
        %1056 = vmatprep.subr.mxu0 0.0
        %1057 = vmatpush1.msra.mxu0 0.0
        %1058 = vmatprep.subr.mxu0 0.0
        %1059 = vmatpush1.msra.mxu0 0.0
        %1060 = vmatprep.subr.mxu0 0.0
        %1061 = vmatpush1.msra.mxu0 0.0
        %1062 = vmatprep.subr.mxu0 0.0
        %1063 = vmatpush1.msra.mxu0 0.0
        %1064 = vmatprep.subr.mxu0 0.0
        %1065 = vmatpush1.msra.mxu0 0.0
        %1066 = vmatprep.subr.mxu0 0.0
        %1067 = vmatpush1.msra.mxu0 0.0
        %1068 = vmatprep.subr.mxu0 0.0
        %1069 = vmatpush1.msra.mxu0 0.0
        %1070 = vmatprep.subr.mxu0 0.0
        %1071 = vmatpush1.msra.mxu0 0.0
        %1072 = vmatprep.subr.mxu0 0.0
        %1073 = vmatpush1.msra.mxu0 0.0
        %1074 = vmatprep.subr.mxu0 0.0
        %1075 = vmatpush1.msra.mxu0 0.0
        %1076 = vmatprep.subr.mxu0 0.0
        %1077 = vmatpush1.msra.mxu0 0.0
        %1078 = vmatprep.mubr.f32.mxu0 0.0
        %1079 = vmatmul.mubr.f32.gmra.mrb[0].mxu0 %v936
        %v1080 = vpop.f32.mrb[0].mxu0
        %v1081 = vadd.f32 0.0, %v1080
        %v1082 = vpop.f32.mrb[0].mxu0
        %v1083 = vadd.f32 0.0, %v1082
        %1084 = vdwg.mxu0
        %v1085 = vadd.f32 %v939, %v1010
        %v1086 = vadd.f32 %v940, %v1012
        %v1087 = vadd.f32 %v941, %v1081
        %v1088 = vadd.f32 %v942, %v1083
        %v1089 = vmul.f32 %v1085, 0.5
        %v1090 = vtanh.pop %v1089
        %v1091 = vmul.f32 %v1090, 0.5
        %v1092 = vadd.f32 %v1091, 0.5
        %v1093 = vmul.f32 %v1086, 0.5
        %v1094 = vtanh.pop %v1093
        %v1095 = vmul.f32 %v1094, 0.5
        %v1096 = vadd.f32 %v1095, 0.5
        %v1097 = vtanh.pop %v1087
        %v1098 = vmul.f32 %v1088, 0.5
        %v1099 = vtanh.pop %v1098
        %v1100 = vmul.f32 %v1099, 0.5
        %v1101 = vadd.f32 %v1100, 0.5
        %v1102 = vmul.f32 %v1096, %v937
        %v1103 = vmul.f32 %v1092, %v1097
        %v1104 = vadd.f32 %v1102, %v1103
        %v1105 = vtanh.pop %v1104
        %v1106 = vmul.f32 %v1101, %v1105
        %s1107 = sadd.s32 %s931, 1
        %p1108 = scmp.lt.s32.totalorder %s1107, 8
        %s1109 = scalar_select %p1108, 1, 0
        %v1110 = vstv %s1109
        %vm1111 = vcmp.eq.s32.totalorder %v1110, 1
        %v1112 = vsel %vm1111, %v1106, %v936
        %v1113 = vsel %vm1111, %v1104, %v937
        %s1114 = scalar_lea.vmem %s167, 64
        %v1115 = vld [vmem:[%s1114] sm:$0xff]
        %v1116 = vld [vmem:[%s1114 + $0x8] sm:$0xff]
        %v1117 = vld [vmem:[%s1114 + $0x10] sm:$0xff]
        %v1118 = vld [vmem:[%s1114 + $0x18] sm:$0xff]
        %1119 = vmatprep.subr.mxu0 %v180
        %1120 = vmatpush1.msra.mxu0 %v179
        %1121 = vmatprep.subr.mxu0 %v184
        %1122 = vmatpush1.msra.mxu0 %v183
        %1123 = vmatprep.subr.mxu0 %v188
        %1124 = vmatpush1.msra.mxu0 %v187
        %1125 = vmatprep.subr.mxu0 %v192
        %1126 = vmatpush1.msra.mxu0 %v191
        %1127 = vmatprep.subr.mxu0 %v196
        %1128 = vmatpush1.msra.mxu0 %v195
        %1129 = vmatprep.subr.mxu0 %v200
        %1130 = vmatpush1.msra.mxu0 %v199
        %1131 = vmatprep.subr.mxu0 %v204
        %1132 = vmatpush1.msra.mxu0 %v203
        %1133 = vmatprep.subr.mxu0 %v208
        %1134 = vmatpush1.msra.mxu0 %v207
        %1135 = vmatprep.subr.mxu0 %v212
        %1136 = vmatpush1.msra.mxu0 %v211
        %1137 = vmatprep.subr.mxu0 %v216
        %1138 = vmatpush1.msra.mxu0 %v215
        %1139 = vmatprep.subr.mxu0 %v220
        %1140 = vmatpush1.msra.mxu0 %v219
        %1141 = vmatprep.subr.mxu0 %v224
        %1142 = vmatpush1.msra.mxu0 %v223
        %1143 = vmatprep.subr.mxu0 %v228
        %1144 = vmatpush1.msra.mxu0 %v227
        %1145 = vmatprep.subr.mxu0 %v232
        %1146 = vmatpush1.msra.mxu0 %v231
        %1147 = vmatprep.subr.mxu0 %v236
        %1148 = vmatpush1.msra.mxu0 %v235
        %1149 = vmatprep.subr.mxu0 %v240
        %1150 = vmatpush1.msra.mxu0 %v239
        %1151 = vmatprep.subr.mxu0 0.0
        %1152 = vmatpush1.msra.mxu0 0.0
        %1153 = vmatprep.subr.mxu0 0.0
        %1154 = vmatpush1.msra.mxu0 0.0
        %1155 = vmatprep.subr.mxu0 0.0
        %1156 = vmatpush1.msra.mxu0 0.0
        %1157 = vmatprep.subr.mxu0 0.0
        %1158 = vmatpush1.msra.mxu0 0.0
        %1159 = vmatprep.subr.mxu0 0.0
        %1160 = vmatpush1.msra.mxu0 0.0
        %1161 = vmatprep.subr.mxu0 0.0
        %1162 = vmatpush1.msra.mxu0 0.0
        %1163 = vmatprep.subr.mxu0 0.0
        %1164 = vmatpush1.msra.mxu0 0.0
        %1165 = vmatprep.subr.mxu0 0.0
        %1166 = vmatpush1.msra.mxu0 0.0
        %1167 = vmatprep.subr.mxu0 0.0
        %1168 = vmatpush1.msra.mxu0 0.0
        %1169 = vmatprep.subr.mxu0 0.0
        %1170 = vmatpush1.msra.mxu0 0.0
        %1171 = vmatprep.subr.mxu0 0.0
        %1172 = vmatpush1.msra.mxu0 0.0
        %1173 = vmatprep.subr.mxu0 0.0
        %1174 = vmatpush1.msra.mxu0 0.0
        %1175 = vmatprep.subr.mxu0 0.0
        %1176 = vmatpush1.msra.mxu0 0.0
        %1177 = vmatprep.subr.mxu0 0.0
        %1178 = vmatpush1.msra.mxu0 0.0
        %1179 = vmatprep.subr.mxu0 0.0
        %1180 = vmatpush1.msra.mxu0 0.0
        %1181 = vmatprep.subr.mxu0 0.0
        %1182 = vmatpush1.msra.mxu0 0.0
        %1183 = vmatprep.mubr.f32.mxu0 0.0
        %1184 = vmatmul.mubr.f32.gmra.mrb[0].mxu0 %v1112
        %v1185 = vpop.f32.mrb[0].mxu0
        %v1186 = vadd.f32 0.0, %v1185
        %v1187 = vpop.f32.mrb[0].mxu0
        %v1188 = vadd.f32 0.0, %v1187
        %1189 = vdwg.mxu0
        %1190 = vmatprep.subr.mxu0 %v182
        %1191 = vmatpush1.msra.mxu0 %v181
        %1192 = vmatprep.subr.mxu0 %v186
        %1193 = vmatpush1.msra.mxu0 %v185
        %1194 = vmatprep.subr.mxu0 %v190
        %1195 = vmatpush1.msra.mxu0 %v189
        %1196 = vmatprep.subr.mxu0 %v194
        %1197 = vmatpush1.msra.mxu0 %v193
        %1198 = vmatprep.subr.mxu0 %v198
        %1199 = vmatpush1.msra.mxu0 %v197
        %1200 = vmatprep.subr.mxu0 %v202
        %1201 = vmatpush1.msra.mxu0 %v201
        %1202 = vmatprep.subr.mxu0 %v206
        %1203 = vmatpush1.msra.mxu0 %v205
        %1204 = vmatprep.subr.mxu0 %v210
        %1205 = vmatpush1.msra.mxu0 %v209
        %1206 = vmatprep.subr.mxu0 %v214
        %1207 = vmatpush1.msra.mxu0 %v213
        %1208 = vmatprep.subr.mxu0 %v218
        %1209 = vmatpush1.msra.mxu0 %v217
        %1210 = vmatprep.subr.mxu0 %v222
        %1211 = vmatpush1.msra.mxu0 %v221
        %1212 = vmatprep.subr.mxu0 %v226
        %1213 = vmatpush1.msra.mxu0 %v225
        %1214 = vmatprep.subr.mxu0 %v230
        %1215 = vmatpush1.msra.mxu0 %v229
        %1216 = vmatprep.subr.mxu0 %v234
        %1217 = vmatpush1.msra.mxu0 %v233
        %1218 = vmatprep.subr.mxu0 %v238
        %1219 = vmatpush1.msra.mxu0 %v237
        %1220 = vmatprep.subr.mxu0 %v242
        %1221 = vmatpush1.msra.mxu0 %v241
        %1222 = vmatprep.subr.mxu0 0.0
        %1223 = vmatpush1.msra.mxu0 0.0
        %1224 = vmatprep.subr.mxu0 0.0
        %1225 = vmatpush1.msra.mxu0 0.0
        %1226 = vmatprep.subr.mxu0 0.0
        %1227 = vmatpush1.msra.mxu0 0.0
        %1228 = vmatprep.subr.mxu0 0.0
        %1229 = vmatpush1.msra.mxu0 0.0
        %1230 = vmatprep.subr.mxu0 0.0
        %1231 = vmatpush1.msra.mxu0 0.0
        %1232 = vmatprep.subr.mxu0 0.0
        %1233 = vmatpush1.msra.mxu0 0.0
        %1234 = vmatprep.subr.mxu0 0.0
        %1235 = vmatpush1.msra.mxu0 0.0
        %1236 = vmatprep.subr.mxu0 0.0
        %1237 = vmatpush1.msra.mxu0 0.0
        %1238 = vmatprep.subr.mxu0 0.0
        %1239 = vmatpush1.msra.mxu0 0.0
        %1240 = vmatprep.subr.mxu0 0.0
        %1241 = vmatpush1.msra.mxu0 0.0
        %1242 = vmatprep.subr.mxu0 0.0
        %1243 = vmatpush1.msra.mxu0 0.0
        %1244 = vmatprep.subr.mxu0 0.0
        %1245 = vmatpush1.msra.mxu0 0.0
        %1246 = vmatprep.subr.mxu0 0.0
        %1247 = vmatpush1.msra.mxu0 0.0
        %1248 = vmatprep.subr.mxu0 0.0
        %1249 = vmatpush1.msra.mxu0 0.0
        %1250 = vmatprep.subr.mxu0 0.0
        %1251 = vmatpush1.msra.mxu0 0.0
        %1252 = vmatprep.subr.mxu0 0.0
        %1253 = vmatpush1.msra.mxu0 0.0
        %1254 = vmatprep.mubr.f32.mxu0 0.0
        %1255 = vmatmul.mubr.f32.gmra.mrb[0].mxu0 %v1112
        %v1256 = vpop.f32.mrb[0].mxu0
        %v1257 = vadd.f32 0.0, %v1256
        %v1258 = vpop.f32.mrb[0].mxu0
        %v1259 = vadd.f32 0.0, %v1258
        %1260 = vdwg.mxu0
        %v1261 = vadd.f32 %v1115, %v1186
        %v1262 = vadd.f32 %v1116, %v1188
        %v1263 = vadd.f32 %v1117, %v1257
        %v1264 = vadd.f32 %v1118, %v1259
        %v1265 = vmul.f32 %v1261, 0.5
        %v1266 = vtanh.pop %v1265
        %v1267 = vmul.f32 %v1266, 0.5
        %v1268 = vadd.f32 %v1267, 0.5
        %v1269 = vmul.f32 %v1262, 0.5
        %v1270 = vtanh.pop %v1269
        %v1271 = vmul.f32 %v1270, 0.5
        %v1272 = vadd.f32 %v1271, 0.5
        %v1273 = vtanh.pop %v1263
        %v1274 = vmul.f32 %v1264, 0.5
        %v1275 = vtanh.pop %v1274
        %v1276 = vmul.f32 %v1275, 0.5
        %v1277 = vadd.f32 %v1276, 0.5
        %v1278 = vmul.f32 %v1272, %v1113
        %v1279 = vmul.f32 %v1268, %v1273
        %v1280 = vadd.f32 %v1278, %v1279
        %v1281 = vtanh.pop %v1280
        %v1282 = vmul.f32 %v1277, %v1281
        %s1283 = sadd.s32 %s931, 2
        %p1284 = scmp.lt.s32.totalorder %s1283, 8
        %s1285 = scalar_select %p1284, 1, 0
        %v1286 = vstv %s1285
        %vm1287 = vcmp.eq.s32.totalorder %v1286, 1
        %v1288 = vsel %vm1287, %v1282, %v1112
        %v1289 = vtanh.pop %v1288
        %1290 = vst [vmem:[%s172] sm:$0xff] %v1289
      $region40: #{lstm_forward.1} parent=27 // pred_fallthru
        _
      %p1291 = scmp.lt.s32.totalorder %s17, 0
      %s1292 = scalar_select %p1291, %s17, 0
      %s1293 = smul.addr %s1292, 8
      %s1294 = scalar_lea.vmem %s2, %s1293
      // Predicated region
      $region41: #{lstm_forward.1} parent=27 // pred_check
        %p1295 = pneg %p92
      $region42: #{lstm_forward.1} parent=27 // pred_check_branch
        %1297 = sbr.rel (%p1295) target = $region44
      $region43: #{lstm_forward.1} parent=27 // pred_region
        _
      $region44: #{lstm_forward.1} parent=27 // pred_fallthru
        _
      // Predicated region
      $region45: #{lstm_forward.1} parent=27 // pred_check
        %p1298 = pneg %p92
      $region46: #{lstm_forward.1} parent=27 // pred_check_branch
        %1300 = sbr.rel (%p1298) target = $region48
      $region47: #{lstm_forward.1} parent=27 // pred_region
        %p1301 = scmp.lt.s32.totalorder %s17, 0
        %s1302 = scalar_select %p1301, %s17, 0
        %s1303 = smul.addr %s1302, 8
        %s1304 = scalar_lea.vmem %s2, %s1303
      $region48: #{lstm_forward.1} parent=27 // pred_fallthru
        _
    $region28: #{lstm_forward.1} parent=5 // pred_fallthru
      _
    %p1305 = scmp.le.s32.totalorder 2, %s8
    // Predicated region
    $region49: #{lstm_forward.1} parent=5 // pred_check
      %p1306 = pneg %p1305
    $region50: #{lstm_forward.1} parent=5 // pred_check_branch
      %1308 = sbr.rel (%p1306) target = $region52
    $region51: #{lstm_forward.1} parent=5 // pred_region
      %s1309 = ssub.s32 %s8, 2
    $region52: #{lstm_forward.1} parent=5 // pred_fallthru
      _
  $region6: #{lstm_forward.1} parent=0 // loop_footer
    %s12 = sadd.s32 1, %s8
  $region7: #{lstm_forward.1} parent=0 // loop_footer_branch
    %7 = sbr.rel target = $region3
  $region8: #{lstm_forward.1} parent=0 // loop_exit
    _

// kernel: lstm_forward.1
$region0: #{lstm_forward.1}
  #allocation0 [shape = 'u32[]', space=smem, size = 0x4, offset = 0x4, fixed_abs, tag = 'smem constant byte address 0x4 - core index']
  #allocation1 [shape = 'u32[144,128]{1,0:T(1,128)}', space=vmem, size = 0x12000, scoped, tag = 'internal scratch']
  #allocation2 [shape = 'f32[8,128]{1,0:T(8,128)}', space=vmem, size = 0x1000, scoped, tag = 'scratch operand']
  #allocation3 [shape = 'f32[8,128]{1,0:T(8,128)}', space=vmem, size = 0x1000, scoped, tag = 'scratch operand']
  %s0 = inlined_call_operand.vmem [shape: f32[9,8,512], index: 0, kind: input, shape index: {}]
  %s1 = inlined_call_operand.vmem [shape: f32[128,512], index: 1, kind: input, shape index: {}]
  %s2 = inlined_call_operand.vmem [shape: f32[8,128], index: 2, kind: output, shape index: {}]
  %s3 = sld [smem:[#allocation0]]
  $region53: #{lstm_forward.1} parent=0
    _
  %s5 = ssub.s32 1, %s3
  %s6 = scalar_select 0, %s5, %s3
  loop: start=0, step=1, limit=5
  $region2: #{lstm_forward.1} parent=0 // loop_pre_header
    _
  $region3: #{lstm_forward.1} parent=0 // loop_header
    %s8 = sphi 0, %s12
    %p9 = scmp.ge.s32.totalorder %s8, 5
    %s15 = sphi 0, %s27
    %s16 = sphi 0, %s23
    %s17 = sphi 0, %s15
    %s18 = sphi 0, %s16
    %s19 = sphi 0, %s17
    %s20 = sphi 0, %s18
    %s32 = sphi 0, %s34
    %s35 = sphi 0, %s32
    %s36 = sphi 0, %s35
    %s52 = sphi 0, %s36
    %s56 = sphi 0, %s56
    %s58 = sphi 0, %s56
    %s59 = sphi 0, %s58
    %s73 = sphi 0, %s59
    %s79 = sphi 0, %s81
    %s82 = sphi 0, %s79
    %s83 = sphi 0, %s82
    %s99 = sphi 0, %s83
  $region4: #{lstm_forward.1} parent=0 // loop_header_branch
    %11 = sbr.rel (%p9) target = $region8
  $region5: #{lstm_forward.1} parent=0 // loop_body
    %s13 = ssub.s32 %s8, 1
    %s14 = ssub.s32 %s8, 2
    %s21 = sadd.s32 1, %s16
    %p22 = scmp.ge.s32.totalorder %s21, 3
    %s23 = scalar_select %p22, 0, %s21
    %s24 = sadd.s32 1, %s15
    %s25 = scalar_select %p22, %s24, %s15
    %p26 = scmp.ge.s32.totalorder %s25, 1
    %s27 = scalar_select %p26, 0, %s25
    %s28 = ssub.s32 %s16, %s23
    %s29 = ssub.s32 %s15, %s27
    %s30 = sor.u32 %s28, %s29
    %p31 = scmp.eq.s32.totalorder %s30, 0
    %s33 = sadd.s32 %s32, 1
    %s34 = scalar_select %p31, %s32, %s33
    %p37 = pneg %p31
    %p38 = scmp.eq.s32.totalorder %s8, 2
    %p39 = por %p37, %p38
    %p40 = scmp.ne.s32.totalorder %s32, %s35
    %p41 = scmp.eq.s32.totalorder %s8, 0
    %p42 = por %p40, %p41
    %p43 = scmp.ne.s32.totalorder %s32, %s35
    %p44 = scmp.eq.s32.totalorder %s13, 2
    %p45 = por %p43, %p44
    %p46 = scmp.ne.s32.totalorder %s35, %s36
    %p47 = scmp.eq.s32.totalorder %s13, 0
    %p48 = por %p46, %p47
    %p49 = scmp.ne.s32.totalorder %s35, %s36
    %p50 = scmp.eq.s32.totalorder %s14, 2
    %p51 = por %p49, %p50
    %p53 = scmp.ne.s32.totalorder %s36, %s52
    %p54 = scmp.eq.s32.totalorder %s14, 0
    %p55 = por %p53, %p54
    %s57 = sadd.s32 %s56, 1
    %p60 = scmp.eq.s32.totalorder %s8, 2
    %p61 = scmp.ne.s32.totalorder %s56, %s58
    %p62 = scmp.eq.s32.totalorder %s8, 0
    %p63 = por %p61, %p62
    %p64 = scmp.ne.s32.totalorder %s56, %s58
    %p65 = scmp.eq.s32.totalorder %s13, 2
    %p66 = por %p64, %p65
    %p67 = scmp.ne.s32.totalorder %s58, %s59
    %p68 = scmp.eq.s32.totalorder %s13, 0
    %p69 = por %p67, %p68
    %p70 = scmp.ne.s32.totalorder %s58, %s59
    %p71 = scmp.eq.s32.totalorder %s14, 2
    %p72 = por %p70, %p71
    %p74 = scmp.ne.s32.totalorder %s59, %s73
    %p75 = scmp.eq.s32.totalorder %s14, 0
    %p76 = por %p74, %p75
    %s77 = ssub.s32 %s15, %s27
    %p78 = scmp.eq.s32.totalorder %s77, 0
    %s80 = sadd.s32 %s79, 1
    %s81 = scalar_select %p78, %s79, %s80
    %p84 = pneg %p78
    %p85 = scmp.eq.s32.totalorder %s8, 2
    %p86 = por %p84, %p85
    %p87 = scmp.ne.s32.totalorder %s79, %s82
    %p88 = scmp.eq.s32.totalorder %s8, 0
    %p89 = por %p87, %p88
    %p90 = scmp.ne.s32.totalorder %s79, %s82
    %p91 = scmp.eq.s32.totalorder %s13, 2
    %p92 = por %p90, %p91
    %p93 = scmp.ne.s32.totalorder %s82, %s83
    %p94 = scmp.eq.s32.totalorder %s13, 0
    %p95 = por %p93, %p94
    %p96 = scmp.ne.s32.totalorder %s82, %s83
    %p97 = scmp.eq.s32.totalorder %s14, 2
    %p98 = por %p96, %p97
    %p100 = scmp.ne.s32.totalorder %s83, %s99
    %p101 = scmp.eq.s32.totalorder %s14, 0
    %p102 = por %p100, %p101
    %p103 = scmp.le.s32.totalorder 1, %s8
    %p104 = scmp.lt.s32.totalorder %s8, 4
    %p105 = pnand %p103, %p104
    %p106 = pneg %p105
    // Predicated region
    $region9: #{lstm_forward.1} parent=5 // pred_check
      _
    $region10: #{lstm_forward.1} parent=5 // pred_check_branch
      %108 = sbr.rel (%p105) target = $region12
    $region11: #{lstm_forward.1} parent=5 // pred_region
      %s109 = ssub.s32 %s8, 1
      // Predicated region
      $region13: #{lstm_forward.1} parent=11 // pred_check
        %p110 = pneg %p69
      $region14: #{lstm_forward.1} parent=11 // pred_check_branch
        %112 = sbr.rel (%p110) target = $region16
      $region15: #{lstm_forward.1} parent=11 // pred_region
        _
      $region16: #{lstm_forward.1} parent=11 // pred_fallthru
        _
    $region12: #{lstm_forward.1} parent=5 // pred_fallthru
      _
    %p113 = scmp.lt.s32.totalorder %s8, 3
    // Predicated region
    $region17: #{lstm_forward.1} parent=5 // pred_check
      %p114 = pneg %p113
    $region18: #{lstm_forward.1} parent=5 // pred_check_branch
      %116 = sbr.rel (%p114) target = $region20
    $region19: #{lstm_forward.1} parent=5 // pred_region
      // Predicated region
      $region21: #{lstm_forward.1} parent=19 // pred_check
        %p117 = pneg %p42
      $region22: #{lstm_forward.1} parent=19 // pred_check_branch
        %119 = sbr.rel (%p117) target = $region24
      $region23: #{lstm_forward.1} parent=19 // pred_region
        %s120 = smul.u32 3, %s16
        %p121 = scmp.lt.s32.totalorder %s120, 8
        %s122 = scalar_select %p121, %s120, 8
        %p123 = scmp.lt.s32.totalorder %s15, 0
        %s124 = scalar_select %p123, %s15, 0
        %s125 = smul.addr %s124, 4
        %s126 = smul.addr %s122, 4
        %s127 = sadd.s32 %s125, %s126
        %s128 = smul.addr %s127, 8
        %s129 = scalar_lea.vmem %s0, %s128
        %s130 = smul.u32 3, %s16
      $region24: #{lstm_forward.1} parent=19 // pred_fallthru
        _
    $region20: #{lstm_forward.1} parent=5 // pred_fallthru
      _
    %p131 = scmp.le.s32.totalorder 1, %s8
    %p132 = scmp.lt.s32.totalorder %s8, 4
    %p133 = pnand %p131, %p132
    %p134 = pneg %p133
    // Predicated region
    $region25: #{lstm_forward.1} parent=5 // pred_check
      _
    $region26: #{lstm_forward.1} parent=5 // pred_check_branch
      %136 = sbr.rel (%p133) target = $region28
    $region27: #{lstm_forward.1} parent=5 // pred_region
      %s137 = ssub.s32 %s8, 1
      %s138 = smul.u32 3, %s18
      %p139 = scmp.lt.s32.totalorder %s138, 8
      %s140 = scalar_select %p139, %s138, 8
      %p141 = scmp.lt.s32.totalorder %s17, 0
      %s142 = scalar_select %p141, %s17, 0
      %s143 = smul.addr %s142, 4
      %s144 = smul.addr %s140, 4
      %s145 = sadd.s32 %s143, %s144
      %s146 = smul.addr %s145, 8
      %s147 = scalar_lea.vmem %s0, %s146
      %p148 = pneg %p48
      %p149 = pneg %p45
      %p150 = pneg %p69
      %p151 = pneg %p66
      %p152 = pneg %p95
      %p153 = pneg %p92
      %p154 = scmp.lt.s32.totalorder %s17, 0
      %s155 = scalar_select %p154, %s17, 0
      %s156 = smul.addr %s155, 8
      %s157 = scalar_lea.vmem %s2, %s156
      %s158 = smul.u32 3, %s18
      %p159 = scmp.lt.s32.totalorder %s158, 8
      %s160 = scalar_select %p159, %s158, 8
      %p161 = scmp.lt.s32.totalorder %s17, 0
      %s162 = scalar_select %p161, %s17, 0
      %s163 = smul.addr %s162, 4
      %s164 = smul.addr %s160, 4
      %s165 = sadd.s32 %s163, %s164
      %s166 = smul.addr %s165, 8
      %s167 = scalar_lea.vmem %s0, %s166
      %s168 = smul.u32 3, %s18
      %p169 = scmp.lt.s32.totalorder %s17, 0
      %s170 = scalar_select %p169, %s17, 0
      %s171 = smul.addr %s170, 8
      %s172 = scalar_lea.vmem %s2, %s171
      %p173 = scmp.eq.s32.totalorder %s18, 0
      // Predicated region
      $region29: #{lstm_forward.1} parent=27 // pred_check
        %p174 = pneg %p173
      $region30: #{lstm_forward.1} parent=27 // pred_check_branch
        %176 = sbr.rel (%p174) target = $region32
      $region31: #{lstm_forward.1} parent=27 // pred_region
        %177 = vst [vmem:[#allocation2] sm:$0xff] 0.0
        %178 = vst [vmem:[#allocation3] sm:$0xff] 0.0
      $region32: #{lstm_forward.1} parent=27 // pred_fallthru
        _
      %v179 = vld [vmem:[%s1] sm:$0xff]
      %v180 = vld [vmem:[%s1 + $0x8] sm:$0xff]
      %v181 = vld [vmem:[%s1 + $0x10] sm:$0xff]
      %v182 = vld [vmem:[%s1 + $0x18] sm:$0xff]
      %v183 = vld [vmem:[%s1 + $0x20] sm:$0xff]
      %v184 = vld [vmem:[%s1 + $0x28] sm:$0xff]
      %v185 = vld [vmem:[%s1 + $0x30] sm:$0xff]
      %v186 = vld [vmem:[%s1 + $0x38] sm:$0xff]
      %v187 = vld [vmem:[%s1 + $0x40] sm:$0xff]
      %v188 = vld [vmem:[%s1 + $0x48] sm:$0xff]
      %v189 = vld [vmem:[%s1 + $0x50] sm:$0xff]
      %v190 = vld [vmem:[%s1 + $0x58] sm:$0xff]
      %v191 = vld [vmem:[%s1 + $0x60] sm:$0xff]
      %v192 = vld [vmem:[%s1 + $0x68] sm:$0xff]
      %v193 = vld [vmem:[%s1 + $0x70] sm:$0xff]
      %v194 = vld [vmem:[%s1 + $0x78] sm:$0xff]
      %v195 = vld [vmem:[%s1 + $0x80] sm:$0xff]
      %v196 = vld [vmem:[%s1 + $0x88] sm:$0xff]
      %v197 = vld [vmem:[%s1 + $0x90] sm:$0xff]
      %v198 = vld [vmem:[%s1 + $0x98] sm:$0xff]
      %v199 = vld [vmem:[%s1 + $0xa0] sm:$0xff]
      %v200 = vld [vmem:[%s1 + $0xa8] sm:$0xff]
      %v201 = vld [vmem:[%s1 + $0xb0] sm:$0xff]
      %v202 = vld [vmem:[%s1 + $0xb8] sm:$0xff]
      %v203 = vld [vmem:[%s1 + $0xc0] sm:$0xff]
      %v204 = vld [vmem:[%s1 + $0xc8] sm:$0xff]
      %v205 = vld [vmem:[%s1 + $0xd0] sm:$0xff]
      %v206 = vld [vmem:[%s1 + $0xd8] sm:$0xff]
      %v207 = vld [vmem:[%s1 + $0xe0] sm:$0xff]
      %v208 = vld [vmem:[%s1 + $0xe8] sm:$0xff]
      %v209 = vld [vmem:[%s1 + $0xf0] sm:$0xff]
      %v210 = vld [vmem:[%s1 + $0xf8] sm:$0xff]
      %v211 = vld [vmem:[%s1 + $0x100] sm:$0xff]
      %v212 = vld [vmem:[%s1 + $0x108] sm:$0xff]
      %v213 = vld [vmem:[%s1 + $0x110] sm:$0xff]
      %v214 = vld [vmem:[%s1 + $0x118] sm:$0xff]
      %v215 = vld [vmem:[%s1 + $0x120] sm:$0xff]
      %v216 = vld [vmem:[%s1 + $0x128] sm:$0xff]
      %v217 = vld [vmem:[%s1 + $0x130] sm:$0xff]
      %v218 = vld [vmem:[%s1 + $0x138] sm:$0xff]
      %v219 = vld [vmem:[%s1 + $0x140] sm:$0xff]
      %v220 = vld [vmem:[%s1 + $0x148] sm:$0xff]
      %v221 = vld [vmem:[%s1 + $0x150] sm:$0xff]
      %v222 = vld [vmem:[%s1 + $0x158] sm:$0xff]
      %v223 = vld [vmem:[%s1 + $0x160] sm:$0xff]
      %v224 = vld [vmem:[%s1 + $0x168] sm:$0xff]
      %v225 = vld [vmem:[%s1 + $0x170] sm:$0xff]
      %v226 = vld [vmem:[%s1 + $0x178] sm:$0xff]
      %v227 = vld [vmem:[%s1 + $0x180] sm:$0xff]
      %v228 = vld [vmem:[%s1 + $0x188] sm:$0xff]
      %v229 = vld [vmem:[%s1 + $0x190] sm:$0xff]
      %v230 = vld [vmem:[%s1 + $0x198] sm:$0xff]
      %v231 = vld [vmem:[%s1 + $0x1a0] sm:$0xff]
      %v232 = vld [vmem:[%s1 + $0x1a8] sm:$0xff]
      %v233 = vld [vmem:[%s1 + $0x1b0] sm:$0xff]
      %v234 = vld [vmem:[%s1 + $0x1b8] sm:$0xff]
      %v235 = vld [vmem:[%s1 + $0x1c0] sm:$0xff]
      %v236 = vld [vmem:[%s1 + $0x1c8] sm:$0xff]
      %v237 = vld [vmem:[%s1 + $0x1d0] sm:$0xff]
      %v238 = vld [vmem:[%s1 + $0x1d8] sm:$0xff]
      %v239 = vld [vmem:[%s1 + $0x1e0] sm:$0xff]
      %v240 = vld [vmem:[%s1 + $0x1e8] sm:$0xff]
      %v241 = vld [vmem:[%s1 + $0x1f0] sm:$0xff]
      %v242 = vld [vmem:[%s1 + $0x1f8] sm:$0xff]
      %p243 = scmp.lt.s32.totalorder %s18, 2
      // Predicated region
      $region33: #{lstm_forward.1} parent=27 // pred_check
        %p244 = pneg %p243
      $region34: #{lstm_forward.1} parent=27 // pred_check_branch
        %246 = sbr.rel (%p244) target = $region36
      $region35: #{lstm_forward.1} parent=27 // pred_region
        %v247 = vld [vmem:[#allocation2] sm:$0xff]
        %v248 = vld [vmem:[#allocation3] sm:$0xff]
        %v249 = vld [vmem:[%s167] sm:$0xff]
        %v250 = vld [vmem:[%s167 + $0x8] sm:$0xff]
        %v251 = vld [vmem:[%s167 + $0x10] sm:$0xff]
        %v252 = vld [vmem:[%s167 + $0x18] sm:$0xff]
        %253 = vmatprep.subr.mxu0 %v180
        %254 = vmatpush1.msra.mxu0 %v179
        %255 = vmatprep.subr.mxu0 %v184
        %256 = vmatpush1.msra.mxu0 %v183
        %257 = vmatprep.subr.mxu0 %v188
        %258 = vmatpush1.msra.mxu0 %v187
        %259 = vmatprep.subr.mxu0 %v192
        %260 = vmatpush1.msra.mxu0 %v191
        %261 = vmatprep.subr.mxu0 %v196
        %262 = vmatpush1.msra.mxu0 %v195
        %263 = vmatprep.subr.mxu0 %v200
        %264 = vmatpush1.msra.mxu0 %v199
        %265 = vmatprep.subr.mxu0 %v204
        %266 = vmatpush1.msra.mxu0 %v203
        %267 = vmatprep.subr.mxu0 %v208
        %268 = vmatpush1.msra.mxu0 %v207
        %269 = vmatprep.subr.mxu0 %v212
        %270 = vmatpush1.msra.mxu0 %v211
        %271 = vmatprep.subr.mxu0 %v216
        %272 = vmatpush1.msra.mxu0 %v215
        %273 = vmatprep.subr.mxu0 %v220
        %274 = vmatpush1.msra.mxu0 %v219
        %275 = vmatprep.subr.mxu0 %v224
        %276 = vmatpush1.msra.mxu0 %v223
        %277 = vmatprep.subr.mxu0 %v228
        %278 = vmatpush1.msra.mxu0 %v227
        %279 = vmatprep.subr.mxu0 %v232
        %280 = vmatpush1.msra.mxu0 %v231
        %281 = vmatprep.subr.mxu0 %v236
        %282 = vmatpush1.msra.mxu0 %v235
        %283 = vmatprep.subr.mxu0 %v240
        %284 = vmatpush1.msra.mxu0 %v239
        %285 = vmatprep.subr.mxu0 0.0
        %286 = vmatpush1.msra.mxu0 0.0
        %287 = vmatprep.subr.mxu0 0.0
        %288 = vmatpush1.msra.mxu0 0.0
        %289 = vmatprep.subr.mxu0 0.0
        %290 = vmatpush1.msra.mxu0 0.0
        %291 = vmatprep.subr.mxu0 0.0
        %292 = vmatpush1.msra.mxu0 0.0
        %293 = vmatprep.subr.mxu0 0.0
        %294 = vmatpush1.msra.mxu0 0.0
        %295 = vmatprep.subr.mxu0 0.0
        %296 = vmatpush1.msra.mxu0 0.0
        %297 = vmatprep.subr.mxu0 0.0
        %298 = vmatpush1.msra.mxu0 0.0
        %299 = vmatprep.subr.mxu0 0.0
        %300 = vmatpush1.msra.mxu0 0.0
        %301 = vmatprep.subr.mxu0 0.0
        %302 = vmatpush1.msra.mxu0 0.0
        %303 = vmatprep.subr.mxu0 0.0
        %304 = vmatpush1.msra.mxu0 0.0
        %305 = vmatprep.subr.mxu0 0.0
        %306 = vmatpush1.msra.mxu0 0.0
        %307 = vmatprep.subr.mxu0 0.0
        %308 = vmatpush1.msra.mxu0 0.0
        %309 = vmatprep.subr.mxu0 0.0
        %310 = vmatpush1.msra.mxu0 0.0
        %311 = vmatprep.subr.mxu0 0.0
        %312 = vmatpush1.msra.mxu0 0.0
        %313 = vmatprep.subr.mxu0 0.0
        %314 = vmatpush1.msra.mxu0 0.0
        %315 = vmatprep.subr.mxu0 0.0
        %316 = vmatpush1.msra.mxu0 0.0
        %317 = vmatprep.mubr.f32.mxu0 0.0
        %318 = vmatmul.mubr.f32.gmra.mrb[0].mxu0 %v247
        %v319 = vpop.f32.mrb[0].mxu0
        %v320 = vadd.f32 0.0, %v319
        %v321 = vpop.f32.mrb[0].mxu0
        %v322 = vadd.f32 0.0, %v321
        %323 = vdwg.mxu0
        %324 = vmatprep.subr.mxu0 %v182
        %325 = vmatpush1.msra.mxu0 %v181
        %326 = vmatprep.subr.mxu0 %v186
        %327 = vmatpush1.msra.mxu0 %v185
        %328 = vmatprep.subr.mxu0 %v190
        %329 = vmatpush1.msra.mxu0 %v189
        %330 = vmatprep.subr.mxu0 %v194
        %331 = vmatpush1.msra.mxu0 %v193
        %332 = vmatprep.subr.mxu0 %v198
        %333 = vmatpush1.msra.mxu0 %v197
        %334 = vmatprep.subr.mxu0 %v202
        %335 = vmatpush1.msra.mxu0 %v201
        %336 = vmatprep.subr.mxu0 %v206
        %337 = vmatpush1.msra.mxu0 %v205
        %338 = vmatprep.subr.mxu0 %v210
        %339 = vmatpush1.msra.mxu0 %v209
        %340 = vmatprep.subr.mxu0 %v214
        %341 = vmatpush1.msra.mxu0 %v213
        %342 = vmatprep.subr.mxu0 %v218
        %343 = vmatpush1.msra.mxu0 %v217
        %344 = vmatprep.subr.mxu0 %v222
        %345 = vmatpush1.msra.mxu0 %v221
        %346 = vmatprep.subr.mxu0 %v226
        %347 = vmatpush1.msra.mxu0 %v225
        %348 = vmatprep.subr.mxu0 %v230
        %349 = vmatpush1.msra.mxu0 %v229
        %350 = vmatprep.subr.mxu0 %v234
        %351 = vmatpush1.msra.mxu0 %v233
        %352 = vmatprep.subr.mxu0 %v238
        %353 = vmatpush1.msra.mxu0 %v237
        %354 = vmatprep.subr.mxu0 %v242
        %355 = vmatpush1.msra.mxu0 %v241
        %356 = vmatprep.subr.mxu0 0.0
        %357 = vmatpush1.msra.mxu0 0.0
        %358 = vmatprep.subr.mxu0 0.0
        %359 = vmatpush1.msra.mxu0 0.0
        %360 = vmatprep.subr.mxu0 0.0
        %361 = vmatpush1.msra.mxu0 0.0
        %362 = vmatprep.subr.mxu0 0.0
        %363 = vmatpush1.msra.mxu0 0.0
        %364 = vmatprep.subr.mxu0 0.0
        %365 = vmatpush1.msra.mxu0 0.0
        %366 = vmatprep.subr.mxu0 0.0
        %367 = vmatpush1.msra.mxu0 0.0
        %368 = vmatprep.subr.mxu0 0.0
        %369 = vmatpush1.msra.mxu0 0.0
        %370 = vmatprep.subr.mxu0 0.0
        %371 = vmatpush1.msra.mxu0 0.0
        %372 = vmatprep.subr.mxu0 0.0
        %373 = vmatpush1.msra.mxu0 0.0
        %374 = vmatprep.subr.mxu0 0.0
        %375 = vmatpush1.msra.mxu0 0.0
        %376 = vmatprep.subr.mxu0 0.0
        %377 = vmatpush1.msra.mxu0 0.0
        %378 = vmatprep.subr.mxu0 0.0
        %379 = vmatpush1.msra.mxu0 0.0
        %380 = vmatprep.subr.mxu0 0.0
        %381 = vmatpush1.msra.mxu0 0.0
        %382 = vmatprep.subr.mxu0 0.0
        %383 = vmatpush1.msra.mxu0 0.0
        %384 = vmatprep.subr.mxu0 0.0
        %385 = vmatpush1.msra.mxu0 0.0
        %386 = vmatprep.subr.mxu0 0.0
        %387 = vmatpush1.msra.mxu0 0.0
        %388 = vmatprep.mubr.f32.mxu0 0.0
        %389 = vmatmul.mubr.f32.gmra.mrb[0].mxu0 %v247
        %v390 = vpop.f32.mrb[0].mxu0
        %v391 = vadd.f32 0.0, %v390
        %v392 = vpop.f32.mrb[0].mxu0
        %v393 = vadd.f32 0.0, %v392
        %394 = vdwg.mxu0
        %v395 = vadd.f32 %v249, %v320
        %v396 = vadd.f32 %v250, %v322
        %v397 = vadd.f32 %v251, %v391
        %v398 = vadd.f32 %v252, %v393
        %v399 = vmul.f32 %v395, 0.5
        %v400 = vtanh.pop %v399
        %v401 = vmul.f32 %v400, 0.5
        %v402 = vadd.f32 %v401, 0.5
        %v403 = vmul.f32 %v396, 0.5
        %v404 = vtanh.pop %v403
        %v405 = vmul.f32 %v404, 0.5
        %v406 = vadd.f32 %v405, 0.5
        %v407 = vtanh.pop %v397
        %v408 = vmul.f32 %v398, 0.5
        %v409 = vtanh.pop %v408
        %v410 = vmul.f32 %v409, 0.5
        %v411 = vadd.f32 %v410, 0.5
        %v412 = vmul.f32 %v406, %v248
        %v413 = vmul.f32 %v402, %v407
        %v414 = vadd.f32 %v412, %v413
        %v415 = vtanh.pop %v414
        %v416 = vmul.f32 %v411, %v415
        %s417 = scalar_lea.vmem %s167, 32
        %v418 = vld [vmem:[%s417] sm:$0xff]
        %v419 = vld [vmem:[%s417 + $0x8] sm:$0xff]
        %v420 = vld [vmem:[%s417 + $0x10] sm:$0xff]
        %v421 = vld [vmem:[%s417 + $0x18] sm:$0xff]
        %422 = vmatprep.subr.mxu0 %v180
        %423 = vmatpush1.msra.mxu0 %v179
        %424 = vmatprep.subr.mxu0 %v184
        %425 = vmatpush1.msra.mxu0 %v183
        %426 = vmatprep.subr.mxu0 %v188
        %427 = vmatpush1.msra.mxu0 %v187
        %428 = vmatprep.subr.mxu0 %v192
        %429 = vmatpush1.msra.mxu0 %v191
        %430 = vmatprep.subr.mxu0 %v196
        %431 = vmatpush1.msra.mxu0 %v195
        %432 = vmatprep.subr.mxu0 %v200
        %433 = vmatpush1.msra.mxu0 %v199
        %434 = vmatprep.subr.mxu0 %v204
        %435 = vmatpush1.msra.mxu0 %v203
        %436 = vmatprep.subr.mxu0 %v208
        %437 = vmatpush1.msra.mxu0 %v207
        %438 = vmatprep.subr.mxu0 %v212
        %439 = vmatpush1.msra.mxu0 %v211
        %440 = vmatprep.subr.mxu0 %v216
        %441 = vmatpush1.msra.mxu0 %v215
        %442 = vmatprep.subr.mxu0 %v220
        %443 = vmatpush1.msra.mxu0 %v219
        %444 = vmatprep.subr.mxu0 %v224
        %445 = vmatpush1.msra.mxu0 %v223
        %446 = vmatprep.subr.mxu0 %v228
        %447 = vmatpush1.msra.mxu0 %v227
        %448 = vmatprep.subr.mxu0 %v232
        %449 = vmatpush1.msra.mxu0 %v231
        %450 = vmatprep.subr.mxu0 %v236
        %451 = vmatpush1.msra.mxu0 %v235
        %452 = vmatprep.subr.mxu0 %v240
        %453 = vmatpush1.msra.mxu0 %v239
        %454 = vmatprep.subr.mxu0 0.0
        %455 = vmatpush1.msra.mxu0 0.0
        %456 = vmatprep.subr.mxu0 0.0
        %457 = vmatpush1.msra.mxu0 0.0
        %458 = vmatprep.subr.mxu0 0.0
        %459 = vmatpush1.msra.mxu0 0.0
        %460 = vmatprep.subr.mxu0 0.0
        %461 = vmatpush1.msra.mxu0 0.0
        %462 = vmatprep.subr.mxu0 0.0
        %463 = vmatpush1.msra.mxu0 0.0
        %464 = vmatprep.subr.mxu0 0.0
        %465 = vmatpush1.msra.mxu0 0.0
        %466 = vmatprep.subr.mxu0 0.0
        %467 = vmatpush1.msra.mxu0 0.0
        %468 = vmatprep.subr.mxu0 0.0
        %469 = vmatpush1.msra.mxu0 0.0
        %470 = vmatprep.subr.mxu0 0.0
        %471 = vmatpush1.msra.mxu0 0.0
        %472 = vmatprep.subr.mxu0 0.0
        %473 = vmatpush1.msra.mxu0 0.0
        %474 = vmatprep.subr.mxu0 0.0
        %475 = vmatpush1.msra.mxu0 0.0
        %476 = vmatprep.subr.mxu0 0.0
        %477 = vmatpush1.msra.mxu0 0.0
        %478 = vmatprep.subr.mxu0 0.0
        %479 = vmatpush1.msra.mxu0 0.0
        %480 = vmatprep.subr.mxu0 0.0
        %481 = vmatpush1.msra.mxu0 0.0
        %482 = vmatprep.subr.mxu0 0.0
        %483 = vmatpush1.msra.mxu0 0.0
        %484 = vmatprep.subr.mxu0 0.0
        %485 = vmatpush1.msra.mxu0 0.0
        %486 = vmatprep.mubr.f32.mxu0 0.0
        %487 = vmatmul.mubr.f32.gmra.mrb[0].mxu0 %v416
        %v488 = vpop.f32.mrb[0].mxu0
        %v489 = vadd.f32 0.0, %v488
        %v490 = vpop.f32.mrb[0].mxu0
        %v491 = vadd.f32 0.0, %v490
        %492 = vdwg.mxu0
        %493 = vmatprep.subr.mxu0 %v182
        %494 = vmatpush1.msra.mxu0 %v181
        %495 = vmatprep.subr.mxu0 %v186
        %496 = vmatpush1.msra.mxu0 %v185
        %497 = vmatprep.subr.mxu0 %v190
        %498 = vmatpush1.msra.mxu0 %v189
        %499 = vmatprep.subr.mxu0 %v194
        %500 = vmatpush1.msra.mxu0 %v193
        %501 = vmatprep.subr.mxu0 %v198
        %502 = vmatpush1.msra.mxu0 %v197
        %503 = vmatprep.subr.mxu0 %v202
        %504 = vmatpush1.msra.mxu0 %v201
        %505 = vmatprep.subr.mxu0 %v206
        %506 = vmatpush1.msra.mxu0 %v205
        %507 = vmatprep.subr.mxu0 %v210
        %508 = vmatpush1.msra.mxu0 %v209
        %509 = vmatprep.subr.mxu0 %v214
        %510 = vmatpush1.msra.mxu0 %v213
        %511 = vmatprep.subr.mxu0 %v218
        %512 = vmatpush1.msra.mxu0 %v217
        %513 = vmatprep.subr.mxu0 %v222
        %514 = vmatpush1.msra.mxu0 %v221
        %515 = vmatprep.subr.mxu0 %v226
        %516 = vmatpush1.msra.mxu0 %v225
        %517 = vmatprep.subr.mxu0 %v230
        %518 = vmatpush1.msra.mxu0 %v229
        %519 = vmatprep.subr.mxu0 %v234
        %520 = vmatpush1.msra.mxu0 %v233
        %521 = vmatprep.subr.mxu0 %v238
        %522 = vmatpush1.msra.mxu0 %v237
        %523 = vmatprep.subr.mxu0 %v242
        %524 = vmatpush1.msra.mxu0 %v241
        %525 = vmatprep.subr.mxu0 0.0
        %526 = vmatpush1.msra.mxu0 0.0
        %527 = vmatprep.subr.mxu0 0.0
        %528 = vmatpush1.msra.mxu0 0.0
        %529 = vmatprep.subr.mxu0 0.0
        %530 = vmatpush1.msra.mxu0 0.0
        %531 = vmatprep.subr.mxu0 0.0
        %532 = vmatpush1.msra.mxu0 0.0
        %533 = vmatprep.subr.mxu0 0.0
        %534 = vmatpush1.msra.mxu0 0.0
        %535 = vmatprep.subr.mxu0 0.0
        %536 = vmatpush1.msra.mxu0 0.0
        %537 = vmatprep.subr.mxu0 0.0
        %538 = vmatpush1.msra.mxu0 0.0
        %539 = vmatprep.subr.mxu0 0.0
        %540 = vmatpush1.msra.mxu0 0.0
        %541 = vmatprep.subr.mxu0 0.0
        %542 = vmatpush1.msra.mxu0 0.0
        %543 = vmatprep.subr.mxu0 0.0
        %544 = vmatpush1.msra.mxu0 0.0
        %545 = vmatprep.subr.mxu0 0.0
        %546 = vmatpush1.msra.mxu0 0.0
        %547 = vmatprep.subr.mxu0 0.0
        %548 = vmatpush1.msra.mxu0 0.0
        %549 = vmatprep.subr.mxu0 0.0
        %550 = vmatpush1.msra.mxu0 0.0
        %551 = vmatprep.subr.mxu0 0.0
        %552 = vmatpush1.msra.mxu0 0.0
        %553 = vmatprep.subr.mxu0 0.0
        %554 = vmatpush1.msra.mxu0 0.0
        %555 = vmatprep.subr.mxu0 0.0
        %556 = vmatpush1.msra.mxu0 0.0
        %557 = vmatprep.mubr.f32.mxu0 0.0
        %558 = vmatmul.mubr.f32.gmra.mrb[0].mxu0 %v416
        %v559 = vpop.f32.mrb[0].mxu0
        %v560 = vadd.f32 0.0, %v559
        %v561 = vpop.f32.mrb[0].mxu0
        %v562 = vadd.f32 0.0, %v561
        %563 = vdwg.mxu0
        %v564 = vadd.f32 %v418, %v489
        %v565 = vadd.f32 %v419, %v491
        %v566 = vadd.f32 %v420, %v560
        %v567 = vadd.f32 %v421, %v562
        %v568 = vmul.f32 %v564, 0.5
        %v569 = vtanh.pop %v568
        %v570 = vmul.f32 %v569, 0.5
        %v571 = vadd.f32 %v570, 0.5
        %v572 = vmul.f32 %v565, 0.5
        %v573 = vtanh.pop %v572
        %v574 = vmul.f32 %v573, 0.5
        %v575 = vadd.f32 %v574, 0.5
        %v576 = vtanh.pop %v566
        %v577 = vmul.f32 %v567, 0.5
        %v578 = vtanh.pop %v577
        %v579 = vmul.f32 %v578, 0.5
        %v580 = vadd.f32 %v579, 0.5
        %v581 = vmul.f32 %v575, %v414
        %v582 = vmul.f32 %v571, %v576
        %v583 = vadd.f32 %v581, %v582
        %v584 = vtanh.pop %v583
        %v585 = vmul.f32 %v580, %v584
        %s586 = scalar_lea.vmem %s167, 64
        %v587 = vld [vmem:[%s586] sm:$0xff]
        %v588 = vld [vmem:[%s586 + $0x8] sm:$0xff]
        %v589 = vld [vmem:[%s586 + $0x10] sm:$0xff]
        %v590 = vld [vmem:[%s586 + $0x18] sm:$0xff]
        %591 = vmatprep.subr.mxu0 %v180
        %592 = vmatpush1.msra.mxu0 %v179
        %593 = vmatprep.subr.mxu0 %v184
        %594 = vmatpush1.msra.mxu0 %v183
        %595 = vmatprep.subr.mxu0 %v188
        %596 = vmatpush1.msra.mxu0 %v187
        %597 = vmatprep.subr.mxu0 %v192
        %598 = vmatpush1.msra.mxu0 %v191
        %599 = vmatprep.subr.mxu0 %v196
        %600 = vmatpush1.msra.mxu0 %v195
        %601 = vmatprep.subr.mxu0 %v200
        %602 = vmatpush1.msra.mxu0 %v199
        %603 = vmatprep.subr.mxu0 %v204
        %604 = vmatpush1.msra.mxu0 %v203
        %605 = vmatprep.subr.mxu0 %v208
        %606 = vmatpush1.msra.mxu0 %v207
        %607 = vmatprep.subr.mxu0 %v212
        %608 = vmatpush1.msra.mxu0 %v211
        %609 = vmatprep.subr.mxu0 %v216
        %610 = vmatpush1.msra.mxu0 %v215
        %611 = vmatprep.subr.mxu0 %v220
        %612 = vmatpush1.msra.mxu0 %v219
        %613 = vmatprep.subr.mxu0 %v224
        %614 = vmatpush1.msra.mxu0 %v223
        %615 = vmatprep.subr.mxu0 %v228
        %616 = vmatpush1.msra.mxu0 %v227
        %617 = vmatprep.subr.mxu0 %v232
        %618 = vmatpush1.msra.mxu0 %v231
        %619 = vmatprep.subr.mxu0 %v236
        %620 = vmatpush1.msra.mxu0 %v235
        %621 = vmatprep.subr.mxu0 %v240
        %622 = vmatpush1.msra.mxu0 %v239
        %623 = vmatprep.subr.mxu0 0.0
        %624 = vmatpush1.msra.mxu0 0.0
        %625 = vmatprep.subr.mxu0 0.0
        %626 = vmatpush1.msra.mxu0 0.0
        %627 = vmatprep.subr.mxu0 0.0
        %628 = vmatpush1.msra.mxu0 0.0
        %629 = vmatprep.subr.mxu0 0.0
        %630 = vmatpush1.msra.mxu0 0.0
        %631 = vmatprep.subr.mxu0 0.0
        %632 = vmatpush1.msra.mxu0 0.0
        %633 = vmatprep.subr.mxu0 0.0
        %634 = vmatpush1.msra.mxu0 0.0
        %635 = vmatprep.subr.mxu0 0.0
        %636 = vmatpush1.msra.mxu0 0.0
        %637 = vmatprep.subr.mxu0 0.0
        %638 = vmatpush1.msra.mxu0 0.0
        %639 = vmatprep.subr.mxu0 0.0
        %640 = vmatpush1.msra.mxu0 0.0
        %641 = vmatprep.subr.mxu0 0.0
        %642 = vmatpush1.msra.mxu0 0.0
        %643 = vmatprep.subr.mxu0 0.0
        %644 = vmatpush1.msra.mxu0 0.0
        %645 = vmatprep.subr.mxu0 0.0
        %646 = vmatpush1.msra.mxu0 0.0
        %647 = vmatprep.subr.mxu0 0.0
        %648 = vmatpush1.msra.mxu0 0.0
        %649 = vmatprep.subr.mxu0 0.0
        %650 = vmatpush1.msra.mxu0 0.0
        %651 = vmatprep.subr.mxu0 0.0
        %652 = vmatpush1.msra.mxu0 0.0
        %653 = vmatprep.subr.mxu0 0.0
        %654 = vmatpush1.msra.mxu0 0.0
        %655 = vmatprep.mubr.f32.mxu0 0.0
        %656 = vmatmul.mubr.f32.gmra.mrb[0].mxu0 %v585
        %v657 = vpop.f32.mrb[0].mxu0
        %v658 = vadd.f32 0.0, %v657
        %v659 = vpop.f32.mrb[0].mxu0
        %v660 = vadd.f32 0.0, %v659
        %661 = vdwg.mxu0
        %662 = vmatprep.subr.mxu0 %v182
        %663 = vmatpush1.msra.mxu0 %v181
        %664 = vmatprep.subr.mxu0 %v186
        %665 = vmatpush1.msra.mxu0 %v185
        %666 = vmatprep.subr.mxu0 %v190
        %667 = vmatpush1.msra.mxu0 %v189
        %668 = vmatprep.subr.mxu0 %v194
        %669 = vmatpush1.msra.mxu0 %v193
        %670 = vmatprep.subr.mxu0 %v198
        %671 = vmatpush1.msra.mxu0 %v197
        %672 = vmatprep.subr.mxu0 %v202
        %673 = vmatpush1.msra.mxu0 %v201
        %674 = vmatprep.subr.mxu0 %v206
        %675 = vmatpush1.msra.mxu0 %v205
        %676 = vmatprep.subr.mxu0 %v210
        %677 = vmatpush1.msra.mxu0 %v209
        %678 = vmatprep.subr.mxu0 %v214
        %679 = vmatpush1.msra.mxu0 %v213
        %680 = vmatprep.subr.mxu0 %v218
        %681 = vmatpush1.msra.mxu0 %v217
        %682 = vmatprep.subr.mxu0 %v222
        %683 = vmatpush1.msra.mxu0 %v221
        %684 = vmatprep.subr.mxu0 %v226
        %685 = vmatpush1.msra.mxu0 %v225
        %686 = vmatprep.subr.mxu0 %v230
        %687 = vmatpush1.msra.mxu0 %v229
        %688 = vmatprep.subr.mxu0 %v234
        %689 = vmatpush1.msra.mxu0 %v233
        %690 = vmatprep.subr.mxu0 %v238
        %691 = vmatpush1.msra.mxu0 %v237
        %692 = vmatprep.subr.mxu0 %v242
        %693 = vmatpush1.msra.mxu0 %v241
        %694 = vmatprep.subr.mxu0 0.0
        %695 = vmatpush1.msra.mxu0 0.0
        %696 = vmatprep.subr.mxu0 0.0
        %697 = vmatpush1.msra.mxu0 0.0
        %698 = vmatprep.subr.mxu0 0.0
        %699 = vmatpush1.msra.mxu0 0.0
        %700 = vmatprep.subr.mxu0 0.0
        %701 = vmatpush1.msra.mxu0 0.0
        %702 = vmatprep.subr.mxu0 0.0
        %703 = vmatpush1.msra.mxu0 0.0
        %704 = vmatprep.subr.mxu0 0.0
        %705 = vmatpush1.msra.mxu0 0.0
        %706 = vmatprep.subr.mxu0 0.0
        %707 = vmatpush1.msra.mxu0 0.0
        %708 = vmatprep.subr.mxu0 0.0
        %709 = vmatpush1.msra.mxu0 0.0
        %710 = vmatprep.subr.mxu0 0.0
        %711 = vmatpush1.msra.mxu0 0.0
        %712 = vmatprep.subr.mxu0 0.0
        %713 = vmatpush1.msra.mxu0 0.0
        %714 = vmatprep.subr.mxu0 0.0
        %715 = vmatpush1.msra.mxu0 0.0
        %716 = vmatprep.subr.mxu0 0.0
        %717 = vmatpush1.msra.mxu0 0.0
        %718 = vmatprep.subr.mxu0 0.0
        %719 = vmatpush1.msra.mxu0 0.0
        %720 = vmatprep.subr.mxu0 0.0
        %721 = vmatpush1.msra.mxu0 0.0
        %722 = vmatprep.subr.mxu0 0.0
        %723 = vmatpush1.msra.mxu0 0.0
        %724 = vmatprep.subr.mxu0 0.0
        %725 = vmatpush1.msra.mxu0 0.0
        %726 = vmatprep.mubr.f32.mxu0 0.0
        %727 = vmatmul.mubr.f32.gmra.mrb[0].mxu0 %v585
        %v728 = vpop.f32.mrb[0].mxu0
        %v729 = vadd.f32 0.0, %v728
        %v730 = vpop.f32.mrb[0].mxu0
        %v731 = vadd.f32 0.0, %v730
        %732 = vdwg.mxu0
        %v733 = vadd.f32 %v587, %v658
        %v734 = vadd.f32 %v588, %v660
        %v735 = vadd.f32 %v589, %v729
        %v736 = vadd.f32 %v590, %v731
        %v737 = vmul.f32 %v733, 0.5
        %v738 = vtanh.pop %v737
        %v739 = vmul.f32 %v738, 0.5
        %v740 = vadd.f32 %v739, 0.5
        %v741 = vmul.f32 %v734, 0.5
        %v742 = vtanh.pop %v741
        %v743 = vmul.f32 %v742, 0.5
        %v744 = vadd.f32 %v743, 0.5
        %v745 = vtanh.pop %v735
        %v746 = vmul.f32 %v736, 0.5
        %v747 = vtanh.pop %v746
        %v748 = vmul.f32 %v747, 0.5
        %v749 = vadd.f32 %v748, 0.5
        %v750 = vmul.f32 %v744, %v583
        %v751 = vmul.f32 %v740, %v745
        %v752 = vadd.f32 %v750, %v751
        %v753 = vtanh.pop %v752
        %v754 = vmul.f32 %v749, %v753
        %755 = vst [vmem:[#allocation2] sm:$0xff] %v754
        %756 = vst [vmem:[#allocation3] sm:$0xff] %v752
      $region36: #{lstm_forward.1} parent=27 // pred_fallthru
        _
      %p757 = scmp.eq.s32.totalorder %s18, 2
      // Predicated region
      $region37: #{lstm_forward.1} parent=27 // pred_check
        %p758 = pneg %p757
      $region38: #{lstm_forward.1} parent=27 // pred_check_branch
        %760 = sbr.rel (%p758) target = $region40
      $region39: #{lstm_forward.1} parent=27 // pred_region
        %v761 = vld [vmem:[#allocation2] sm:$0xff]
        %v762 = vld [vmem:[#allocation3] sm:$0xff]
        %v763 = vld [vmem:[%s167] sm:$0xff]
        %v764 = vld [vmem:[%s167 + $0x8] sm:$0xff]
        %v765 = vld [vmem:[%s167 + $0x10] sm:$0xff]
        %v766 = vld [vmem:[%s167 + $0x18] sm:$0xff]
        %767 = vmatprep.subr.mxu0 %v180
        %768 = vmatpush1.msra.mxu0 %v179
        %769 = vmatprep.subr.mxu0 %v184
        %770 = vmatpush1.msra.mxu0 %v183
        %771 = vmatprep.subr.mxu0 %v188
        %772 = vmatpush1.msra.mxu0 %v187
        %773 = vmatprep.subr.mxu0 %v192
        %774 = vmatpush1.msra.mxu0 %v191
        %775 = vmatprep.subr.mxu0 %v196
        %776 = vmatpush1.msra.mxu0 %v195
        %777 = vmatprep.subr.mxu0 %v200
        %778 = vmatpush1.msra.mxu0 %v199
        %779 = vmatprep.subr.mxu0 %v204
        %780 = vmatpush1.msra.mxu0 %v203
        %781 = vmatprep.subr.mxu0 %v208
        %782 = vmatpush1.msra.mxu0 %v207
        %783 = vmatprep.subr.mxu0 %v212
        %784 = vmatpush1.msra.mxu0 %v211
        %785 = vmatprep.subr.mxu0 %v216
        %786 = vmatpush1.msra.mxu0 %v215
        %787 = vmatprep.subr.mxu0 %v220
        %788 = vmatpush1.msra.mxu0 %v219
        %789 = vmatprep.subr.mxu0 %v224
        %790 = vmatpush1.msra.mxu0 %v223
        %791 = vmatprep.subr.mxu0 %v228
        %792 = vmatpush1.msra.mxu0 %v227
        %793 = vmatprep.subr.mxu0 %v232
        %794 = vmatpush1.msra.mxu0 %v231
        %795 = vmatprep.subr.mxu0 %v236
        %796 = vmatpush1.msra.mxu0 %v235
        %797 = vmatprep.subr.mxu0 %v240
        %798 = vmatpush1.msra.mxu0 %v239
        %799 = vmatprep.subr.mxu0 0.0
        %800 = vmatpush1.msra.mxu0 0.0
        %801 = vmatprep.subr.mxu0 0.0
        %802 = vmatpush1.msra.mxu0 0.0
        %803 = vmatprep.subr.mxu0 0.0
        %804 = vmatpush1.msra.mxu0 0.0
        %805 = vmatprep.subr.mxu0 0.0
        %806 = vmatpush1.msra.mxu0 0.0
        %807 = vmatprep.subr.mxu0 0.0
        %808 = vmatpush1.msra.mxu0 0.0
        %809 = vmatprep.subr.mxu0 0.0
        %810 = vmatpush1.msra.mxu0 0.0
        %811 = vmatprep.subr.mxu0 0.0
        %812 = vmatpush1.msra.mxu0 0.0
        %813 = vmatprep.subr.mxu0 0.0
        %814 = vmatpush1.msra.mxu0 0.0
        %815 = vmatprep.subr.mxu0 0.0
        %816 = vmatpush1.msra.mxu0 0.0
        %817 = vmatprep.subr.mxu0 0.0
        %818 = vmatpush1.msra.mxu0 0.0
        %819 = vmatprep.subr.mxu0 0.0
        %820 = vmatpush1.msra.mxu0 0.0
        %821 = vmatprep.subr.mxu0 0.0
        %822 = vmatpush1.msra.mxu0 0.0
        %823 = vmatprep.subr.mxu0 0.0
        %824 = vmatpush1.msra.mxu0 0.0
        %825 = vmatprep.subr.mxu0 0.0
        %826 = vmatpush1.msra.mxu0 0.0
        %827 = vmatprep.subr.mxu0 0.0
        %828 = vmatpush1.msra.mxu0 0.0
        %829 = vmatprep.subr.mxu0 0.0
        %830 = vmatpush1.msra.mxu0 0.0
        %831 = vmatprep.mubr.f32.mxu0 0.0
        %832 = vmatmul.mubr.f32.gmra.mrb[0].mxu0 %v761
        %v833 = vpop.f32.mrb[0].mxu0
        %v834 = vadd.f32 0.0, %v833
        %v835 = vpop.f32.mrb[0].mxu0
        %v836 = vadd.f32 0.0, %v835
        %837 = vdwg.mxu0
        %838 = vmatprep.subr.mxu0 %v182
        %839 = vmatpush1.msra.mxu0 %v181
        %840 = vmatprep.subr.mxu0 %v186
        %841 = vmatpush1.msra.mxu0 %v185
        %842 = vmatprep.subr.mxu0 %v190
        %843 = vmatpush1.msra.mxu0 %v189
        %844 = vmatprep.subr.mxu0 %v194
        %845 = vmatpush1.msra.mxu0 %v193
        %846 = vmatprep.subr.mxu0 %v198
        %847 = vmatpush1.msra.mxu0 %v197
        %848 = vmatprep.subr.mxu0 %v202
        %849 = vmatpush1.msra.mxu0 %v201
        %850 = vmatprep.subr.mxu0 %v206
        %851 = vmatpush1.msra.mxu0 %v205
        %852 = vmatprep.subr.mxu0 %v210
        %853 = vmatpush1.msra.mxu0 %v209
        %854 = vmatprep.subr.mxu0 %v214
        %855 = vmatpush1.msra.mxu0 %v213
        %856 = vmatprep.subr.mxu0 %v218
        %857 = vmatpush1.msra.mxu0 %v217
        %858 = vmatprep.subr.mxu0 %v222
        %859 = vmatpush1.msra.mxu0 %v221
        %860 = vmatprep.subr.mxu0 %v226
        %861 = vmatpush1.msra.mxu0 %v225
        %862 = vmatprep.subr.mxu0 %v230
        %863 = vmatpush1.msra.mxu0 %v229
        %864 = vmatprep.subr.mxu0 %v234
        %865 = vmatpush1.msra.mxu0 %v233
        %866 = vmatprep.subr.mxu0 %v238
        %867 = vmatpush1.msra.mxu0 %v237
        %868 = vmatprep.subr.mxu0 %v242
        %869 = vmatpush1.msra.mxu0 %v241
        %870 = vmatprep.subr.mxu0 0.0
        %871 = vmatpush1.msra.mxu0 0.0
        %872 = vmatprep.subr.mxu0 0.0
        %873 = vmatpush1.msra.mxu0 0.0
        %874 = vmatprep.subr.mxu0 0.0
        %875 = vmatpush1.msra.mxu0 0.0
        %876 = vmatprep.subr.mxu0 0.0
        %877 = vmatpush1.msra.mxu0 0.0
        %878 = vmatprep.subr.mxu0 0.0
        %879 = vmatpush1.msra.mxu0 0.0
        %880 = vmatprep.subr.mxu0 0.0
        %881 = vmatpush1.msra.mxu0 0.0
        %882 = vmatprep.subr.mxu0 0.0
        %883 = vmatpush1.msra.mxu0 0.0
        %884 = vmatprep.subr.mxu0 0.0
        %885 = vmatpush1.msra.mxu0 0.0
        %886 = vmatprep.subr.mxu0 0.0
        %887 = vmatpush1.msra.mxu0 0.0
        %888 = vmatprep.subr.mxu0 0.0
        %889 = vmatpush1.msra.mxu0 0.0
        %890 = vmatprep.subr.mxu0 0.0
        %891 = vmatpush1.msra.mxu0 0.0
        %892 = vmatprep.subr.mxu0 0.0
        %893 = vmatpush1.msra.mxu0 0.0
        %894 = vmatprep.subr.mxu0 0.0
        %895 = vmatpush1.msra.mxu0 0.0
        %896 = vmatprep.subr.mxu0 0.0
        %897 = vmatpush1.msra.mxu0 0.0
        %898 = vmatprep.subr.mxu0 0.0
        %899 = vmatpush1.msra.mxu0 0.0
        %900 = vmatprep.subr.mxu0 0.0
        %901 = vmatpush1.msra.mxu0 0.0
        %902 = vmatprep.mubr.f32.mxu0 0.0
        %903 = vmatmul.mubr.f32.gmra.mrb[0].mxu0 %v761
        %v904 = vpop.f32.mrb[0].mxu0
        %v905 = vadd.f32 0.0, %v904
        %v906 = vpop.f32.mrb[0].mxu0
        %v907 = vadd.f32 0.0, %v906
        %908 = vdwg.mxu0
        %v909 = vadd.f32 %v763, %v834
        %v910 = vadd.f32 %v764, %v836
        %v911 = vadd.f32 %v765, %v905
        %v912 = vadd.f32 %v766, %v907
        %v913 = vmul.f32 %v909, 0.5
        %v914 = vtanh.pop %v913
        %v915 = vmul.f32 %v914, 0.5
        %v916 = vadd.f32 %v915, 0.5
        %v917 = vmul.f32 %v910, 0.5
        %v918 = vtanh.pop %v917
        %v919 = vmul.f32 %v918, 0.5
        %v920 = vadd.f32 %v919, 0.5
        %v921 = vtanh.pop %v911
        %v922 = vmul.f32 %v912, 0.5
        %v923 = vtanh.pop %v922
        %v924 = vmul.f32 %v923, 0.5
        %v925 = vadd.f32 %v924, 0.5
        %v926 = vmul.f32 %v920, %v762
        %v927 = vmul.f32 %v916, %v921
        %v928 = vadd.f32 %v926, %v927
        %v929 = vtanh.pop %v928
        %v930 = vmul.f32 %v925, %v929
        %s931 = smul.u32 %s18, 3
        %p932 = scmp.lt.s32.totalorder %s931, 8
        %s933 = scalar_select %p932, 1, 0
        %v934 = vstv %s933
        %vm935 = vcmp.eq.s32.totalorder %v934, 1
        %v936 = vsel %vm935, %v930, %v761
        %v937 = vsel %vm935, %v928, %v762
        %s938 = scalar_lea.vmem %s167, 32
        %v939 = vld [vmem:[%s938] sm:$0xff]
        %v940 = vld [vmem:[%s938 + $0x8] sm:$0xff]
        %v941 = vld [vmem:[%s938 + $0x10] sm:$0xff]
        %v942 = vld [vmem:[%s938 + $0x18] sm:$0xff]
        %943 = vmatprep.subr.mxu0 %v180
        %944 = vmatpush1.msra.mxu0 %v179
        %945 = vmatprep.subr.mxu0 %v184
        %946 = vmatpush1.msra.mxu0 %v183
        %947 = vmatprep.subr.mxu0 %v188
        %948 = vmatpush1.msra.mxu0 %v187
        %949 = vmatprep.subr.mxu0 %v192
        %950 = vmatpush1.msra.mxu0 %v191
        %951 = vmatprep.subr.mxu0 %v196
        %952 = vmatpush1.msra.mxu0 %v195
        %953 = vmatprep.subr.mxu0 %v200
        %954 = vmatpush1.msra.mxu0 %v199
        %955 = vmatprep.subr.mxu0 %v204
        %956 = vmatpush1.msra.mxu0 %v203
        %957 = vmatprep.subr.mxu0 %v208
        %958 = vmatpush1.msra.mxu0 %v207
        %959 = vmatprep.subr.mxu0 %v212
        %960 = vmatpush1.msra.mxu0 %v211
        %961 = vmatprep.subr.mxu0 %v216
        %962 = vmatpush1.msra.mxu0 %v215
        %963 = vmatprep.subr.mxu0 %v220
        %964 = vmatpush1.msra.mxu0 %v219
        %965 = vmatprep.subr.mxu0 %v224
        %966 = vmatpush1.msra.mxu0 %v223
        %967 = vmatprep.subr.mxu0 %v228
        %968 = vmatpush1.msra.mxu0 %v227
        %969 = vmatprep.subr.mxu0 %v232
        %970 = vmatpush1.msra.mxu0 %v231
        %971 = vmatprep.subr.mxu0 %v236
        %972 = vmatpush1.msra.mxu0 %v235
        %973 = vmatprep.subr.mxu0 %v240
        %974 = vmatpush1.msra.mxu0 %v239
        %975 = vmatprep.subr.mxu0 0.0
        %976 = vmatpush1.msra.mxu0 0.0
        %977 = vmatprep.subr.mxu0 0.0
        %978 = vmatpush1.msra.mxu0 0.0
        %979 = vmatprep.subr.mxu0 0.0
        %980 = vmatpush1.msra.mxu0 0.0
        %981 = vmatprep.subr.mxu0 0.0
        %982 = vmatpush1.msra.mxu0 0.0
        %983 = vmatprep.subr.mxu0 0.0
        %984 = vmatpush1.msra.mxu0 0.0
        %985 = vmatprep.subr.mxu0 0.0
        %986 = vmatpush1.msra.mxu0 0.0
        %987 = vmatprep.subr.mxu0 0.0
        %988 = vmatpush1.msra.mxu0 0.0
        %989 = vmatprep.subr.mxu0 0.0
        %990 = vmatpush1.msra.mxu0 0.0
        %991 = vmatprep.subr.mxu0 0.0
        %992 = vmatpush1.msra.mxu0 0.0
        %993 = vmatprep.subr.mxu0 0.0
        %994 = vmatpush1.msra.mxu0 0.0
        %995 = vmatprep.subr.mxu0 0.0
        %996 = vmatpush1.msra.mxu0 0.0
        %997 = vmatprep.subr.mxu0 0.0
        %998 = vmatpush1.msra.mxu0 0.0
        %999 = vmatprep.subr.mxu0 0.0
        %1000 = vmatpush1.msra.mxu0 0.0
        %1001 = vmatprep.subr.mxu0 0.0
        %1002 = vmatpush1.msra.mxu0 0.0
        %1003 = vmatprep.subr.mxu0 0.0
        %1004 = vmatpush1.msra.mxu0 0.0
        %1005 = vmatprep.subr.mxu0 0.0
        %1006 = vmatpush1.msra.mxu0 0.0
        %1007 = vmatprep.mubr.f32.mxu0 0.0
        %1008 = vmatmul.mubr.f32.gmra.mrb[0].mxu0 %v936
        %v1009 = vpop.f32.mrb[0].mxu0
        %v1010 = vadd.f32 0.0, %v1009
        %v1011 = vpop.f32.mrb[0].mxu0
        %v1012 = vadd.f32 0.0, %v1011
        %1013 = vdwg.mxu0
        %1014 = vmatprep.subr.mxu0 %v182
        %1015 = vmatpush1.msra.mxu0 %v181
        %1016 = vmatprep.subr.mxu0 %v186
        %1017 = vmatpush1.msra.mxu0 %v185
        %1018 = vmatprep.subr.mxu0 %v190
        %1019 = vmatpush1.msra.mxu0 %v189
        %1020 = vmatprep.subr.mxu0 %v194
        %1021 = vmatpush1.msra.mxu0 %v193
        %1022 = vmatprep.subr.mxu0 %v198
        %1023 = vmatpush1.msra.mxu0 %v197
        %1024 = vmatprep.subr.mxu0 %v202
        %1025 = vmatpush1.msra.mxu0 %v201
        %1026 = vmatprep.subr.mxu0 %v206
        %1027 = vmatpush1.msra.mxu0 %v205
        %1028 = vmatprep.subr.mxu0 %v210
        %1029 = vmatpush1.msra.mxu0 %v209
        %1030 = vmatprep.subr.mxu0 %v214
        %1031 = vmatpush1.msra.mxu0 %v213
        %1032 = vmatprep.subr.mxu0 %v218
        %1033 = vmatpush1.msra.mxu0 %v217
        %1034 = vmatprep.subr.mxu0 %v222
        %1035 = vmatpush1.msra.mxu0 %v221
        %1036 = vmatprep.subr.mxu0 %v226
        %1037 = vmatpush1.msra.mxu0 %v225
        %1038 = vmatprep.subr.mxu0 %v230
        %1039 = vmatpush1.msra.mxu0 %v229
        %1040 = vmatprep.subr.mxu0 %v234
        %1041 = vmatpush1.msra.mxu0 %v233
        %1042 = vmatprep.subr.mxu0 %v238
        %1043 = vmatpush1.msra.mxu0 %v237
        %1044 = vmatprep.subr.mxu0 %v242
        %1045 = vmatpush1.msra.mxu0 %v241
        %1046 = vmatprep.subr.mxu0 0.0
        %1047 = vmatpush1.msra.mxu0 0.0
        %1048 = vmatprep.subr.mxu0 0.0
        %1049 = vmatpush1.msra.mxu0 0.0
        %1050 = vmatprep.subr.mxu0 0.0
        %1051 = vmatpush1.msra.mxu0 0.0
        %1052 = vmatprep.subr.mxu0 0.0
        %1053 = vmatpush1.msra.mxu0 0.0
        %1054 = vmatprep.subr.mxu0 0.0
        %1055 = vmatpush1.msra.mxu0 0.0
        %1056 = vmatprep.subr.mxu0 0.0
        %1057 = vmatpush1.msra.mxu0 0.0
        %1058 = vmatprep.subr.mxu0 0.0
        %1059 = vmatpush1.msra.mxu0 0.0
        %1060 = vmatprep.subr.mxu0 0.0
        %1061 = vmatpush1.msra.mxu0 0.0
        %1062 = vmatprep.subr.mxu0 0.0
        %1063 = vmatpush1.msra.mxu0 0.0
        %1064 = vmatprep.subr.mxu0 0.0
        %1065 = vmatpush1.msra.mxu0 0.0
        %1066 = vmatprep.subr.mxu0 0.0
        %1067 = vmatpush1.msra.mxu0 0.0
        %1068 = vmatprep.subr.mxu0 0.0
        %1069 = vmatpush1.msra.mxu0 0.0
        %1070 = vmatprep.subr.mxu0 0.0
        %1071 = vmatpush1.msra.mxu0 0.0
        %1072 = vmatprep.subr.mxu0 0.0
        %1073 = vmatpush1.msra.mxu0 0.0
        %1074 = vmatprep.subr.mxu0 0.0
        %1075 = vmatpush1.msra.mxu0 0.0
        %1076 = vmatprep.subr.mxu0 0.0
        %1077 = vmatpush1.msra.mxu0 0.0
        %1078 = vmatprep.mubr.f32.mxu0 0.0
        %1079 = vmatmul.mubr.f32.gmra.mrb[0].mxu0 %v936
        %v1080 = vpop.f32.mrb[0].mxu0
        %v1081 = vadd.f32 0.0, %v1080
        %v1082 = vpop.f32.mrb[0].mxu0
        %v1083 = vadd.f32 0.0, %v1082
        %1084 = vdwg.mxu0
        %v1085 = vadd.f32 %v939, %v1010
        %v1086 = vadd.f32 %v940, %v1012
        %v1087 = vadd.f32 %v941, %v1081
        %v1088 = vadd.f32 %v942, %v1083
        %v1089 = vmul.f32 %v1085, 0.5
        %v1090 = vtanh.pop %v1089
        %v1091 = vmul.f32 %v1090, 0.5
        %v1092 = vadd.f32 %v1091, 0.5
        %v1093 = vmul.f32 %v1086, 0.5
        %v1094 = vtanh.pop %v1093
        %v1095 = vmul.f32 %v1094, 0.5
        %v1096 = vadd.f32 %v1095, 0.5
        %v1097 = vtanh.pop %v1087
        %v1098 = vmul.f32 %v1088, 0.5
        %v1099 = vtanh.pop %v1098
        %v1100 = vmul.f32 %v1099, 0.5
        %v1101 = vadd.f32 %v1100, 0.5
        %v1102 = vmul.f32 %v1096, %v937
        %v1103 = vmul.f32 %v1092, %v1097
        %v1104 = vadd.f32 %v1102, %v1103
        %v1105 = vtanh.pop %v1104
        %v1106 = vmul.f32 %v1101, %v1105
        %s1107 = sadd.s32 %s931, 1
        %p1108 = scmp.lt.s32.totalorder %s1107, 8
        %s1109 = scalar_select %p1108, 1, 0
        %v1110 = vstv %s1109
        %vm1111 = vcmp.eq.s32.totalorder %v1110, 1
        %v1112 = vsel %vm1111, %v1106, %v936
        %v1113 = vsel %vm1111, %v1104, %v937
        %s1114 = scalar_lea.vmem %s167, 64
        %v1115 = vld [vmem:[%s1114] sm:$0xff]
        %v1116 = vld [vmem:[%s1114 + $0x8] sm:$0xff]
        %v1117 = vld [vmem:[%s1114 + $0x10] sm:$0xff]
        %v1118 = vld [vmem:[%s1114 + $0x18] sm:$0xff]
        %1119 = vmatprep.subr.mxu0 %v180
        %1120 = vmatpush1.msra.mxu0 %v179
        %1121 = vmatprep.subr.mxu0 %v184
        %1122 = vmatpush1.msra.mxu0 %v183
        %1123 = vmatprep.subr.mxu0 %v188
        %1124 = vmatpush1.msra.mxu0 %v187
        %1125 = vmatprep.subr.mxu0 %v192
        %1126 = vmatpush1.msra.mxu0 %v191
        %1127 = vmatprep.subr.mxu0 %v196
        %1128 = vmatpush1.msra.mxu0 %v195
        %1129 = vmatprep.subr.mxu0 %v200
        %1130 = vmatpush1.msra.mxu0 %v199
        %1131 = vmatprep.subr.mxu0 %v204
        %1132 = vmatpush1.msra.mxu0 %v203
        %1133 = vmatprep.subr.mxu0 %v208
        %1134 = vmatpush1.msra.mxu0 %v207
        %1135 = vmatprep.subr.mxu0 %v212
        %1136 = vmatpush1.msra.mxu0 %v211
        %1137 = vmatprep.subr.mxu0 %v216
        %1138 = vmatpush1.msra.mxu0 %v215
        %1139 = vmatprep.subr.mxu0 %v220
        %1140 = vmatpush1.msra.mxu0 %v219
        %1141 = vmatprep.subr.mxu0 %v224
        %1142 = vmatpush1.msra.mxu0 %v223
        %1143 = vmatprep.subr.mxu0 %v228
        %1144 = vmatpush1.msra.mxu0 %v227
        %1145 = vmatprep.subr.mxu0 %v232
        %1146 = vmatpush1.msra.mxu0 %v231
        %1147 = vmatprep.subr.mxu0 %v236
        %1148 = vmatpush1.msra.mxu0 %v235
        %1149 = vmatprep.subr.mxu0 %v240
        %1150 = vmatpush1.msra.mxu0 %v239
        %1151 = vmatprep.subr.mxu0 0.0
        %1152 = vmatpush1.msra.mxu0 0.0
        %1153 = vmatprep.subr.mxu0 0.0
        %1154 = vmatpush1.msra.mxu0 0.0
        %1155 = vmatprep.subr.mxu0 0.0
        %1156 = vmatpush1.msra.mxu0 0.0
        %1157 = vmatprep.subr.mxu0 0.0
        %1158 = vmatpush1.msra.mxu0 0.0
        %1159 = vmatprep.subr.mxu0 0.0
        %1160 = vmatpush1.msra.mxu0 0.0
        %1161 = vmatprep.subr.mxu0 0.0
        %1162 = vmatpush1.msra.mxu0 0.0
        %1163 = vmatprep.subr.mxu0 0.0
        %1164 = vmatpush1.msra.mxu0 0.0
        %1165 = vmatprep.subr.mxu0 0.0
        %1166 = vmatpush1.msra.mxu0 0.0
        %1167 = vmatprep.subr.mxu0 0.0
        %1168 = vmatpush1.msra.mxu0 0.0
        %1169 = vmatprep.subr.mxu0 0.0
        %1170 = vmatpush1.msra.mxu0 0.0
        %1171 = vmatprep.subr.mxu0 0.0
        %1172 = vmatpush1.msra.mxu0 0.0
        %1173 = vmatprep.subr.mxu0 0.0
        %1174 = vmatpush1.msra.mxu0 0.0
        %1175 = vmatprep.subr.mxu0 0.0
        %1176 = vmatpush1.msra.mxu0 0.0
        %1177 = vmatprep.subr.mxu0 0.0
        %1178 = vmatpush1.msra.mxu0 0.0
        %1179 = vmatprep.subr.mxu0 0.0
        %1180 = vmatpush1.msra.mxu0 0.0
        %1181 = vmatprep.subr.mxu0 0.0
        %1182 = vmatpush1.msra.mxu0 0.0
        %1183 = vmatprep.mubr.f32.mxu0 0.0
        %1184 = vmatmul.mubr.f32.gmra.mrb[0].mxu0 %v1112
        %v1185 = vpop.f32.mrb[0].mxu0
        %v1186 = vadd.f32 0.0, %v1185
        %v1187 = vpop.f32.mrb[0].mxu0
        %v1188 = vadd.f32 0.0, %v1187
        %1189 = vdwg.mxu0
        %1190 = vmatprep.subr.mxu0 %v182
        %1191 = vmatpush1.msra.mxu0 %v181
        %1192 = vmatprep.subr.mxu0 %v186
        %1193 = vmatpush1.msra.mxu0 %v185
        %1194 = vmatprep.subr.mxu0 %v190
        %1195 = vmatpush1.msra.mxu0 %v189
        %1196 = vmatprep.subr.mxu0 %v194
        %1197 = vmatpush1.msra.mxu0 %v193
        %1198 = vmatprep.subr.mxu0 %v198
        %1199 = vmatpush1.msra.mxu0 %v197
        %1200 = vmatprep.subr.mxu0 %v202
        %1201 = vmatpush1.msra.mxu0 %v201
        %1202 = vmatprep.subr.mxu0 %v206
        %1203 = vmatpush1.msra.mxu0 %v205
        %1204 = vmatprep.subr.mxu0 %v210
        %1205 = vmatpush1.msra.mxu0 %v209
        %1206 = vmatprep.subr.mxu0 %v214
        %1207 = vmatpush1.msra.mxu0 %v213
        %1208 = vmatprep.subr.mxu0 %v218
        %1209 = vmatpush1.msra.mxu0 %v217
        %1210 = vmatprep.subr.mxu0 %v222
        %1211 = vmatpush1.msra.mxu0 %v221
        %1212 = vmatprep.subr.mxu0 %v226
        %1213 = vmatpush1.msra.mxu0 %v225
        %1214 = vmatprep.subr.mxu0 %v230
        %1215 = vmatpush1.msra.mxu0 %v229
        %1216 = vmatprep.subr.mxu0 %v234
        %1217 = vmatpush1.msra.mxu0 %v233
        %1218 = vmatprep.subr.mxu0 %v238
        %1219 = vmatpush1.msra.mxu0 %v237
        %1220 = vmatprep.subr.mxu0 %v242
        %1221 = vmatpush1.msra.mxu0 %v241
        %1222 = vmatprep.subr.mxu0 0.0
        %1223 = vmatpush1.msra.mxu0 0.0
        %1224 = vmatprep.subr.mxu0 0.0
        %1225 = vmatpush1.msra.mxu0 0.0
        %1226 = vmatprep.subr.mxu0 0.0
        %1227 = vmatpush1.msra.mxu0 0.0
        %1228 = vmatprep.subr.mxu0 0.0
        %1229 = vmatpush1.msra.mxu0 0.0
        %1230 = vmatprep.subr.mxu0 0.0
        %1231 = vmatpush1.msra.mxu0 0.0
        %1232 = vmatprep.subr.mxu0 0.0
        %1233 = vmatpush1.msra.mxu0 0.0
        %1234 = vmatprep.subr.mxu0 0.0
        %1235 = vmatpush1.msra.mxu0 0.0
        %1236 = vmatprep.subr.mxu0 0.0
        %1237 = vmatpush1.msra.mxu0 0.0
        %1238 = vmatprep.subr.mxu0 0.0
        %1239 = vmatpush1.msra.mxu0 0.0
        %1240 = vmatprep.subr.mxu0 0.0
        %1241 = vmatpush1.msra.mxu0 0.0
        %1242 = vmatprep.subr.mxu0 0.0
        %1243 = vmatpush1.msra.mxu0 0.0
        %1244 = vmatprep.subr.mxu0 0.0
        %1245 = vmatpush1.msra.mxu0 0.0
        %1246 = vmatprep.subr.mxu0 0.0
        %1247 = vmatpush1.msra.mxu0 0.0
        %1248 = vmatprep.subr.mxu0 0.0
        %1249 = vmatpush1.msra.mxu0 0.0
        %1250 = vmatprep.subr.mxu0 0.0
        %1251 = vmatpush1.msra.mxu0 0.0
        %1252 = vmatprep.subr.mxu0 0.0
        %1253 = vmatpush1.msra.mxu0 0.0
        %1254 = vmatprep.mubr.f32.mxu0 0.0
        %1255 = vmatmul.mubr.f32.gmra.mrb[0].mxu0 %v1112
        %v1256 = vpop.f32.mrb[0].mxu0
        %v1257 = vadd.f32 0.0, %v1256
        %v1258 = vpop.f32.mrb[0].mxu0
        %v1259 = vadd.f32 0.0, %v1258
        %1260 = vdwg.mxu0
        %v1261 = vadd.f32 %v1115, %v1186
        %v1262 = vadd.f32 %v1116, %v1188
        %v1263 = vadd.f32 %v1117, %v1257
        %v1264 = vadd.f32 %v1118, %v1259
        %v1265 = vmul.f32 %v1261, 0.5
        %v1266 = vtanh.pop %v1265
        %v1267 = vmul.f32 %v1266, 0.5
        %v1268 = vadd.f32 %v1267, 0.5
        %v1269 = vmul.f32 %v1262, 0.5
        %v1270 = vtanh.pop %v1269
        %v1271 = vmul.f32 %v1270, 0.5
        %v1272 = vadd.f32 %v1271, 0.5
        %v1273 = vtanh.pop %v1263
        %v1274 = vmul.f32 %v1264, 0.5
        %v1275 = vtanh.pop %v1274
        %v1276 = vmul.f32 %v1275, 0.5
        %v1277 = vadd.f32 %v1276, 0.5
        %v1278 = vmul.f32 %v1272, %v1113
        %v1279 = vmul.f32 %v1268, %v1273
        %v1280 = vadd.f32 %v1278, %v1279
        %v1281 = vtanh.pop %v1280
        %v1282 = vmul.f32 %v1277, %v1281
        %s1283 = sadd.s32 %s931, 2
        %p1284 = scmp.lt.s32.totalorder %s1283, 8
        %s1285 = scalar_select %p1284, 1, 0
        %v1286 = vstv %s1285
        %vm1287 = vcmp.eq.s32.totalorder %v1286, 1
        %v1288 = vsel %vm1287, %v1282, %v1112
        %v1289 = vtanh.pop %v1288
        %1290 = vst [vmem:[%s172] sm:$0xff] %v1289
      $region40: #{lstm_forward.1} parent=27 // pred_fallthru
        _
      %p1291 = scmp.lt.s32.totalorder %s17, 0
      %s1292 = scalar_select %p1291, %s17, 0
      %s1293 = smul.addr %s1292, 8
      %s1294 = scalar_lea.vmem %s2, %s1293
      // Predicated region
      $region41: #{lstm_forward.1} parent=27 // pred_check
        %p1295 = pneg %p92
      $region42: #{lstm_forward.1} parent=27 // pred_check_branch
        %1297 = sbr.rel (%p1295) target = $region44
      $region43: #{lstm_forward.1} parent=27 // pred_region
        _
      $region44: #{lstm_forward.1} parent=27 // pred_fallthru
        _
      // Predicated region
      $region45: #{lstm_forward.1} parent=27 // pred_check
        %p1298 = pneg %p92
      $region46: #{lstm_forward.1} parent=27 // pred_check_branch
        %1300 = sbr.rel (%p1298) target = $region48
      $region47: #{lstm_forward.1} parent=27 // pred_region
        %p1301 = scmp.lt.s32.totalorder %s17, 0
        %s1302 = scalar_select %p1301, %s17, 0
        %s1303 = smul.addr %s1302, 8
        %s1304 = scalar_lea.vmem %s2, %s1303
      $region48: #{lstm_forward.1} parent=27 // pred_fallthru
        _
    $region28: #{lstm_forward.1} parent=5 // pred_fallthru
      _
    %p1305 = scmp.le.s32.totalorder 2, %s8
    // Predicated region
    $region49: #{lstm_forward.1} parent=5 // pred_check
      %p1306 = pneg %p1305
    $region50: #{lstm_forward.1} parent=5 // pred_check_branch
      %1308 = sbr.rel (%p1306) target = $region52
    $region51: #{lstm_forward.1} parent=5 // pred_region
      %s1309 = ssub.s32 %s8, 2
    $region52: #{lstm_forward.1} parent=5 // pred_fallthru
      _
  $region6: #{lstm_forward.1} parent=0 // loop_footer
    %s12 = sadd.s32 1, %s8
  $region7: #{lstm_forward.1} parent=0 // loop_footer_branch
    %7 = sbr.rel target = $region3
  $region8: #{lstm_forward.1} parent=0 // loop_exit
    _

</llo_original>
